<compile_context>
chip_gen: v6e
topology: v6e:2x2x1
jax: 0.10.0
libtpu: 0.0.40
codegen_flags: <defaults>
</compile_context>

<pallas_src>
import functools

import jax
import jax.numpy as jnp
from jax import lax
from jax.experimental import pallas as pl
from jax.experimental.pallas import tpu as pltpu


def _layernorm(x, gamma, beta, eps=1e-5):
    mean = jnp.mean(x, axis=-1, keepdims=True)
    var = jnp.mean(jnp.square(x - mean), axis=-1, keepdims=True)
    return (x - mean) * lax.rsqrt(var + eps) * gamma + beta


def _gt_kernel(num_heads, clip_val,
               feat_dst_ref, qT_ref, v_ref, adj_ref,
               wk_ref, wnode_ref, wskip_ref,
               wg_a_ref, wg_b_ref,
               ln1_g_ref, ln1_b_ref, ln2_g_ref, ln2_b_ref,
               wffn1_ref, wffn2_ref,
               out_ref,
               k_scratch, skip_scratch, l_scratch, acc_scratch):
    j = pl.program_id(1)                       # src-block index (reduction axis)
    n_src_blocks = pl.num_programs(1)
    TD, F = out_ref.shape
    H = num_heads
    D = F // H

    # ---- per-dst-tile init: cache k_dst (carries the folded sqrt(D) factor), project
    # ---- the skip branch off the serial epilogue, reset softmax denom / accumulator.
    @pl.when(j == 0)
    def _init():
        x_dst = feat_dst_ref[...].astype(jnp.bfloat16)      # cast once, reused twice
        k_scratch[...] = jnp.dot(
            x_dst, wk_ref[...], preferred_element_type=jnp.float32
        ).astype(jnp.bfloat16)
        skip_scratch[...] = jnp.dot(
            x_dst, wskip_ref[...], preferred_element_type=jnp.float32)
        l_scratch[...] = jnp.zeros_like(l_scratch)
        acc_scratch[...] = jnp.zeros_like(acc_scratch)

    k_dst = k_scratch[...]                                   # (TD, F) bf16
    adj = adj_ref[...].astype(jnp.float32)                   # (TD, TS) 0/1 mask (int8 in HBM)

    # ---- per-head edge_softmax streamed over src blocks -----------------------------
    # Logits are clipped to +/-clip_val, so exp(s - clip_val) <= 1 always: a constant
    # shift replaces the running max (softmax is shift-invariant), and the mask is
    # applied multiplicatively after exp.  Per-head pv results are assembled into one
    # full-width value so the accumulator update is a single lane-dense RMW.
    pv_parts = []
    l_parts = []
    for h in range(H):
        sl = slice(h * D, (h + 1) * D)
        # score[d, s] = k_dst[d] . q_src[s]   (fn.u_dot_v per head; Q pre-transposed)
        s = jnp.dot(k_dst[:, sl], qT_ref[sl, :],
                    preferred_element_type=jnp.float32)      # (TD, TS)
        s = jnp.clip(s, -clip_val, clip_val)
        p = jnp.exp(s - clip_val) * adj                      # edge mask
        l_parts.append(jnp.sum(p, axis=-1, keepdims=True))   # (TD, 1)
        pv_parts.append(jnp.dot(p.astype(jnp.bfloat16), v_ref[:, sl],
                                preferred_element_type=jnp.float32))   # (TD, D)
    acc_scratch[...] += jnp.concatenate(pv_parts, axis=-1)   # single full-lane RMW
    l_scratch[...] += jnp.concatenate(l_parts, axis=-1)      # (TD, H)

    # ---- epilogue on the last src block: node_proj + gated residual + FFN -----------
    @pl.when(j == n_src_blocks - 1)
    def _finalize():
        skip = skip_scratch[...]
        # padded dst rows have l == 0; the guard keeps them finite, they are sliced off.
        inv_l = pl.reciprocal(jnp.maximum(l_scratch[...], 1e-30), approx=True)  # (TD, H)
        agg = jnp.concatenate(
            [acc_scratch[:, h * D:(h + 1) * D] * inv_l[:, h:h + 1] for h in range(H)],
            axis=-1).astype(jnp.bfloat16)                    # (TD, F)
        rst = jnp.dot(agg, wnode_ref[...], preferred_element_type=jnp.float32)

        # GatedResidual: gate = sigmoid(rst@(wg0+wg2) + skip@(wg1-wg2))
        # (weights pre-combined on host; VPU multiply + lane reduce, no 1-wide MXU)
        gate_logit = jnp.sum(rst * wg_a_ref[...] + skip * wg_b_ref[...],
                             axis=-1, keepdims=True)         # (TD, 1)
        gate = jax.nn.sigmoid(gate_logit)
        y = _layernorm(rst * gate + skip * (1.0 - gate),
                       ln1_g_ref[...], ln1_b_ref[...])

        # FFN: LayerNorm -> Linear -> ReLU -> Linear, with residual add
        z = _layernorm(y, ln2_g_ref[...], ln2_b_ref[...])
        z = jnp.maximum(jnp.dot(z.astype(jnp.bfloat16), wffn1_ref[...],
                                preferred_element_type=jnp.float32), 0.0)
        z = jnp.dot(z.astype(jnp.bfloat16), wffn2_ref[...],
                    preferred_element_type=jnp.float32)
        out_ref[...] = (y + z).astype(out_ref.dtype)


def _round_up(x, m):
    return (x + m - 1) // m * m


def _pick_tile(n, cap):
    for t in (512, 384, 256, 128):
        if t <= cap and n % t == 0:
            return t
    return 128


def graph_transformer_layer(feat, adj, params, num_heads, *,
                            dst_tile=None, src_tile=None):
    """Fused GraphTransformerLayer forward.  feat: (N, F) f32, adj: (N, N) 0/1."""
    N, F = feat.shape
    assert F % num_heads == 0
    D = F // num_heads
    # NOTE: the module's zero-in-degree check is the caller's responsibility; doing
    # it here would force a device->host sync on every launch (and break under jit).

    Np = _round_up(N, 128)
    feat = feat.astype(jnp.float32)
    if Np != N:
        feat = jnp.pad(feat, ((0, Np - N), (0, 0)))
        adj = jnp.pad(adj, ((0, Np - N), (0, Np - N)))
    adj_i8 = adj.astype(jnp.int8)        # 0/1 mask exact in int8: 1/4 the f32 DMA bytes

    # Decoupled dst/src tiles; keep >=2 dst tiles when possible (megacore balance).
    td = dst_tile or _pick_tile(Np, min(256, max(128, Np // 2)))
    ts = src_tile or _pick_tile(Np, 512)
    assert Np % td == 0 and Np % ts == 0
    n_dst, n_src = Np // td, Np // ts

    # clamp(s,-5,5)/scaling == clamp(s*sqrt(D), -5*sqrt(D), 5*sqrt(D)): fold sqrt(D)
    # into wk and widen the clip bounds (scaling = D**-0.5 in the module).
    sqrt_d = float(D) ** 0.5
    clip_val = 5.0 * sqrt_d

    bf = lambda k: params[k].astype(jnp.bfloat16)
    wq, wv = bf("wq"), bf("wv")
    wk = (params["wk"].astype(jnp.float32) * sqrt_d).astype(jnp.bfloat16)
    wnode, wskip = bf("wnode"), bf("wskip")
    wffn1, wffn2 = bf("wffn1"), bf("wffn2")

    # Precompute Q^T and V once (shared across all dst tiles, streamed by src block).
    # Q is stored transposed (F, Np) so the in-kernel score matmul needs no transpose.
    feat_bf = feat.astype(jnp.bfloat16)
    qT = jnp.dot(feat_bf, wq, preferred_element_type=jnp.float32).astype(jnp.bfloat16).T
    v = jnp.dot(feat_bf, wv, preferred_element_type=jnp.float32).astype(jnp.bfloat16)

    # Fold the (3F, 1) gate weight: cat(rst, skip, rst-skip) @ wg
    #   == rst @ (wg0 + wg2) + skip @ (wg1 - wg2)
    wg = params["wgate"].astype(jnp.float32).reshape(3 * F)
    wg_a = (wg[0:F] + wg[2 * F:3 * F]).reshape(1, F)
    wg_b = (wg[F:2 * F] - wg[2 * F:3 * F]).reshape(1, F)

    ln1_g = params["ln1_g"].reshape(1, F).astype(jnp.float32)
    ln1_b = params["ln1_b"].reshape(1, F).astype(jnp.float32)
    ln2_g = params["ln2_g"].reshape(1, F).astype(jnp.float32)
    ln2_b = params["ln2_b"].reshape(1, F).astype(jnp.float32)

    grid = (n_dst, n_src)                        # (dst tiles [parallel], src tiles)

    def const_spec(shape):
        return pl.BlockSpec(shape, lambda i, j: (0,) * len(shape))  # VMEM-resident

    in_specs = [
        pl.BlockSpec((td, F), lambda i, j: (i, 0)),      # feat rows for dst tile
        pl.BlockSpec((F, ts), lambda i, j: (0, j)),      # Q^T columns for src tile
        pl.BlockSpec((ts, F), lambda i, j: (j, 0)),      # V rows for src tile
        pl.BlockSpec((td, ts), lambda i, j: (i, j)),     # adjacency tile (int8)
        const_spec((F, F)), const_spec((F, F)), const_spec((F, F)),  # wk, wnode, wskip
        const_spec((1, F)), const_spec((1, F)),                      # wg_a, wg_b
        const_spec((1, F)), const_spec((1, F)),                      # ln1 g/b
        const_spec((1, F)), const_spec((1, F)),                      # ln2 g/b
        const_spec((F, F)), const_spec((F, F)),                      # ffn1, ffn2
    ]

    # VMEM budget (double-buffered inputs/outputs + scratch) with headroom; keeps the
    # scoped request modest on v7x's 64 MiB while never undershooting actual need.
    vmem_bytes = (2 * td * F * 4 + 2 * F * ts * 2 + 2 * ts * F * 2 + 2 * td * ts
                  + 2 * td * F * 4 + 2 * 5 * F * F * 2
                  + td * F * (2 + 4 + 4) + td * 128 * 4 + (1 << 21))
    vmem_limit = int(min(64 * 1024 * 1024, max(16 * 1024 * 1024, 2 * vmem_bytes)))

    flops = int(4 * Np * Np * F + 10 * Np * F * F)
    transcendentals = int(num_heads * Np * Np + 8 * Np)
    bytes_accessed = int(Np * F * 4 + n_dst * Np * F * 2 * 2 + Np * Np
                         + Np * F * 4 + 5 * F * F * 2)

    kernel = functools.partial(_gt_kernel, num_heads, clip_val)
    out = pl.pallas_call(
        kernel,
        out_shape=jax.ShapeDtypeStruct((Np, F), feat.dtype),
        grid=grid,
        in_specs=in_specs,
        out_specs=pl.BlockSpec((td, F), lambda i, j: (i, 0)),
        scratch_shapes=[
            pltpu.VMEM((td, F), jnp.bfloat16),             # cached k_dst (scaled)
            pltpu.VMEM((td, F), jnp.float32),              # cached skip projection
            pltpu.VMEM((td, num_heads), jnp.float32),      # softmax denom per head
            pltpu.VMEM((td, F), jnp.float32),              # weighted-v accumulator
        ],
        compiler_params=pltpu.CompilerParams(
            dimension_semantics=("parallel", "arbitrary"),
            vmem_limit_bytes=vmem_limit,
        ),
        cost_estimate=pl.CostEstimate(flops=flops,
                                      transcendentals=transcendentals,
                                      bytes_accessed=bytes_accessed),
    )(feat, qT, v, adj_i8, wk, wnode, wskip,
      wg_a, wg_b, ln1_g, ln1_b, ln2_g, ln2_b, wffn1, wffn2)
    return out[:N]


if __name__ == "__main__":
    N = 256     # number of graph nodes (src == dst)
    F = 128     # feat_size (lane-dense: multiple of 128)
    H = 4       # num_heads (head_dim = 32)

    key = jax.random.PRNGKey(0)
    keys = jax.random.split(key, 10)

    def xavier(k, shape, gain=1.0):
        fan_in, fan_out = shape
        bound = gain * (6.0 / (fan_in + fan_out)) ** 0.5
        return jax.random.uniform(k, shape, jnp.float32, -bound, bound)

    params = dict(
        wq=xavier(keys[0], (F, F), 2 ** -0.5),
        wk=xavier(keys[1], (F, F), 2 ** -0.5),
        wv=xavier(keys[2], (F, F), 2 ** -0.5),
        wnode=xavier(keys[3], (F, F)),
        wskip=xavier(keys[4], (F, F)),
        wgate=xavier(keys[5], (3 * F, 1)),
        ln1_g=jnp.ones((1, F), jnp.float32),
        ln1_b=jnp.zeros((1, F), jnp.float32),
        ln2_g=jnp.ones((1, F), jnp.float32),
        ln2_b=jnp.zeros((1, F), jnp.float32),
        wffn1=xavier(keys[6], (F, F)),
        wffn2=xavier(keys[7], (F, F)),
    )

    feat = jax.random.normal(keys[8], (N, F), jnp.float32)
    # Random sparse graph with self-loops so every dst node has >= 1 incoming edge
    # (satisfies the module's allow_zero_in_degree=False requirement).
    rand_adj = (jax.random.uniform(keys[9], (N, N)) < 0.1).astype(jnp.float32)
    adj = jnp.maximum(rand_adj, jnp.eye(N, dtype=jnp.float32))

    fwd = jax.jit(functools.partial(graph_transformer_layer, num_heads=H))
    out = fwd(feat, adj, params)
    jax.block_until_ready(out)
    assert out.shape == (N, F)
    assert bool(jnp.all(jnp.isfinite(out)))
    print("KERNEL_OK")
</pallas_src>

<mosaic_0001>
module attributes {stable_mosaic.version = 11 : i64} {
  func.func @_gt_kernel(%arg0: i32, %arg1: i32, %arg2: memref<128x128xf32, #tpu.memory_space<vmem>>, %arg3: memref<128x256xbf16, #tpu.memory_space<vmem>>, %arg4: memref<256x128xbf16, #tpu.memory_space<vmem>>, %arg5: memref<128x256xi8, #tpu.memory_space<vmem>>, %arg6: memref<128x128xbf16, #tpu.memory_space<vmem>>, %arg7: memref<128x128xbf16, #tpu.memory_space<vmem>>, %arg8: memref<128x128xbf16, #tpu.memory_space<vmem>>, %arg9: memref<1x128xf32, #tpu.memory_space<vmem>>, %arg10: memref<1x128xf32, #tpu.memory_space<vmem>>, %arg11: memref<1x128xf32, #tpu.memory_space<vmem>>, %arg12: memref<1x128xf32, #tpu.memory_space<vmem>>, %arg13: memref<1x128xf32, #tpu.memory_space<vmem>>, %arg14: memref<1x128xf32, #tpu.memory_space<vmem>>, %arg15: memref<128x128xbf16, #tpu.memory_space<vmem>>, %arg16: memref<128x128xbf16, #tpu.memory_space<vmem>>, %arg17: memref<128x128xf32, #tpu.memory_space<vmem>>, %arg18: memref<128x128xbf16, #tpu.memory_space<vmem>>, %arg19: memref<128x128xf32, #tpu.memory_space<vmem>>, %arg20: memref<128x4xf32, #tpu.memory_space<vmem>>, %arg21: memref<128x128xf32, #tpu.memory_space<vmem>>) attributes {dimension_semantics = [#tpu.dimension_semantics<parallel>, #tpu.dimension_semantics<arbitrary>], iteration_bounds = array<i64: 2, 1>, scalar_prefetch = 0 : i64, scratch_operands = 4 : i64, tpu.core_type = #tpu.core_type<tc>, window_params = [{transform_indices = @transform_0, window_bounds = array<i64: 128, 128>}, {transform_indices = @transform_1, window_bounds = array<i64: 128, 256>}, {transform_indices = @transform_2, window_bounds = array<i64: 256, 128>}, {transform_indices = @transform_3, window_bounds = array<i64: 128, 256>}, {pipeline_mode = #tpu.pipeline_mode<synchronous>, transform_indices = @transform_4, window_bounds = array<i64: 128, 128>}, {pipeline_mode = #tpu.pipeline_mode<synchronous>, transform_indices = @transform_5, window_bounds = array<i64: 128, 128>}, {pipeline_mode = #tpu.pipeline_mode<synchronous>, transform_indices = @transform_6, window_bounds = array<i64: 128, 128>}, {pipeline_mode = #tpu.pipeline_mode<synchronous>, transform_indices = @transform_7, window_bounds = array<i64: 1, 128>}, {pipeline_mode = #tpu.pipeline_mode<synchronous>, transform_indices = @transform_8, window_bounds = array<i64: 1, 128>}, {pipeline_mode = #tpu.pipeline_mode<synchronous>, transform_indices = @transform_9, window_bounds = array<i64: 1, 128>}, {pipeline_mode = #tpu.pipeline_mode<synchronous>, transform_indices = @transform_10, window_bounds = array<i64: 1, 128>}, {pipeline_mode = #tpu.pipeline_mode<synchronous>, transform_indices = @transform_11, window_bounds = array<i64: 1, 128>}, {pipeline_mode = #tpu.pipeline_mode<synchronous>, transform_indices = @transform_12, window_bounds = array<i64: 1, 128>}, {pipeline_mode = #tpu.pipeline_mode<synchronous>, transform_indices = @transform_13, window_bounds = array<i64: 128, 128>}, {pipeline_mode = #tpu.pipeline_mode<synchronous>, transform_indices = @transform_14, window_bounds = array<i64: 128, 128>}, {transform_indices = @transform_15, window_bounds = array<i64: 128, 128>}]} {
    %c0_i32 = arith.constant 0 : i32
    %0 = arith.cmpi eq, %arg1, %c0_i32 : i32
    %1 = arith.extui %0 : i1 to i32
    %c0_i32_0 = arith.constant 0 : i32
    %2 = arith.cmpi ne, %1, %c0_i32_0 : i32
    scf.if %2 {
      %c0_50 = arith.constant 0 : index
      %c0_51 = arith.constant 0 : index
      %81 = vector.load %arg2[%c0_50, %c0_51] : memref<128x128xf32, #tpu.memory_space<vmem>>, vector<128x128xf32>
      %82 = arith.truncf %81 : vector<128x128xf32> to vector<128x128xbf16>
      %c0_52 = arith.constant 0 : index
      %c0_53 = arith.constant 0 : index
      %83 = vector.load %arg6[%c0_52, %c0_53] : memref<128x128xbf16, #tpu.memory_space<vmem>>, vector<128x128xbf16>
      %cst_54 = arith.constant dense<0.000000e+00> : vector<128x128xf32>
      %84 = tpu.matmul %82, %83, %cst_54 {dimension_numbers = #tpu.dot_dimension_numbers<[1], [0], [0], [1], [0, 0, 1, 1], [], []>} : vector<128x128xbf16>, vector<128x128xbf16>, vector<128x128xf32> -> vector<128x128xf32>
      %85 = arith.truncf %84 : vector<128x128xf32> to vector<128x128xbf16>
      %c0_55 = arith.constant 0 : index
      %c0_56 = arith.constant 0 : index
      %86 = vector.load %arg18[%c0_55, %c0_56] : memref<128x128xbf16, #tpu.memory_space<vmem>>, vector<128x128xbf16>
      tpu.vector_store %arg18[%c0_55, %c0_56], %85 {strides = array<i32>} : memref<128x128xbf16, #tpu.memory_space<vmem>>, vector<128x128xbf16>,
      %c0_57 = arith.constant 0 : index
      %c0_58 = arith.constant 0 : index
      %87 = vector.load %arg8[%c0_57, %c0_58] : memref<128x128xbf16, #tpu.memory_space<vmem>>, vector<128x128xbf16>
      %cst_59 = arith.constant dense<0.000000e+00> : vector<128x128xf32>
      %88 = tpu.matmul %82, %87, %cst_59 {dimension_numbers = #tpu.dot_dimension_numbers<[1], [0], [0], [1], [0, 0, 1, 1], [], []>} : vector<128x128xbf16>, vector<128x128xbf16>, vector<128x128xf32> -> vector<128x128xf32>
      %c0_60 = arith.constant 0 : index
      %c0_61 = arith.constant 0 : index
      %89 = vector.load %arg19[%c0_60, %c0_61] : memref<128x128xf32, #tpu.memory_space<vmem>>, vector<128x128xf32>
      tpu.vector_store %arg19[%c0_60, %c0_61], %88 {strides = array<i32>} : memref<128x128xf32, #tpu.memory_space<vmem>>, vector<128x128xf32>,
      %cst_62 = arith.constant 0.000000e+00 : f32
      %90 = vector.broadcast %cst_62 : f32 to vector<128x4xf32>
      %c0_63 = arith.constant 0 : index
      %c0_64 = arith.constant 0 : index
      %91 = vector.load %arg20[%c0_63, %c0_64] : memref<128x4xf32, #tpu.memory_space<vmem>>, vector<128x4xf32>
      tpu.vector_store %arg20[%c0_63, %c0_64], %90 {strides = array<i32>} : memref<128x4xf32, #tpu.memory_space<vmem>>, vector<128x4xf32>,
      %cst_65 = arith.constant 0.000000e+00 : f32
      %92 = vector.broadcast %cst_65 : f32 to vector<128x128xf32>
      %c0_66 = arith.constant 0 : index
      %c0_67 = arith.constant 0 : index
      %93 = vector.load %arg21[%c0_66, %c0_67] : memref<128x128xf32, #tpu.memory_space<vmem>>, vector<128x128xf32>
      tpu.vector_store %arg21[%c0_66, %c0_67], %92 {strides = array<i32>} : memref<128x128xf32, #tpu.memory_space<vmem>>, vector<128x128xf32>,
    } else {
    }
    %c0 = arith.constant 0 : index
    %c0_1 = arith.constant 0 : index
    %3 = vector.load %arg18[%c0, %c0_1] : memref<128x128xbf16, #tpu.memory_space<vmem>>, vector<128x128xbf16>
    %c0_2 = arith.constant 0 : index
    %c0_3 = arith.constant 0 : index
    %4 = vector.load %arg5[%c0_2, %c0_3] : memref<128x256xi8, #tpu.memory_space<vmem>>, vector<128x256xi8>
    %5 = arith.sitofp %4 : vector<128x256xi8> to vector<128x256xf32>
    %6 = vector.extract_strided_slice %3 {offsets = [0, 0], sizes = [128, 32], strides = [1, 1]} : vector<128x128xbf16> to vector<128x32xbf16>
    %c0_4 = arith.constant 0 : index
    %c0_5 = arith.constant 0 : index
    %7 = vector.load %arg3[%c0_4, %c0_5] : memref<128x256xbf16, #tpu.memory_space<vmem>>, vector<32x256xbf16>
    %cst = arith.constant dense<0.000000e+00> : vector<128x256xf32>
    %8 = tpu.matmul %6, %7, %cst {dimension_numbers = #tpu.dot_dimension_numbers<[1], [0], [0], [1], [0, 0, 1, 1], [], []>} : vector<128x32xbf16>, vector<32x256xbf16>, vector<128x256xf32> -> vector<128x256xf32>
    %cst_6 = arith.constant -28.2842712 : f32
    %cst_7 = arith.constant 28.2842712 : f32
    %9 = vector.broadcast %cst_6 : f32 to vector<128x256xf32>
    %10 = arith.maximumf %9, %8 : vector<128x256xf32>
    %11 = vector.broadcast %cst_7 : f32 to vector<128x256xf32>
    %12 = arith.minimumf %11, %10 : vector<128x256xf32>
    %cst_8 = arith.constant 28.2842712 : f32
    %13 = vector.broadcast %cst_8 : f32 to vector<128x256xf32>
    %14 = arith.subf %12, %13 : vector<128x256xf32>
    %15 = math.exp %14 : vector<128x256xf32>
    %16 = arith.mulf %15, %5 : vector<128x256xf32>
    %cst_9 = arith.constant dense<0.000000e+00> : vector<128xf32>
    %17 = vector.multi_reduction <add>, %16, %cst_9 [1] : vector<128x256xf32> to vector<128xf32>
    %18 = vector.shape_cast %17 : vector<128xf32> to vector<128x1xf32>
    %19 = arith.truncf %16 : vector<128x256xf32> to vector<128x256xbf16>
    %c0_10 = arith.constant 0 : index
    %c0_11 = arith.constant 0 : index
    %20 = vector.load %arg4[%c0_10, %c0_11] : memref<256x128xbf16, #tpu.memory_space<vmem>>, vector<256x32xbf16>
    %cst_12 = arith.constant dense<0.000000e+00> : vector<128x32xf32>
    %21 = tpu.matmul %19, %20, %cst_12 {dimension_numbers = #tpu.dot_dimension_numbers<[1], [0], [0], [1], [0, 0, 1, 1], [], []>} : vector<128x256xbf16>, vector<256x32xbf16>, vector<128x32xf32> -> vector<128x32xf32>
    %22 = vector.extract_strided_slice %3 {offsets = [0, 32], sizes = [128, 32], strides = [1, 1]} : vector<128x128xbf16> to vector<128x32xbf16>
    %c32 = arith.constant 32 : index
    %c0_13 = arith.constant 0 : index
    %23 = vector.load %arg3[%c32, %c0_13] : memref<128x256xbf16, #tpu.memory_space<vmem>>, vector<32x256xbf16>
    %cst_14 = arith.constant dense<0.000000e+00> : vector<128x256xf32>
    %24 = tpu.matmul %22, %23, %cst_14 {dimension_numbers = #tpu.dot_dimension_numbers<[1], [0], [0], [1], [0, 0, 1, 1], [], []>} : vector<128x32xbf16>, vector<32x256xbf16>, vector<128x256xf32> -> vector<128x256xf32>
    %cst_15 = arith.constant -28.2842712 : f32
    %cst_16 = arith.constant 28.2842712 : f32
    %25 = vector.broadcast %cst_15 : f32 to vector<128x256xf32>
    %26 = arith.maximumf %25, %24 : vector<128x256xf32>
    %27 = vector.broadcast %cst_16 : f32 to vector<128x256xf32>
    %28 = arith.minimumf %27, %26 : vector<128x256xf32>
    %cst_17 = arith.constant 28.2842712 : f32
    %29 = vector.broadcast %cst_17 : f32 to vector<128x256xf32>
    %30 = arith.subf %28, %29 : vector<128x256xf32>
    %31 = math.exp %30 : vector<128x256xf32>
    %32 = arith.mulf %31, %5 : vector<128x256xf32>
    %cst_18 = arith.constant dense<0.000000e+00> : vector<128xf32>
    %33 = vector.multi_reduction <add>, %32, %cst_18 [1] : vector<128x256xf32> to vector<128xf32>
    %34 = vector.shape_cast %33 : vector<128xf32> to vector<128x1xf32>
    %35 = arith.truncf %32 : vector<128x256xf32> to vector<128x256xbf16>
    %c0_19 = arith.constant 0 : index
    %c32_20 = arith.constant 32 : index
    %36 = vector.load %arg4[%c0_19, %c32_20] : memref<256x128xbf16, #tpu.memory_space<vmem>>, vector<256x32xbf16>
    %cst_21 = arith.constant dense<0.000000e+00> : vector<128x32xf32>
    %37 = tpu.matmul %35, %36, %cst_21 {dimension_numbers = #tpu.dot_dimension_numbers<[1], [0], [0], [1], [0, 0, 1, 1], [], []>} : vector<128x256xbf16>, vector<256x32xbf16>, vector<128x32xf32> -> vector<128x32xf32>
    %38 = vector.extract_strided_slice %3 {offsets = [0, 64], sizes = [128, 32], strides = [1, 1]} : vector<128x128xbf16> to vector<128x32xbf16>
    %c64 = arith.constant 64 : index
    %c0_22 = arith.constant 0 : index
    %39 = vector.load %arg3[%c64, %c0_22] : memref<128x256xbf16, #tpu.memory_space<vmem>>, vector<32x256xbf16>
    %cst_23 = arith.constant dense<0.000000e+00> : vector<128x256xf32>
    %40 = tpu.matmul %38, %39, %cst_23 {dimension_numbers = #tpu.dot_dimension_numbers<[1], [0], [0], [1], [0, 0, 1, 1], [], []>} : vector<128x32xbf16>, vector<32x256xbf16>, vector<128x256xf32> -> vector<128x256xf32>
    %cst_24 = arith.constant -28.2842712 : f32
    %cst_25 = arith.constant 28.2842712 : f32
    %41 = vector.broadcast %cst_24 : f32 to vector<128x256xf32>
    %42 = arith.maximumf %41, %40 : vector<128x256xf32>
    %43 = vector.broadcast %cst_25 : f32 to vector<128x256xf32>
    %44 = arith.minimumf %43, %42 : vector<128x256xf32>
    %cst_26 = arith.constant 28.2842712 : f32
    %45 = vector.broadcast %cst_26 : f32 to vector<128x256xf32>
    %46 = arith.subf %44, %45 : vector<128x256xf32>
    %47 = math.exp %46 : vector<128x256xf32>
    %48 = arith.mulf %47, %5 : vector<128x256xf32>
    %cst_27 = arith.constant dense<0.000000e+00> : vector<128xf32>
    %49 = vector.multi_reduction <add>, %48, %cst_27 [1] : vector<128x256xf32> to vector<128xf32>
    %50 = vector.shape_cast %49 : vector<128xf32> to vector<128x1xf32>
    %51 = arith.truncf %48 : vector<128x256xf32> to vector<128x256xbf16>
    %c0_28 = arith.constant 0 : index
    %c64_29 = arith.constant 64 : index
    %52 = vector.load %arg4[%c0_28, %c64_29] : memref<256x128xbf16, #tpu.memory_space<vmem>>, vector<256x32xbf16>
    %cst_30 = arith.constant dense<0.000000e+00> : vector<128x32xf32>
    %53 = tpu.matmul %51, %52, %cst_30 {dimension_numbers = #tpu.dot_dimension_numbers<[1], [0], [0], [1], [0, 0, 1, 1], [], []>} : vector<128x256xbf16>, vector<256x32xbf16>, vector<128x32xf32> -> vector<128x32xf32>
    %54 = vector.extract_strided_slice %3 {offsets = [0, 96], sizes = [128, 32], strides = [1, 1]} : vector<128x128xbf16> to vector<128x32xbf16>
    %c96 = arith.constant 96 : index
    %c0_31 = arith.constant 0 : index
    %55 = vector.load %arg3[%c96, %c0_31] : memref<128x256xbf16, #tpu.memory_space<vmem>>, vector<32x256xbf16>
    %cst_32 = arith.constant dense<0.000000e+00> : vector<128x256xf32>
    %56 = tpu.matmul %54, %55, %cst_32 {dimension_numbers = #tpu.dot_dimension_numbers<[1], [0], [0], [1], [0, 0, 1, 1], [], []>} : vector<128x32xbf16>, vector<32x256xbf16>, vector<128x256xf32> -> vector<128x256xf32>
    %cst_33 = arith.constant -28.2842712 : f32
    %cst_34 = arith.constant 28.2842712 : f32
    %57 = vector.broadcast %cst_33 : f32 to vector<128x256xf32>
    %58 = arith.maximumf %57, %56 : vector<128x256xf32>
    %59 = vector.broadcast %cst_34 : f32 to vector<128x256xf32>
    %60 = arith.minimumf %59, %58 : vector<128x256xf32>
    %cst_35 = arith.constant 28.2842712 : f32
    %61 = vector.broadcast %cst_35 : f32 to vector<128x256xf32>
    %62 = arith.subf %60, %61 : vector<128x256xf32>
    %63 = math.exp %62 : vector<128x256xf32>
    %64 = arith.mulf %63, %5 : vector<128x256xf32>
    %cst_36 = arith.constant dense<0.000000e+00> : vector<128xf32>
    %65 = vector.multi_reduction <add>, %64, %cst_36 [1] : vector<128x256xf32> to vector<128xf32>
    %66 = vector.shape_cast %65 : vector<128xf32> to vector<128x1xf32>
    %67 = arith.truncf %64 : vector<128x256xf32> to vector<128x256xbf16>
    %c0_37 = arith.constant 0 : index
    %c96_38 = arith.constant 96 : index
    %68 = vector.load %arg4[%c0_37, %c96_38] : memref<256x128xbf16, #tpu.memory_space<vmem>>, vector<256x32xbf16>
    %cst_39 = arith.constant dense<0.000000e+00> : vector<128x32xf32>
    %69 = tpu.matmul %67, %68, %cst_39 {dimension_numbers = #tpu.dot_dimension_numbers<[1], [0], [0], [1], [0, 0, 1, 1], [], []>} : vector<128x256xbf16>, vector<256x32xbf16>, vector<128x32xf32> -> vector<128x32xf32>
    %c0_40 = arith.constant 0 : index
    %c0_41 = arith.constant 0 : index
    %70 = vector.load %arg21[%c0_40, %c0_41] : memref<128x128xf32, #tpu.memory_space<vmem>>, vector<128x128xf32>
    %71 = tpu.concatenate %21, %37, %53, %69 in 1 : vector<128x32xf32>, vector<128x32xf32>, vector<128x32xf32>, vector<128x32xf32> -> vector<128x128xf32>
    %72 = arith.addf %70, %71 : vector<128x128xf32>
    %c0_42 = arith.constant 0 : index
    %c0_43 = arith.constant 0 : index
    %73 = vector.load %arg21[%c0_42, %c0_43] : memref<128x128xf32, #tpu.memory_space<vmem>>, vector<128x128xf32>
    tpu.vector_store %arg21[%c0_42, %c0_43], %72 {strides = array<i32>} : memref<128x128xf32, #tpu.memory_space<vmem>>, vector<128x128xf32>,
    %c0_44 = arith.constant 0 : index
    %c0_45 = arith.constant 0 : index
    %74 = vector.load %arg20[%c0_44, %c0_45] : memref<128x4xf32, #tpu.memory_space<vmem>>, vector<128x4xf32>
    %75 = tpu.concatenate %18, %34, %50, %66 in 1 : vector<128x1xf32>, vector<128x1xf32>, vector<128x1xf32>, vector<128x1xf32> -> vector<128x4xf32>
    %76 = arith.addf %74, %75 : vector<128x4xf32>
    %c0_46 = arith.constant 0 : index
    %c0_47 = arith.constant 0 : index
    %77 = vector.load %arg20[%c0_46, %c0_47] : memref<128x4xf32, #tpu.memory_space<vmem>>, vector<128x4xf32>
    tpu.vector_store %arg20[%c0_46, %c0_47], %76 {strides = array<i32>} : memref<128x4xf32, #tpu.memory_space<vmem>>, vector<128x4xf32>,
    %c0_i32_48 = arith.constant 0 : i32
    %78 = arith.cmpi eq, %arg1, %c0_i32_48 : i32
    %79 = arith.extui %78 : i1 to i32
    %c0_i32_49 = arith.constant 0 : i32
    %80 = arith.cmpi ne, %79, %c0_i32_49 : i32
    scf.if %80 {
      %c0_50 = arith.constant 0 : index
      %c0_51 = arith.constant 0 : index
      %81 = vector.load %arg19[%c0_50, %c0_51] : memref<128x128xf32, #tpu.memory_space<vmem>>, vector<128x128xf32>
      %c0_52 = arith.constant 0 : index
      %c0_53 = arith.constant 0 : index
      %82 = vector.load %arg20[%c0_52, %c0_53] : memref<128x4xf32, #tpu.memory_space<vmem>>, vector<128x4xf32>
      %cst_54 = arith.constant 1.000000e-30 : f32
      %83 = vector.broadcast %cst_54 : f32 to vector<128x4xf32>
      %84 = arith.maximumf %82, %83 : vector<128x4xf32>
      %85 = tpu.reciprocal %84 {approx = true} : vector<128x4xf32> -> vector<128x4xf32>
      %c0_55 = arith.constant 0 : index
      %c0_56 = arith.constant 0 : index
      %86 = vector.load %arg21[%c0_55, %c0_56] : memref<128x128xf32, #tpu.memory_space<vmem>>, vector<128x32xf32>
      %87 = vector.extract_strided_slice %85 {offsets = [0, 0], sizes = [128, 1], strides = [1, 1]} : vector<128x4xf32> to vector<128x1xf32>
      %88 = vector.broadcast %87 : vector<128x1xf32> to vector<128x32xf32>
      %89 = arith.mulf %86, %88 : vector<128x32xf32>
      %c0_57 = arith.constant 0 : index
      %c32_58 = arith.constant 32 : index
      %90 = vector.load %arg21[%c0_57, %c32_58] : memref<128x128xf32, #tpu.memory_space<vmem>>, vector<128x32xf32>
      %91 = vector.extract_strided_slice %85 {offsets = [0, 1], sizes = [128, 1], strides = [1, 1]} : vector<128x4xf32> to vector<128x1xf32>
      %92 = vector.broadcast %91 : vector<128x1xf32> to vector<128x32xf32>
      %93 = arith.mulf %90, %92 : vector<128x32xf32>
      %c0_59 = arith.constant 0 : index
      %c64_60 = arith.constant 64 : index
      %94 = vector.load %arg21[%c0_59, %c64_60] : memref<128x128xf32, #tpu.memory_space<vmem>>, vector<128x32xf32>
      %95 = vector.extract_strided_slice %85 {offsets = [0, 2], sizes = [128, 1], strides = [1, 1]} : vector<128x4xf32> to vector<128x1xf32>
      %96 = vector.broadcast %95 : vector<128x1xf32> to vector<128x32xf32>
      %97 = arith.mulf %94, %96 : vector<128x32xf32>
      %c0_61 = arith.constant 0 : index
      %c96_62 = arith.constant 96 : index
      %98 = vector.load %arg21[%c0_61, %c96_62] : memref<128x128xf32, #tpu.memory_space<vmem>>, vector<128x32xf32>
      %99 = vector.extract_strided_slice %85 {offsets = [0, 3], sizes = [128, 1], strides = [1, 1]} : vector<128x4xf32> to vector<128x1xf32>
      %100 = vector.broadcast %99 : vector<128x1xf32> to vector<128x32xf32>
      %101 = arith.mulf %98, %100 : vector<128x32xf32>
      %102 = tpu.concatenate %89, %93, %97, %101 in 1 : vector<128x32xf32>, vector<128x32xf32>, vector<128x32xf32>, vector<128x32xf32> -> vector<128x128xf32>
      %103 = arith.truncf %102 : vector<128x128xf32> to vector<128x128xbf16>
      %c0_63 = arith.constant 0 : index
      %c0_64 = arith.constant 0 : index
      %104 = vector.load %arg7[%c0_63, %c0_64] : memref<128x128xbf16, #tpu.memory_space<vmem>>, vector<128x128xbf16>
      %cst_65 = arith.constant dense<0.000000e+00> : vector<128x128xf32>
      %105 = tpu.matmul %103, %104, %cst_65 {dimension_numbers = #tpu.dot_dimension_numbers<[1], [0], [0], [1], [0, 0, 1, 1], [], []>} : vector<128x128xbf16>, vector<128x128xbf16>, vector<128x128xf32> -> vector<128x128xf32>
      %c0_66 = arith.constant 0 : index
      %c0_67 = arith.constant 0 : index
      %106 = vector.load %arg9[%c0_66, %c0_67] : memref<1x128xf32, #tpu.memory_space<vmem>>, vector<1x128xf32>
      %107 = vector.broadcast %106 : vector<1x128xf32> to vector<128x128xf32>
      %108 = arith.mulf %105, %107 : vector<128x128xf32>
      %c0_68 = arith.constant 0 : index
      %c0_69 = arith.constant 0 : index
      %109 = vector.load %arg10[%c0_68, %c0_69] : memref<1x128xf32, #tpu.memory_space<vmem>>, vector<1x128xf32>
      %110 = vector.broadcast %109 : vector<1x128xf32> to vector<128x128xf32>
      %111 = arith.mulf %81, %110 : vector<128x128xf32>
      %112 = arith.addf %108, %111 : vector<128x128xf32>
      %cst_70 = arith.constant dense<0.000000e+00> : vector<128xf32>
      %113 = vector.multi_reduction <add>, %112, %cst_70 [1] : vector<128x128xf32> to vector<128xf32>
      %114 = vector.shape_cast %113 : vector<128xf32> to vector<128x1xf32>
      %115 = arith.negf %114 : vector<128x1xf32>
      %116 = math.exp %115 : vector<128x1xf32>
      %cst_71 = arith.constant 1.000000e+00 : f32
      %117 = vector.broadcast %cst_71 : f32 to vector<128x1xf32>
      %118 = arith.addf %117, %116 : vector<128x1xf32>
      %119 = arith.divf %117, %118 : vector<128x1xf32>
      %120 = vector.broadcast %119 : vector<128x1xf32> to vector<128x128xf32>
      %121 = arith.mulf %105, %120 : vector<128x128xf32>
      %cst_72 = arith.constant 1.000000e+00 : f32
      %122 = vector.broadcast %cst_72 : f32 to vector<128x1xf32>
      %123 = arith.subf %122, %119 : vector<128x1xf32>
      %124 = vector.broadcast %123 : vector<128x1xf32> to vector<128x128xf32>
      %125 = arith.mulf %81, %124 : vector<128x128xf32>
      %126 = arith.addf %121, %125 : vector<128x128xf32>
      %c0_73 = arith.constant 0 : index
      %c0_74 = arith.constant 0 : index
      %127 = vector.load %arg11[%c0_73, %c0_74] : memref<1x128xf32, #tpu.memory_space<vmem>>, vector<1x128xf32>
      %c0_75 = arith.constant 0 : index
      %c0_76 = arith.constant 0 : index
      %128 = vector.load %arg12[%c0_75, %c0_76] : memref<1x128xf32, #tpu.memory_space<vmem>>, vector<1x128xf32>
      %cst_77 = arith.constant dense<0.000000e+00> : vector<128xf32>
      %129 = vector.multi_reduction <add>, %126, %cst_77 [1] : vector<128x128xf32> to vector<128xf32>
      %130 = vector.shape_cast %129 : vector<128xf32> to vector<128x1xf32>
      %cst_78 = arith.constant 1.280000e+02 : f32
      %131 = vector.broadcast %cst_78 : f32 to vector<128x1xf32>
      %132 = arith.divf %130, %131 : vector<128x1xf32>
      %133 = vector.broadcast %132 : vector<128x1xf32> to vector<128x128xf32>
      %134 = arith.subf %126, %133 : vector<128x128xf32>
      %135 = arith.mulf %134, %134 : vector<128x128xf32>
      %cst_79 = arith.constant dense<0.000000e+00> : vector<128xf32>
      %136 = vector.multi_reduction <add>, %135, %cst_79 [1] : vector<128x128xf32> to vector<128xf32>
      %137 = vector.shape_cast %136 : vector<128xf32> to vector<128x1xf32>
      %cst_80 = arith.constant 1.280000e+02 : f32
      %138 = vector.broadcast %cst_80 : f32 to vector<128x1xf32>
      %139 = arith.divf %137, %138 : vector<128x1xf32>
      %140 = vector.broadcast %132 : vector<128x1xf32> to vector<128x128xf32>
      %141 = arith.subf %126, %140 : vector<128x128xf32>
      %cst_81 = arith.constant 9.99999974E-6 : f32
      %142 = vector.broadcast %cst_81 : f32 to vector<128x1xf32>
      %143 = arith.addf %139, %142 : vector<128x1xf32>
      %144 = math.rsqrt %143 : vector<128x1xf32>
      %145 = vector.broadcast %144 : vector<128x1xf32> to vector<128x128xf32>
      %146 = arith.mulf %141, %145 : vector<128x128xf32>
      %147 = vector.broadcast %127 : vector<1x128xf32> to vector<128x128xf32>
      %148 = arith.mulf %146, %147 : vector<128x128xf32>
      %149 = vector.broadcast %128 : vector<1x128xf32> to vector<128x128xf32>
      %150 = arith.addf %148, %149 : vector<128x128xf32>
      %c0_82 = arith.constant 0 : index
      %c0_83 = arith.constant 0 : index
      %151 = vector.load %arg13[%c0_82, %c0_83] : memref<1x128xf32, #tpu.memory_space<vmem>>, vector<1x128xf32>
      %c0_84 = arith.constant 0 : index
      %c0_85 = arith.constant 0 : index
      %152 = vector.load %arg14[%c0_84, %c0_85] : memref<1x128xf32, #tpu.memory_space<vmem>>, vector<1x128xf32>
      %cst_86 = arith.constant dense<0.000000e+00> : vector<128xf32>
      %153 = vector.multi_reduction <add>, %150, %cst_86 [1] : vector<128x128xf32> to vector<128xf32>
      %154 = vector.shape_cast %153 : vector<128xf32> to vector<128x1xf32>
      %cst_87 = arith.constant 1.280000e+02 : f32
      %155 = vector.broadcast %cst_87 : f32 to vector<128x1xf32>
      %156 = arith.divf %154, %155 : vector<128x1xf32>
      %157 = vector.broadcast %156 : vector<128x1xf32> to vector<128x128xf32>
      %158 = arith.subf %150, %157 : vector<128x128xf32>
      %159 = arith.mulf %158, %158 : vector<128x128xf32>
      %cst_88 = arith.constant dense<0.000000e+00> : vector<128xf32>
      %160 = vector.multi_reduction <add>, %159, %cst_88 [1] : vector<128x128xf32> to vector<128xf32>
      %161 = vector.shape_cast %160 : vector<128xf32> to vector<128x1xf32>
      %cst_89 = arith.constant 1.280000e+02 : f32
      %162 = vector.broadcast %cst_89 : f32 to vector<128x1xf32>
      %163 = arith.divf %161, %162 : vector<128x1xf32>
      %164 = vector.broadcast %156 : vector<128x1xf32> to vector<128x128xf32>
      %165 = arith.subf %150, %164 : vector<128x128xf32>
      %cst_90 = arith.constant 9.99999974E-6 : f32
      %166 = vector.broadcast %cst_90 : f32 to vector<128x1xf32>
      %167 = arith.addf %163, %166 : vector<128x1xf32>
      %168 = math.rsqrt %167 : vector<128x1xf32>
      %169 = vector.broadcast %168 : vector<128x1xf32> to vector<128x128xf32>
      %170 = arith.mulf %165, %169 : vector<128x128xf32>
      %171 = vector.broadcast %151 : vector<1x128xf32> to vector<128x128xf32>
      %172 = arith.mulf %170, %171 : vector<128x128xf32>
      %173 = vector.broadcast %152 : vector<1x128xf32> to vector<128x128xf32>
      %174 = arith.addf %172, %173 : vector<128x128xf32>
      %175 = arith.truncf %174 : vector<128x128xf32> to vector<128x128xbf16>
      %c0_91 = arith.constant 0 : index
      %c0_92 = arith.constant 0 : index
      %176 = vector.load %arg15[%c0_91, %c0_92] : memref<128x128xbf16, #tpu.memory_space<vmem>>, vector<128x128xbf16>
      %cst_93 = arith.constant dense<0.000000e+00> : vector<128x128xf32>
      %177 = tpu.matmul %175, %176, %cst_93 {dimension_numbers = #tpu.dot_dimension_numbers<[1], [0], [0], [1], [0, 0, 1, 1], [], []>} : vector<128x128xbf16>, vector<128x128xbf16>, vector<128x128xf32> -> vector<128x128xf32>
      %cst_94 = arith.constant 0.000000e+00 : f32
      %178 = vector.broadcast %cst_94 : f32 to vector<128x128xf32>
      %179 = arith.maximumf %177, %178 : vector<128x128xf32>
      %180 = arith.truncf %179 : vector<128x128xf32> to vector<128x128xbf16>
      %c0_95 = arith.constant 0 : index
      %c0_96 = arith.constant 0 : index
      %181 = vector.load %arg16[%c0_95, %c0_96] : memref<128x128xbf16, #tpu.memory_space<vmem>>, vector<128x128xbf16>
      %cst_97 = arith.constant dense<0.000000e+00> : vector<128x128xf32>
      %182 = tpu.matmul %180, %181, %cst_97 {dimension_numbers = #tpu.dot_dimension_numbers<[1], [0], [0], [1], [0, 0, 1, 1], [], []>} : vector<128x128xbf16>, vector<128x128xbf16>, vector<128x128xf32> -> vector<128x128xf32>
      %183 = arith.addf %150, %182 : vector<128x128xf32>
      %c0_98 = arith.constant 0 : index
      %c0_99 = arith.constant 0 : index
      %184 = vector.load %arg17[%c0_98, %c0_99] : memref<128x128xf32, #tpu.memory_space<vmem>>, vector<128x128xf32>
      tpu.vector_store %arg17[%c0_98, %c0_99], %183 {strides = array<i32>} : memref<128x128xf32, #tpu.memory_space<vmem>>, vector<128x128xf32>,
    } else {
    }
    return
  }
  func.func @transform_0(%arg0: i32, %arg1: i32) -> (i32, i32) {
    %c0_i32 = arith.constant 0 : i32
    %c0_i32_0 = arith.constant 0 : i32
    return %arg0, %c0_i32 : i32, i32
  }
  func.func @transform_1(%arg0: i32, %arg1: i32) -> (i32, i32) {
    %c0_i32 = arith.constant 0 : i32
    %c0_i32_0 = arith.constant 0 : i32
    return %c0_i32, %arg1 : i32, i32
  }
  func.func @transform_2(%arg0: i32, %arg1: i32) -> (i32, i32) {
    %c0_i32 = arith.constant 0 : i32
    %c0_i32_0 = arith.constant 0 : i32
    return %arg1, %c0_i32 : i32, i32
  }
  func.func @transform_3(%arg0: i32, %arg1: i32) -> (i32, i32) {
    %c0_i32 = arith.constant 0 : i32
    return %arg0, %arg1 : i32, i32
  }
  func.func @transform_4(%arg0: i32, %arg1: i32) -> (i32, i32) {
    %c0_i32 = arith.constant 0 : i32
    %c0_i32_0 = arith.constant 0 : i32
    %c0_i32_1 = arith.constant 0 : i32
    return %c0_i32, %c0_i32_0 : i32, i32
  }
  func.func @transform_5(%arg0: i32, %arg1: i32) -> (i32, i32) {
    %c0_i32 = arith.constant 0 : i32
    %c0_i32_0 = arith.constant 0 : i32
    %c0_i32_1 = arith.constant 0 : i32
    return %c0_i32, %c0_i32_0 : i32, i32
  }
  func.func @transform_6(%arg0: i32, %arg1: i32) -> (i32, i32) {
    %c0_i32 = arith.constant 0 : i32
    %c0_i32_0 = arith.constant 0 : i32
    %c0_i32_1 = arith.constant 0 : i32
    return %c0_i32, %c0_i32_0 : i32, i32
  }
  func.func @transform_7(%arg0: i32, %arg1: i32) -> (i32, i32) {
    %c0_i32 = arith.constant 0 : i32
    %c0_i32_0 = arith.constant 0 : i32
    %c0_i32_1 = arith.constant 0 : i32
    return %c0_i32, %c0_i32_0 : i32, i32
  }
  func.func @transform_8(%arg0: i32, %arg1: i32) -> (i32, i32) {
    %c0_i32 = arith.constant 0 : i32
    %c0_i32_0 = arith.constant 0 : i32
    %c0_i32_1 = arith.constant 0 : i32
    return %c0_i32, %c0_i32_0 : i32, i32
  }
  func.func @transform_9(%arg0: i32, %arg1: i32) -> (i32, i32) {
    %c0_i32 = arith.constant 0 : i32
    %c0_i32_0 = arith.constant 0 : i32
    %c0_i32_1 = arith.constant 0 : i32
    return %c0_i32, %c0_i32_0 : i32, i32
  }
  func.func @transform_10(%arg0: i32, %arg1: i32) -> (i32, i32) {
    %c0_i32 = arith.constant 0 : i32
    %c0_i32_0 = arith.constant 0 : i32
    %c0_i32_1 = arith.constant 0 : i32
    return %c0_i32, %c0_i32_0 : i32, i32
  }
  func.func @transform_11(%arg0: i32, %arg1: i32) -> (i32, i32) {
    %c0_i32 = arith.constant 0 : i32
    %c0_i32_0 = arith.constant 0 : i32
    %c0_i32_1 = arith.constant 0 : i32
    return %c0_i32, %c0_i32_0 : i32, i32
  }
  func.func @transform_12(%arg0: i32, %arg1: i32) -> (i32, i32) {
    %c0_i32 = arith.constant 0 : i32
    %c0_i32_0 = arith.constant 0 : i32
    %c0_i32_1 = arith.constant 0 : i32
    return %c0_i32, %c0_i32_0 : i32, i32
  }
  func.func @transform_13(%arg0: i32, %arg1: i32) -> (i32, i32) {
    %c0_i32 = arith.constant 0 : i32
    %c0_i32_0 = arith.constant 0 : i32
    %c0_i32_1 = arith.constant 0 : i32
    return %c0_i32, %c0_i32_0 : i32, i32
  }
  func.func @transform_14(%arg0: i32, %arg1: i32) -> (i32, i32) {
    %c0_i32 = arith.constant 0 : i32
    %c0_i32_0 = arith.constant 0 : i32
    %c0_i32_1 = arith.constant 0 : i32
    return %c0_i32, %c0_i32_0 : i32, i32
  }
  func.func @transform_15(%arg0: i32, %arg1: i32) -> (i32, i32) {
    %c0_i32 = arith.constant 0 : i32
    %c0_i32_0 = arith.constant 0 : i32
    return %arg0, %c0_i32 : i32, i32
  }
}

</mosaic_0001>

<llo_original>
// kernel: graph_transformer_layer.1
$region0: #{graph_transformer_layer.1}
  #allocation0 [shape = 'u32[]', space=smem, size = 0x4, offset = 0x4, fixed_abs, tag = 'smem constant byte address 0x4 - core index']
  #allocation1 [shape = 'u32[144,128]{1,0:T(1,128)}', space=vmem, size = 0x12000, scoped, tag = 'internal scratch']
  #allocation2 [shape = 'bf16[128,128]{1,0:T(8,128)(2,1)}', space=vmem, size = 0x8000, scoped, tag = 'scratch operand']
  #allocation3 [shape = 'f32[128,128]{1,0:T(8,128)}', space=vmem, size = 0x10000, scoped, tag = 'scratch operand']
  #allocation4 [shape = 'f32[128,4]{1,0:T(8,128)}', space=vmem, size = 0x10000, scoped, tag = 'scratch operand']
  #allocation5 [shape = 'f32[128,128]{1,0:T(8,128)}', space=vmem, size = 0x10000, scoped, tag = 'scratch operand']
  %s0 = inlined_call_operand.vmem [shape: f32[256,128], index: 0, kind: input, shape index: {}]
  %s1 = inlined_call_operand.vmem [shape: bf16[128,256], index: 1, kind: input, shape index: {}]
  %s2 = inlined_call_operand.vmem [shape: bf16[256,128], index: 2, kind: input, shape index: {}]
  %s3 = inlined_call_operand.vmem [shape: s8[256,256], index: 3, kind: input, shape index: {}]
  %s4 = inlined_call_operand.vmem [shape: bf16[128,128], index: 4, kind: input, shape index: {}]
  %s5 = inlined_call_operand.vmem [shape: bf16[128,128], index: 5, kind: input, shape index: {}]
  %s6 = inlined_call_operand.vmem [shape: bf16[128,128], index: 6, kind: input, shape index: {}]
  %s7 = inlined_call_operand.vmem [shape: f32[1,128], index: 7, kind: input, shape index: {}]
  %s8 = inlined_call_operand.vmem [shape: f32[1,128], index: 8, kind: input, shape index: {}]
  %s9 = inlined_call_operand.vmem [shape: f32[1,128], index: 9, kind: input, shape index: {}]
  %s10 = inlined_call_operand.vmem [shape: f32[1,128], index: 10, kind: input, shape index: {}]
  %s11 = inlined_call_operand.vmem [shape: f32[1,128], index: 11, kind: input, shape index: {}]
  %s12 = inlined_call_operand.vmem [shape: f32[1,128], index: 12, kind: input, shape index: {}]
  %s13 = inlined_call_operand.vmem [shape: bf16[128,128], index: 13, kind: input, shape index: {}]
  %s14 = inlined_call_operand.vmem [shape: bf16[128,128], index: 14, kind: input, shape index: {}]
  %s15 = inlined_call_operand.hbm [shape: f32[256,128], index: 15, kind: output, shape index: {}]
  %s16 = sld [smem:[#allocation0]]
  $region101: #{graph_transformer_layer.1} parent=0
    _
  %s18 = ssub.s32 1, %s16
  %s19 = scalar_select 0, %s18, %s16
  $region1: #{graph_transformer_layer.1} parent=0
    #allocation6 [shape = 'u8[131072]{0}', space=vmem, size = 0x20000, scoped, tag = 'output window, operand 0']
    #allocation7 [shape = 's32[2]{0}', space=sflag, size = 0x8, scoped, tag = 'scoped memory for graph_transformer_layer.1']
    %20 = vsyncpa [#allocation7], 0
    %s21 = scalar_lea.sflag [#allocation7], 1
    %22 = vsyncpa %s21, 0
    loop: start=0, step=1, limit=4
    $region2: #{graph_transformer_layer.1} parent=1 // loop_pre_header
      _
    $region3: #{graph_transformer_layer.1} parent=1 // loop_header
      %s24 = sphi 0, %s28
      %p25 = scmp.ge.s32.totalorder %s24, 4
      %s31 = sphi 0, %s43
      %s32 = sphi 0, %s39
      %s33 = sphi 0, %s31
      %s34 = sphi 0, %s32
      %s35 = sphi 0, %s33
      %s36 = sphi 0, %s34
      %s46 = sphi 0, %s48
      %s49 = sphi 0, %s46
      %s50 = sphi 0, %s49
      %s66 = sphi 0, %s50
      %s72 = sphi 0, %s74
      %s75 = sphi 0, %s72
      %s76 = sphi 0, %s75
      %s92 = sphi 0, %s76
      %s98 = sphi 0, %s100
      %s101 = sphi 0, %s98
      %s102 = sphi 0, %s101
      %s118 = sphi 0, %s102
      %s126 = sphi 0, %s128
      %s129 = sphi 0, %s126
      %s130 = sphi 0, %s129
      %s146 = sphi 0, %s130
      %s150 = sphi 0, %s150
      %s152 = sphi 0, %s150
      %s153 = sphi 0, %s152
      %s167 = sphi 0, %s153
      %s171 = sphi 0, %s171
      %s173 = sphi 0, %s171
      %s174 = sphi 0, %s173
      %s188 = sphi 0, %s174
      %s192 = sphi 0, %s192
      %s194 = sphi 0, %s192
      %s195 = sphi 0, %s194
      %s209 = sphi 0, %s195
      %s213 = sphi 0, %s213
      %s215 = sphi 0, %s213
      %s216 = sphi 0, %s215
      %s230 = sphi 0, %s216
      %s234 = sphi 0, %s234
      %s236 = sphi 0, %s234
      %s237 = sphi 0, %s236
      %s251 = sphi 0, %s237
      %s255 = sphi 0, %s255
      %s257 = sphi 0, %s255
      %s258 = sphi 0, %s257
      %s272 = sphi 0, %s258
      %s276 = sphi 0, %s276
      %s278 = sphi 0, %s276
      %s279 = sphi 0, %s278
      %s293 = sphi 0, %s279
      %s297 = sphi 0, %s297
      %s299 = sphi 0, %s297
      %s300 = sphi 0, %s299
      %s314 = sphi 0, %s300
      %s318 = sphi 0, %s318
      %s320 = sphi 0, %s318
      %s321 = sphi 0, %s320
      %s335 = sphi 0, %s321
      %s339 = sphi 0, %s339
      %s341 = sphi 0, %s339
      %s342 = sphi 0, %s341
      %s356 = sphi 0, %s342
      %s360 = sphi 0, %s360
      %s362 = sphi 0, %s360
      %s363 = sphi 0, %s362
      %s377 = sphi 0, %s363
      %s383 = sphi 0, %s385
      %s386 = sphi 0, %s383
      %s387 = sphi 0, %s386
      %s403 = sphi 0, %s387
    $region4: #{graph_transformer_layer.1} parent=1 // loop_header_branch
      %27 = sbr.rel (%p25) target = $region8
    $region5: #{graph_transformer_layer.1} parent=1 // loop_body
      %s29 = ssub.s32 %s24, 1
      %s30 = ssub.s32 %s24, 2
      %s37 = sadd.s32 1, %s32
      %p38 = scmp.ge.s32.totalorder %s37, 1
      %s39 = scalar_select %p38, 0, %s37
      %s40 = sadd.s32 1, %s31
      %s41 = scalar_select %p38, %s40, %s31
      %p42 = scmp.ge.s32.totalorder %s41, 2
      %s43 = scalar_select %p42, 0, %s41
      %s44 = ssub.s32 %s31, %s43
      %p45 = scmp.eq.s32.totalorder %s44, 0
      %s47 = sadd.s32 %s46, 1
      %s48 = scalar_select %p45, %s46, %s47
      %p51 = pneg %p45
      %p52 = scmp.eq.s32.totalorder %s24, 1
      %p53 = por %p51, %p52
      %p54 = scmp.ne.s32.totalorder %s46, %s49
      %p55 = scmp.eq.s32.totalorder %s24, 0
      %p56 = por %p54, %p55
      %p57 = scmp.ne.s32.totalorder %s46, %s49
      %p58 = scmp.eq.s32.totalorder %s29, 1
      %p59 = por %p57, %p58
      %p60 = scmp.ne.s32.totalorder %s49, %s50
      %p61 = scmp.eq.s32.totalorder %s29, 0
      %p62 = por %p60, %p61
      %p63 = scmp.ne.s32.totalorder %s49, %s50
      %p64 = scmp.eq.s32.totalorder %s30, 1
      %p65 = por %p63, %p64
      %p67 = scmp.ne.s32.totalorder %s50, %s66
      %p68 = scmp.eq.s32.totalorder %s30, 0
      %p69 = por %p67, %p68
      %s70 = ssub.s32 %s32, %s39
      %p71 = scmp.eq.s32.totalorder %s70, 0
      %s73 = sadd.s32 %s72, 1
      %s74 = scalar_select %p71, %s72, %s73
      %p77 = pneg %p71
      %p78 = scmp.eq.s32.totalorder %s24, 1
      %p79 = por %p77, %p78
      %p80 = scmp.ne.s32.totalorder %s72, %s75
      %p81 = scmp.eq.s32.totalorder %s24, 0
      %p82 = por %p80, %p81
      %p83 = scmp.ne.s32.totalorder %s72, %s75
      %p84 = scmp.eq.s32.totalorder %s29, 1
      %p85 = por %p83, %p84
      %p86 = scmp.ne.s32.totalorder %s75, %s76
      %p87 = scmp.eq.s32.totalorder %s29, 0
      %p88 = por %p86, %p87
      %p89 = scmp.ne.s32.totalorder %s75, %s76
      %p90 = scmp.eq.s32.totalorder %s30, 1
      %p91 = por %p89, %p90
      %p93 = scmp.ne.s32.totalorder %s76, %s92
      %p94 = scmp.eq.s32.totalorder %s30, 0
      %p95 = por %p93, %p94
      %s96 = ssub.s32 %s32, %s39
      %p97 = scmp.eq.s32.totalorder %s96, 0
      %s99 = sadd.s32 %s98, 1
      %s100 = scalar_select %p97, %s98, %s99
      %p103 = pneg %p97
      %p104 = scmp.eq.s32.totalorder %s24, 1
      %p105 = por %p103, %p104
      %p106 = scmp.ne.s32.totalorder %s98, %s101
      %p107 = scmp.eq.s32.totalorder %s24, 0
      %p108 = por %p106, %p107
      %p109 = scmp.ne.s32.totalorder %s98, %s101
      %p110 = scmp.eq.s32.totalorder %s29, 1
      %p111 = por %p109, %p110
      %p112 = scmp.ne.s32.totalorder %s101, %s102
      %p113 = scmp.eq.s32.totalorder %s29, 0
      %p114 = por %p112, %p113
      %p115 = scmp.ne.s32.totalorder %s101, %s102
      %p116 = scmp.eq.s32.totalorder %s30, 1
      %p117 = por %p115, %p116
      %p119 = scmp.ne.s32.totalorder %s102, %s118
      %p120 = scmp.eq.s32.totalorder %s30, 0
      %p121 = por %p119, %p120
      %s122 = ssub.s32 %s31, %s43
      %s123 = ssub.s32 %s32, %s39
      %s124 = sor.u32 %s122, %s123
      %p125 = scmp.eq.s32.totalorder %s124, 0
      %s127 = sadd.s32 %s126, 1
      %s128 = scalar_select %p125, %s126, %s127
      %p131 = pneg %p125
      %p132 = scmp.eq.s32.totalorder %s24, 1
      %p133 = por %p131, %p132
      %p134 = scmp.ne.s32.totalorder %s126, %s129
      %p135 = scmp.eq.s32.totalorder %s24, 0
      %p136 = por %p134, %p135
      %p137 = scmp.ne.s32.totalorder %s126, %s129
      %p138 = scmp.eq.s32.totalorder %s29, 1
      %p139 = por %p137, %p138
      %p140 = scmp.ne.s32.totalorder %s129, %s130
      %p141 = scmp.eq.s32.totalorder %s29, 0
      %p142 = por %p140, %p141
      %p143 = scmp.ne.s32.totalorder %s129, %s130
      %p144 = scmp.eq.s32.totalorder %s30, 1
      %p145 = por %p143, %p144
      %p147 = scmp.ne.s32.totalorder %s130, %s146
      %p148 = scmp.eq.s32.totalorder %s30, 0
      %p149 = por %p147, %p148
      %s151 = sadd.s32 %s150, 1
      %p154 = scmp.eq.s32.totalorder %s24, 1
      %p155 = scmp.ne.s32.totalorder %s150, %s152
      %p156 = scmp.eq.s32.totalorder %s24, 0
      %p157 = por %p155, %p156
      %p158 = scmp.ne.s32.totalorder %s150, %s152
      %p159 = scmp.eq.s32.totalorder %s29, 1
      %p160 = por %p158, %p159
      %p161 = scmp.ne.s32.totalorder %s152, %s153
      %p162 = scmp.eq.s32.totalorder %s29, 0
      %p163 = por %p161, %p162
      %p164 = scmp.ne.s32.totalorder %s152, %s153
      %p165 = scmp.eq.s32.totalorder %s30, 1
      %p166 = por %p164, %p165
      %p168 = scmp.ne.s32.totalorder %s153, %s167
      %p169 = scmp.eq.s32.totalorder %s30, 0
      %p170 = por %p168, %p169
      %s172 = sadd.s32 %s171, 1
      %p175 = scmp.eq.s32.totalorder %s24, 1
      %p176 = scmp.ne.s32.totalorder %s171, %s173
      %p177 = scmp.eq.s32.totalorder %s24, 0
      %p178 = por %p176, %p177
      %p179 = scmp.ne.s32.totalorder %s171, %s173
      %p180 = scmp.eq.s32.totalorder %s29, 1
      %p181 = por %p179, %p180
      %p182 = scmp.ne.s32.totalorder %s173, %s174
      %p183 = scmp.eq.s32.totalorder %s29, 0
      %p184 = por %p182, %p183
      %p185 = scmp.ne.s32.totalorder %s173, %s174
      %p186 = scmp.eq.s32.totalorder %s30, 1
      %p187 = por %p185, %p186
      %p189 = scmp.ne.s32.totalorder %s174, %s188
      %p190 = scmp.eq.s32.totalorder %s30, 0
      %p191 = por %p189, %p190
      %s193 = sadd.s32 %s192, 1
      %p196 = scmp.eq.s32.totalorder %s24, 1
      %p197 = scmp.ne.s32.totalorder %s192, %s194
      %p198 = scmp.eq.s32.totalorder %s24, 0
      %p199 = por %p197, %p198
      %p200 = scmp.ne.s32.totalorder %s192, %s194
      %p201 = scmp.eq.s32.totalorder %s29, 1
      %p202 = por %p200, %p201
      %p203 = scmp.ne.s32.totalorder %s194, %s195
      %p204 = scmp.eq.s32.totalorder %s29, 0
      %p205 = por %p203, %p204
      %p206 = scmp.ne.s32.totalorder %s194, %s195
      %p207 = scmp.eq.s32.totalorder %s30, 1
      %p208 = por %p206, %p207
      %p210 = scmp.ne.s32.totalorder %s195, %s209
      %p211 = scmp.eq.s32.totalorder %s30, 0
      %p212 = por %p210, %p211
      %s214 = sadd.s32 %s213, 1
      %p217 = scmp.eq.s32.totalorder %s24, 1
      %p218 = scmp.ne.s32.totalorder %s213, %s215
      %p219 = scmp.eq.s32.totalorder %s24, 0
      %p220 = por %p218, %p219
      %p221 = scmp.ne.s32.totalorder %s213, %s215
      %p222 = scmp.eq.s32.totalorder %s29, 1
      %p223 = por %p221, %p222
      %p224 = scmp.ne.s32.totalorder %s215, %s216
      %p225 = scmp.eq.s32.totalorder %s29, 0
      %p226 = por %p224, %p225
      %p227 = scmp.ne.s32.totalorder %s215, %s216
      %p228 = scmp.eq.s32.totalorder %s30, 1
      %p229 = por %p227, %p228
      %p231 = scmp.ne.s32.totalorder %s216, %s230
      %p232 = scmp.eq.s32.totalorder %s30, 0
      %p233 = por %p231, %p232
      %s235 = sadd.s32 %s234, 1
      %p238 = scmp.eq.s32.totalorder %s24, 1
      %p239 = scmp.ne.s32.totalorder %s234, %s236
      %p240 = scmp.eq.s32.totalorder %s24, 0
      %p241 = por %p239, %p240
      %p242 = scmp.ne.s32.totalorder %s234, %s236
      %p243 = scmp.eq.s32.totalorder %s29, 1
      %p244 = por %p242, %p243
      %p245 = scmp.ne.s32.totalorder %s236, %s237
      %p246 = scmp.eq.s32.totalorder %s29, 0
      %p247 = por %p245, %p246
      %p248 = scmp.ne.s32.totalorder %s236, %s237
      %p249 = scmp.eq.s32.totalorder %s30, 1
      %p250 = por %p248, %p249
      %p252 = scmp.ne.s32.totalorder %s237, %s251
      %p253 = scmp.eq.s32.totalorder %s30, 0
      %p254 = por %p252, %p253
      %s256 = sadd.s32 %s255, 1
      %p259 = scmp.eq.s32.totalorder %s24, 1
      %p260 = scmp.ne.s32.totalorder %s255, %s257
      %p261 = scmp.eq.s32.totalorder %s24, 0
      %p262 = por %p260, %p261
      %p263 = scmp.ne.s32.totalorder %s255, %s257
      %p264 = scmp.eq.s32.totalorder %s29, 1
      %p265 = por %p263, %p264
      %p266 = scmp.ne.s32.totalorder %s257, %s258
      %p267 = scmp.eq.s32.totalorder %s29, 0
      %p268 = por %p266, %p267
      %p269 = scmp.ne.s32.totalorder %s257, %s258
      %p270 = scmp.eq.s32.totalorder %s30, 1
      %p271 = por %p269, %p270
      %p273 = scmp.ne.s32.totalorder %s258, %s272
      %p274 = scmp.eq.s32.totalorder %s30, 0
      %p275 = por %p273, %p274
      %s277 = sadd.s32 %s276, 1
      %p280 = scmp.eq.s32.totalorder %s24, 1
      %p281 = scmp.ne.s32.totalorder %s276, %s278
      %p282 = scmp.eq.s32.totalorder %s24, 0
      %p283 = por %p281, %p282
      %p284 = scmp.ne.s32.totalorder %s276, %s278
      %p285 = scmp.eq.s32.totalorder %s29, 1
      %p286 = por %p284, %p285
      %p287 = scmp.ne.s32.totalorder %s278, %s279
      %p288 = scmp.eq.s32.totalorder %s29, 0
      %p289 = por %p287, %p288
      %p290 = scmp.ne.s32.totalorder %s278, %s279
      %p291 = scmp.eq.s32.totalorder %s30, 1
      %p292 = por %p290, %p291
      %p294 = scmp.ne.s32.totalorder %s279, %s293
      %p295 = scmp.eq.s32.totalorder %s30, 0
      %p296 = por %p294, %p295
      %s298 = sadd.s32 %s297, 1
      %p301 = scmp.eq.s32.totalorder %s24, 1
      %p302 = scmp.ne.s32.totalorder %s297, %s299
      %p303 = scmp.eq.s32.totalorder %s24, 0
      %p304 = por %p302, %p303
      %p305 = scmp.ne.s32.totalorder %s297, %s299
      %p306 = scmp.eq.s32.totalorder %s29, 1
      %p307 = por %p305, %p306
      %p308 = scmp.ne.s32.totalorder %s299, %s300
      %p309 = scmp.eq.s32.totalorder %s29, 0
      %p310 = por %p308, %p309
      %p311 = scmp.ne.s32.totalorder %s299, %s300
      %p312 = scmp.eq.s32.totalorder %s30, 1
      %p313 = por %p311, %p312
      %p315 = scmp.ne.s32.totalorder %s300, %s314
      %p316 = scmp.eq.s32.totalorder %s30, 0
      %p317 = por %p315, %p316
      %s319 = sadd.s32 %s318, 1
      %p322 = scmp.eq.s32.totalorder %s24, 1
      %p323 = scmp.ne.s32.totalorder %s318, %s320
      %p324 = scmp.eq.s32.totalorder %s24, 0
      %p325 = por %p323, %p324
      %p326 = scmp.ne.s32.totalorder %s318, %s320
      %p327 = scmp.eq.s32.totalorder %s29, 1
      %p328 = por %p326, %p327
      %p329 = scmp.ne.s32.totalorder %s320, %s321
      %p330 = scmp.eq.s32.totalorder %s29, 0
      %p331 = por %p329, %p330
      %p332 = scmp.ne.s32.totalorder %s320, %s321
      %p333 = scmp.eq.s32.totalorder %s30, 1
      %p334 = por %p332, %p333
      %p336 = scmp.ne.s32.totalorder %s321, %s335
      %p337 = scmp.eq.s32.totalorder %s30, 0
      %p338 = por %p336, %p337
      %s340 = sadd.s32 %s339, 1
      %p343 = scmp.eq.s32.totalorder %s24, 1
      %p344 = scmp.ne.s32.totalorder %s339, %s341
      %p345 = scmp.eq.s32.totalorder %s24, 0
      %p346 = por %p344, %p345
      %p347 = scmp.ne.s32.totalorder %s339, %s341
      %p348 = scmp.eq.s32.totalorder %s29, 1
      %p349 = por %p347, %p348
      %p350 = scmp.ne.s32.totalorder %s341, %s342
      %p351 = scmp.eq.s32.totalorder %s29, 0
      %p352 = por %p350, %p351
      %p353 = scmp.ne.s32.totalorder %s341, %s342
      %p354 = scmp.eq.s32.totalorder %s30, 1
      %p355 = por %p353, %p354
      %p357 = scmp.ne.s32.totalorder %s342, %s356
      %p358 = scmp.eq.s32.totalorder %s30, 0
      %p359 = por %p357, %p358
      %s361 = sadd.s32 %s360, 1
      %p364 = scmp.eq.s32.totalorder %s24, 1
      %p365 = scmp.ne.s32.totalorder %s360, %s362
      %p366 = scmp.eq.s32.totalorder %s24, 0
      %p367 = por %p365, %p366
      %p368 = scmp.ne.s32.totalorder %s360, %s362
      %p369 = scmp.eq.s32.totalorder %s29, 1
      %p370 = por %p368, %p369
      %p371 = scmp.ne.s32.totalorder %s362, %s363
      %p372 = scmp.eq.s32.totalorder %s29, 0
      %p373 = por %p371, %p372
      %p374 = scmp.ne.s32.totalorder %s362, %s363
      %p375 = scmp.eq.s32.totalorder %s30, 1
      %p376 = por %p374, %p375
      %p378 = scmp.ne.s32.totalorder %s363, %s377
      %p379 = scmp.eq.s32.totalorder %s30, 0
      %p380 = por %p378, %p379
      %s381 = ssub.s32 %s31, %s43
      %p382 = scmp.eq.s32.totalorder %s381, 0
      %s384 = sadd.s32 %s383, 1
      %s385 = scalar_select %p382, %s383, %s384
      %p388 = pneg %p382
      %p389 = scmp.eq.s32.totalorder %s24, 1
      %p390 = por %p388, %p389
      %p391 = scmp.ne.s32.totalorder %s383, %s386
      %p392 = scmp.eq.s32.totalorder %s24, 0
      %p393 = por %p391, %p392
      %p394 = scmp.ne.s32.totalorder %s383, %s386
      %p395 = scmp.eq.s32.totalorder %s29, 1
      %p396 = por %p394, %p395
      %p397 = scmp.ne.s32.totalorder %s386, %s387
      %p398 = scmp.eq.s32.totalorder %s29, 0
      %p399 = por %p397, %p398
      %p400 = scmp.ne.s32.totalorder %s386, %s387
      %p401 = scmp.eq.s32.totalorder %s30, 1
      %p402 = por %p400, %p401
      %p404 = scmp.ne.s32.totalorder %s387, %s403
      %p405 = scmp.eq.s32.totalorder %s30, 0
      %p406 = por %p404, %p405
      %p407 = scmp.le.s32.totalorder 1, %s24
      %p408 = scmp.lt.s32.totalorder %s24, 3
      %p409 = pnand %p407, %p408
      %p410 = pneg %p409
      // Predicated region
      $region9: #{graph_transformer_layer.1} parent=5 // pred_check
        _
      $region10: #{graph_transformer_layer.1} parent=5 // pred_check_branch
        %412 = sbr.rel (%p409) target = $region12
      $region11: #{graph_transformer_layer.1} parent=5 // pred_region
        %s413 = ssub.s32 %s24, 1
        // Predicated region
        $region13: #{graph_transformer_layer.1} parent=11 // pred_check
          %p414 = pneg %p88
        $region14: #{graph_transformer_layer.1} parent=11 // pred_check_branch
          %416 = sbr.rel (%p414) target = $region16
        $region15: #{graph_transformer_layer.1} parent=11 // pred_region
          %s417 = smul.u32 2, %s34
          %p418 = scmp.lt.s32.totalorder %s417, 1
          %s419 = scalar_select %p418, %s417, 1
          %s420 = smul.addr %s419, 4
          %s421 = scalar_lea.vmem %s1, %s420
          %s422 = smul.u32 2, %s34
        $region16: #{graph_transformer_layer.1} parent=11 // pred_fallthru
          _
        // Predicated region
        $region17: #{graph_transformer_layer.1} parent=11 // pred_check
          %p423 = pneg %p114
        $region18: #{graph_transformer_layer.1} parent=11 // pred_check_branch
          %425 = sbr.rel (%p423) target = $region20
        $region19: #{graph_transformer_layer.1} parent=11 // pred_region
          %s426 = smul.u32 32, %s34
          %p427 = scmp.lt.s32.totalorder %s426, 31
          %s428 = scalar_select %p427, %s426, 31
          %s429 = smul.addr %s428, 4
          %s430 = scalar_lea.vmem %s2, %s429
          %s431 = smul.u32 32, %s34
        $region20: #{graph_transformer_layer.1} parent=11 // pred_fallthru
          _
        // Predicated region
        $region21: #{graph_transformer_layer.1} parent=11 // pred_check
          %p432 = pneg %p163
        $region22: #{graph_transformer_layer.1} parent=11 // pred_check_branch
          %434 = sbr.rel (%p432) target = $region24
        $region23: #{graph_transformer_layer.1} parent=11 // pred_region
          _
        $region24: #{graph_transformer_layer.1} parent=11 // pred_fallthru
          _
        // Predicated region
        $region25: #{graph_transformer_layer.1} parent=11 // pred_check
          %p435 = pneg %p184
        $region26: #{graph_transformer_layer.1} parent=11 // pred_check_branch
          %437 = sbr.rel (%p435) target = $region28
        $region27: #{graph_transformer_layer.1} parent=11 // pred_region
          _
        $region28: #{graph_transformer_layer.1} parent=11 // pred_fallthru
          _
        // Predicated region
        $region29: #{graph_transformer_layer.1} parent=11 // pred_check
          %p438 = pneg %p205
        $region30: #{graph_transformer_layer.1} parent=11 // pred_check_branch
          %440 = sbr.rel (%p438) target = $region32
        $region31: #{graph_transformer_layer.1} parent=11 // pred_region
          _
        $region32: #{graph_transformer_layer.1} parent=11 // pred_fallthru
          _
        // Predicated region
        $region33: #{graph_transformer_layer.1} parent=11 // pred_check
          %p441 = pneg %p226
        $region34: #{graph_transformer_layer.1} parent=11 // pred_check_branch
          %443 = sbr.rel (%p441) target = $region36
        $region35: #{graph_transformer_layer.1} parent=11 // pred_region
          _
        $region36: #{graph_transformer_layer.1} parent=11 // pred_fallthru
          _
        // Predicated region
        $region37: #{graph_transformer_layer.1} parent=11 // pred_check
          %p444 = pneg %p247
        $region38: #{graph_transformer_layer.1} parent=11 // pred_check_branch
          %446 = sbr.rel (%p444) target = $region40
        $region39: #{graph_transformer_layer.1} parent=11 // pred_region
          _
        $region40: #{graph_transformer_layer.1} parent=11 // pred_fallthru
          _
        // Predicated region
        $region41: #{graph_transformer_layer.1} parent=11 // pred_check
          %p447 = pneg %p268
        $region42: #{graph_transformer_layer.1} parent=11 // pred_check_branch
          %449 = sbr.rel (%p447) target = $region44
        $region43: #{graph_transformer_layer.1} parent=11 // pred_region
          _
        $region44: #{graph_transformer_layer.1} parent=11 // pred_fallthru
          _
        // Predicated region
        $region45: #{graph_transformer_layer.1} parent=11 // pred_check
          %p450 = pneg %p289
        $region46: #{graph_transformer_layer.1} parent=11 // pred_check_branch
          %452 = sbr.rel (%p450) target = $region48
        $region47: #{graph_transformer_layer.1} parent=11 // pred_region
          _
        $region48: #{graph_transformer_layer.1} parent=11 // pred_fallthru
          _
        // Predicated region
        $region49: #{graph_transformer_layer.1} parent=11 // pred_check
          %p453 = pneg %p310
        $region50: #{graph_transformer_layer.1} parent=11 // pred_check_branch
          %455 = sbr.rel (%p453) target = $region52
        $region51: #{graph_transformer_layer.1} parent=11 // pred_region
          _
        $region52: #{graph_transformer_layer.1} parent=11 // pred_fallthru
          _
        // Predicated region
        $region53: #{graph_transformer_layer.1} parent=11 // pred_check
          %p456 = pneg %p331
        $region54: #{graph_transformer_layer.1} parent=11 // pred_check_branch
          %458 = sbr.rel (%p456) target = $region56
        $region55: #{graph_transformer_layer.1} parent=11 // pred_region
          _
        $region56: #{graph_transformer_layer.1} parent=11 // pred_fallthru
          _
        // Predicated region
        $region57: #{graph_transformer_layer.1} parent=11 // pred_check
          %p459 = pneg %p352
        $region58: #{graph_transformer_layer.1} parent=11 // pred_check_branch
          %461 = sbr.rel (%p459) target = $region60
        $region59: #{graph_transformer_layer.1} parent=11 // pred_region
          _
        $region60: #{graph_transformer_layer.1} parent=11 // pred_fallthru
          _
        // Predicated region
        $region61: #{graph_transformer_layer.1} parent=11 // pred_check
          %p462 = pneg %p373
        $region62: #{graph_transformer_layer.1} parent=11 // pred_check_branch
          %464 = sbr.rel (%p462) target = $region64
        $region63: #{graph_transformer_layer.1} parent=11 // pred_region
          _
        $region64: #{graph_transformer_layer.1} parent=11 // pred_fallthru
          _
      $region12: #{graph_transformer_layer.1} parent=5 // pred_fallthru
        _
      %p465 = scmp.lt.s32.totalorder %s24, 2
      // Predicated region
      $region65: #{graph_transformer_layer.1} parent=5 // pred_check
        %p466 = pneg %p465
      $region66: #{graph_transformer_layer.1} parent=5 // pred_check_branch
        %468 = sbr.rel (%p466) target = $region68
      $region67: #{graph_transformer_layer.1} parent=5 // pred_region
        // Predicated region
        $region69: #{graph_transformer_layer.1} parent=67 // pred_check
          %p469 = pneg %p56
        $region70: #{graph_transformer_layer.1} parent=67 // pred_check_branch
          %471 = sbr.rel (%p469) target = $region72
        $region71: #{graph_transformer_layer.1} parent=67 // pred_region
          %s472 = smul.u32 16, %s31
          %p473 = scmp.lt.s32.totalorder %s472, 31
          %s474 = scalar_select %p473, %s472, 31
          %s475 = smul.addr %s474, 8
          %s476 = scalar_lea.vmem %s0, %s475
          %s477 = smul.u32 16, %s31
        $region72: #{graph_transformer_layer.1} parent=67 // pred_fallthru
          _
        // Predicated region
        $region73: #{graph_transformer_layer.1} parent=67 // pred_check
          %p478 = pneg %p136
        $region74: #{graph_transformer_layer.1} parent=67 // pred_check_branch
          %480 = sbr.rel (%p478) target = $region76
        $region75: #{graph_transformer_layer.1} parent=67 // pred_region
          %s481 = smul.u32 4, %s31
          %s482 = smul.u32 2, %s32
          %p483 = scmp.lt.s32.totalorder %s481, 7
          %s484 = scalar_select %p483, %s481, 7
          %p485 = scmp.lt.s32.totalorder %s482, 1
          %s486 = scalar_select %p485, %s482, 1
          %s487 = smul.addr %s484, 2
          %s488 = sadd.s32 %s486, %s487
          %s489 = smul.addr %s488, 8
          %s490 = scalar_lea.vmem %s3, %s489
          %s491 = smul.u32 4, %s31
          %s492 = smul.u32 2, %s32
        $region76: #{graph_transformer_layer.1} parent=67 // pred_fallthru
          _
      $region68: #{graph_transformer_layer.1} parent=5 // pred_fallthru
        _
      %p493 = scmp.le.s32.totalorder 1, %s24
      %p494 = scmp.lt.s32.totalorder %s24, 3
      %p495 = pnand %p493, %p494
      %p496 = pneg %p495
      // Predicated region
      $region77: #{graph_transformer_layer.1} parent=5 // pred_check
        _
      $region78: #{graph_transformer_layer.1} parent=5 // pred_check_branch
        %498 = sbr.rel (%p495) target = $region80
      $region79: #{graph_transformer_layer.1} parent=5 // pred_region
        %s499 = ssub.s32 %s24, 1
        %s500 = smul.u32 16, %s33
        %p501 = scmp.lt.s32.totalorder %s500, 31
        %s502 = scalar_select %p501, %s500, 31
        %s503 = smul.addr %s502, 8
        %s504 = scalar_lea.vmem %s0, %s503
        %p505 = pneg %p62
        %p506 = pneg %p59
        %s507 = smul.u32 2, %s34
        %p508 = scmp.lt.s32.totalorder %s507, 1
        %s509 = scalar_select %p508, %s507, 1
        %s510 = smul.addr %s509, 4
        %s511 = scalar_lea.vmem %s1, %s510
        %p512 = pneg %p88
        %p513 = pneg %p85
        %s514 = smul.u32 32, %s34
        %p515 = scmp.lt.s32.totalorder %s514, 31
        %s516 = scalar_select %p515, %s514, 31
        %s517 = smul.addr %s516, 4
        %s518 = scalar_lea.vmem %s2, %s517
        %p519 = pneg %p114
        %p520 = pneg %p111
        %s521 = smul.u32 4, %s33
        %s522 = smul.u32 2, %s34
        %p523 = scmp.lt.s32.totalorder %s521, 7
        %s524 = scalar_select %p523, %s521, 7
        %p525 = scmp.lt.s32.totalorder %s522, 1
        %s526 = scalar_select %p525, %s522, 1
        %s527 = smul.addr %s524, 2
        %s528 = sadd.s32 %s526, %s527
        %s529 = smul.addr %s528, 8
        %s530 = scalar_lea.vmem %s3, %s529
        %p531 = pneg %p142
        %p532 = pneg %p139
        %p533 = pneg %p163
        %p534 = pneg %p160
        %p535 = pneg %p184
        %p536 = pneg %p181
        %p537 = pneg %p205
        %p538 = pneg %p202
        %p539 = pneg %p226
        %p540 = pneg %p223
        %p541 = pneg %p247
        %p542 = pneg %p244
        %p543 = pneg %p268
        %p544 = pneg %p265
        %p545 = pneg %p289
        %p546 = pneg %p286
        %p547 = pneg %p310
        %p548 = pneg %p307
        %p549 = pneg %p331
        %p550 = pneg %p328
        %p551 = pneg %p352
        %p552 = pneg %p349
        %p553 = pneg %p373
        %p554 = pneg %p370
        %p555 = pneg %p399
        %p556 = pneg %p396
        %s557 = sand.u32 %s386, 1
        %s558 = scalar_lea.sflag [#allocation7], %s557
        %s559 = sand.u32 %s386, 1
        %s560 = smul.addr %s559, 128
        %s561 = scalar_lea.vmem [#allocation6], %s560
        %s562 = smul.u32 16, %s33
        %p563 = scmp.lt.s32.totalorder %s562, 31
        %s564 = scalar_select %p563, %s562, 31
        %s565 = smul.addr %s564, 8
        %s566 = scalar_lea.vmem %s0, %s565
        %s567 = smul.u32 16, %s33
        %s568 = smul.u32 2, %s34
        %p569 = scmp.lt.s32.totalorder %s568, 1
        %s570 = scalar_select %p569, %s568, 1
        %s571 = smul.addr %s570, 4
        %s572 = scalar_lea.vmem %s1, %s571
        %s573 = smul.u32 2, %s34
        %s574 = smul.u32 32, %s34
        %p575 = scmp.lt.s32.totalorder %s574, 31
        %s576 = scalar_select %p575, %s574, 31
        %s577 = smul.addr %s576, 4
        %s578 = scalar_lea.vmem %s2, %s577
        %s579 = smul.u32 32, %s34
        %s580 = smul.u32 4, %s33
        %s581 = smul.u32 2, %s34
        %p582 = scmp.lt.s32.totalorder %s580, 7
        %s583 = scalar_select %p582, %s580, 7
        %p584 = scmp.lt.s32.totalorder %s581, 1
        %s585 = scalar_select %p584, %s581, 1
        %s586 = smul.addr %s583, 2
        %s587 = sadd.s32 %s585, %s586
        %s588 = smul.addr %s587, 8
        %s589 = scalar_lea.vmem %s3, %s588
        %s590 = smul.u32 4, %s33
        %s591 = smul.u32 2, %s34
        %s592 = smul.u32 16, %s33
        %p594 = scmp.eq.s32.totalorder %s34, 0
        // Predicated region
        $region81: #{graph_transformer_layer.1} parent=79 // pred_check
          %p595 = pneg %p594
        $region82: #{graph_transformer_layer.1} parent=79 // pred_check_branch
          %597 = sbr.rel (%p595) target = $region84
        $region83: #{graph_transformer_layer.1} parent=79 // pred_region
          %v598 = vld [vmem:[%s566] sm:$0xff]
          %v599 = vld [vmem:[%s566 + $0x8] sm:$0xff]
          %v600 = vld [vmem:[%s566 + $0x10] sm:$0xff]
          %v601 = vld [vmem:[%s566 + $0x18] sm:$0xff]
          %v602 = vld [vmem:[%s566 + $0x20] sm:$0xff]
          %v603 = vld [vmem:[%s566 + $0x28] sm:$0xff]
          %v604 = vld [vmem:[%s566 + $0x30] sm:$0xff]
          %v605 = vld [vmem:[%s566 + $0x38] sm:$0xff]
          %v606 = vld [vmem:[%s566 + $0x40] sm:$0xff]
          %v607 = vld [vmem:[%s566 + $0x48] sm:$0xff]
          %v608 = vld [vmem:[%s566 + $0x50] sm:$0xff]
          %v609 = vld [vmem:[%s566 + $0x58] sm:$0xff]
          %v610 = vld [vmem:[%s566 + $0x60] sm:$0xff]
          %v611 = vld [vmem:[%s566 + $0x68] sm:$0xff]
          %v612 = vld [vmem:[%s566 + $0x70] sm:$0xff]
          %v613 = vld [vmem:[%s566 + $0x78] sm:$0xff]
          %v614 = vpack.c.bf16 %v599, %v598
          %v615 = vpack.c.bf16 %v601, %v600
          %v616 = vpack.c.bf16 %v603, %v602
          %v617 = vpack.c.bf16 %v605, %v604
          %v618 = vpack.c.bf16 %v607, %v606
          %v619 = vpack.c.bf16 %v609, %v608
          %v620 = vpack.c.bf16 %v611, %v610
          %v621 = vpack.c.bf16 %v613, %v612
          %v622 = vld [vmem:[%s4] sm:$0xf]
          %v623 = vld [vmem:[%s4 + $0x4] sm:$0xf]
          %v624 = vld [vmem:[%s4 + $0x8] sm:$0xf]
          %v625 = vld [vmem:[%s4 + $0xc] sm:$0xf]
          %v626 = vld [vmem:[%s4 + $0x10] sm:$0xf]
          %v627 = vld [vmem:[%s4 + $0x14] sm:$0xf]
          %v628 = vld [vmem:[%s4 + $0x18] sm:$0xf]
          %v629 = vld [vmem:[%s4 + $0x1c] sm:$0xf]
          %v630 = vld [vmem:[%s4 + $0x20] sm:$0xf]
          %v631 = vld [vmem:[%s4 + $0x24] sm:$0xf]
          %v632 = vld [vmem:[%s4 + $0x28] sm:$0xf]
          %v633 = vld [vmem:[%s4 + $0x2c] sm:$0xf]
          %v634 = vld [vmem:[%s4 + $0x30] sm:$0xf]
          %v635 = vld [vmem:[%s4 + $0x34] sm:$0xf]
          %v636 = vld [vmem:[%s4 + $0x38] sm:$0xf]
          %v637 = vld [vmem:[%s4 + $0x3c] sm:$0xf]
          %v654 = vunpack.c.l.b16 %v622
          %v655 = vunpack.c.l.b16 %v623
          %v656 = vunpack.c.l.b16 %v624
          %v657 = vunpack.c.l.b16 %v625
          %v658 = vunpack.c.l.b16 %v626
          %v659 = vunpack.c.l.b16 %v627
          %v660 = vunpack.c.l.b16 %v628
          %v661 = vunpack.c.l.b16 %v629
          %v662 = vunpack.c.l.b16 %v630
          %v663 = vunpack.c.l.b16 %v631
          %v664 = vunpack.c.l.b16 %v632
          %v665 = vunpack.c.l.b16 %v633
          %v666 = vunpack.c.l.b16 %v634
          %v667 = vunpack.c.l.b16 %v635
          %v668 = vunpack.c.l.b16 %v636
          %v669 = vunpack.c.l.b16 %v637
          %v670 = vpack.c.b16 %v655, %v654
          %v671 = vpack.c.b16 %v657, %v656
          %v672 = vpack.c.b16 %v659, %v658
          %v673 = vpack.c.b16 %v661, %v660
          %v674 = vpack.c.b16 %v663, %v662
          %v675 = vpack.c.b16 %v665, %v664
          %v676 = vpack.c.b16 %v667, %v666
          %v677 = vpack.c.b16 %v669, %v668
          %686 = vmatprep.subr.bf16.mxu0 0
          %687 = vmatpush1.bf16.msra.mxu0 %v677
          %688 = vmatprep.subr.bf16.mxu0 0
          %689 = vmatpush1.bf16.msra.mxu0 %v676
          %690 = vmatprep.subr.bf16.mxu0 0
          %691 = vmatpush1.bf16.msra.mxu0 %v675
          %692 = vmatprep.subr.bf16.mxu0 0
          %693 = vmatpush1.bf16.msra.mxu0 %v674
          %694 = vmatprep.subr.bf16.mxu0 0
          %695 = vmatpush1.bf16.msra.mxu0 %v673
          %696 = vmatprep.subr.bf16.mxu0 0
          %697 = vmatpush1.bf16.msra.mxu0 %v672
          %698 = vmatprep.subr.bf16.mxu0 0
          %699 = vmatpush1.bf16.msra.mxu0 %v671
          %700 = vmatprep.subr.bf16.mxu0 0
          %701 = vmatpush1.bf16.msra.mxu0 %v670
          %702 = vmatprep.subr.bf16.mxu0 0
          %703 = vmatpush2.bf16.msra.mxu0 0
          %704 = vmatprep.subr.bf16.mxu0 0
          %705 = vmatpush2.bf16.msra.mxu0 0
          %706 = vmatprep.subr.bf16.mxu0 0
          %707 = vmatpush2.bf16.msra.mxu0 0
          %708 = vmatprep.subr.bf16.mxu0 0
          %709 = vmatpush2.bf16.msra.mxu0 0
          %710 = vmatprep.subr.bf16.mxu0 0
          %711 = vmatpush2.bf16.msra.mxu0 0
          %712 = vmatprep.subr.bf16.mxu0 0
          %713 = vmatpush2.bf16.msra.mxu0 0
          %714 = vmatprep.subr.bf16.mxu0 0
          %715 = vmatpush2.bf16.msra.mxu0 0
          %716 = vmatprep.subr.bf16.mxu0 0
          %717 = vmatpush2.bf16.msra.mxu0 0
          %718 = vmatprep.mubr.bf16.mxu0 0
          %719 = vmatmul.mubr.bf16.gmra.mxu0 %v614
          %v720 = vpop.f32.mrf.mxu0
          %v721 = vadd.f32 0.0, %v720
          %v722 = vpop.f32.mrf.mxu0
          %v723 = vpop.f32.mrf.mxu0
          %v724 = vadd.f32 0.0, %v723
          %v725 = vpop.f32.mrf.mxu0
          %726 = vmatprep.mubr.bf16.mxu0 0
          %727 = vmatmul.mubr.bf16.gmra.mxu0 %v615
          %v728 = vpop.f32.mrf.mxu0
          %v729 = vadd.f32 0.0, %v728
          %v730 = vpop.f32.mrf.mxu0
          %v731 = vpop.f32.mrf.mxu0
          %v732 = vadd.f32 0.0, %v731
          %v733 = vpop.f32.mrf.mxu0
          %734 = vmatprep.mubr.bf16.mxu0 0
          %735 = vmatmul.mubr.bf16.gmra.mxu0 %v616
          %v736 = vpop.f32.mrf.mxu0
          %v737 = vadd.f32 0.0, %v736
          %v738 = vpop.f32.mrf.mxu0
          %v739 = vpop.f32.mrf.mxu0
          %v740 = vadd.f32 0.0, %v739
          %v741 = vpop.f32.mrf.mxu0
          %742 = vmatprep.mubr.bf16.mxu0 0
          %743 = vmatmul.mubr.bf16.gmra.mxu0 %v617
          %v744 = vpop.f32.mrf.mxu0
          %v745 = vadd.f32 0.0, %v744
          %v746 = vpop.f32.mrf.mxu0
          %v747 = vpop.f32.mrf.mxu0
          %v748 = vadd.f32 0.0, %v747
          %v749 = vpop.f32.mrf.mxu0
          %750 = vmatprep.mubr.bf16.mxu0 0
          %751 = vmatmul.mubr.bf16.gmra.mxu0 %v618
          %v752 = vpop.f32.mrf.mxu0
          %v753 = vadd.f32 0.0, %v752
          %v754 = vpop.f32.mrf.mxu0
          %v755 = vpop.f32.mrf.mxu0
          %v756 = vadd.f32 0.0, %v755
          %v757 = vpop.f32.mrf.mxu0
          %758 = vmatprep.mubr.bf16.mxu0 0
          %759 = vmatmul.mubr.bf16.gmra.mxu0 %v619
          %v760 = vpop.f32.mrf.mxu0
          %v761 = vadd.f32 0.0, %v760
          %v762 = vpop.f32.mrf.mxu0
          %v763 = vpop.f32.mrf.mxu0
          %v764 = vadd.f32 0.0, %v763
          %v765 = vpop.f32.mrf.mxu0
          %766 = vmatprep.mubr.bf16.mxu0 0
          %767 = vmatmul.mubr.bf16.gmra.mxu0 %v620
          %v768 = vpop.f32.mrf.mxu0
          %v769 = vadd.f32 0.0, %v768
          %v770 = vpop.f32.mrf.mxu0
          %v771 = vpop.f32.mrf.mxu0
          %v772 = vadd.f32 0.0, %v771
          %v773 = vpop.f32.mrf.mxu0
          %774 = vmatprep.mubr.bf16.mxu0 0
          %775 = vmatmul.mubr.bf16.gmra.mxu0 %v621
          %v776 = vpop.f32.mrf.mxu0
          %v777 = vadd.f32 0.0, %v776
          %v778 = vpop.f32.mrf.mxu0
          %v779 = vpop.f32.mrf.mxu0
          %v780 = vadd.f32 0.0, %v779
          %v781 = vpop.f32.mrf.mxu0
          %782 = vdwg.mxu0
          %v783 = vpack.c.bf16 %v724, %v721
          %v784 = vpack.c.bf16 %v732, %v729
          %v785 = vpack.c.bf16 %v740, %v737
          %v786 = vpack.c.bf16 %v748, %v745
          %v787 = vpack.c.bf16 %v756, %v753
          %v788 = vpack.c.bf16 %v764, %v761
          %v789 = vpack.c.bf16 %v772, %v769
          %v790 = vpack.c.bf16 %v780, %v777
          %v799 = vunpack.c.l.b16 %v783
          %v800 = vunpack.c.h.b16 %v783
          %v801 = vunpack.c.l.b16 %v784
          %v802 = vunpack.c.h.b16 %v784
          %v803 = vunpack.c.l.b16 %v785
          %v804 = vunpack.c.h.b16 %v785
          %v805 = vunpack.c.l.b16 %v786
          %v806 = vunpack.c.h.b16 %v786
          %v807 = vunpack.c.l.b16 %v787
          %v808 = vunpack.c.h.b16 %v787
          %v809 = vunpack.c.l.b16 %v788
          %v810 = vunpack.c.h.b16 %v788
          %v811 = vunpack.c.l.b16 %v789
          %v812 = vunpack.c.h.b16 %v789
          %v813 = vunpack.c.l.b16 %v790
          %v814 = vunpack.c.h.b16 %v790
          %v815 = vpack.c.b16 %v799, %v799
          %v816 = vpack.c.b16 %v800, %v800
          %v817 = vpack.c.b16 %v801, %v801
          %v818 = vpack.c.b16 %v802, %v802
          %v819 = vpack.c.b16 %v803, %v803
          %v820 = vpack.c.b16 %v804, %v804
          %v821 = vpack.c.b16 %v805, %v805
          %v822 = vpack.c.b16 %v806, %v806
          %v823 = vpack.c.b16 %v807, %v807
          %v824 = vpack.c.b16 %v808, %v808
          %v825 = vpack.c.b16 %v809, %v809
          %v826 = vpack.c.b16 %v810, %v810
          %v827 = vpack.c.b16 %v811, %v811
          %v828 = vpack.c.b16 %v812, %v812
          %v829 = vpack.c.b16 %v813, %v813
          %v830 = vpack.c.b16 %v814, %v814
          %847 = vst [vmem:[#allocation2] sm:$0xf] %v815
          %848 = vst [vmem:[#allocation2 + $0x4] sm:$0xf] %v816
          %849 = vst [vmem:[#allocation2 + $0x8] sm:$0xf] %v817
          %850 = vst [vmem:[#allocation2 + $0xc] sm:$0xf] %v818
          %851 = vst [vmem:[#allocation2 + $0x10] sm:$0xf] %v819
          %852 = vst [vmem:[#allocation2 + $0x14] sm:$0xf] %v820
          %853 = vst [vmem:[#allocation2 + $0x18] sm:$0xf] %v821
          %854 = vst [vmem:[#allocation2 + $0x1c] sm:$0xf] %v822
          %855 = vst [vmem:[#allocation2 + $0x20] sm:$0xf] %v823
          %856 = vst [vmem:[#allocation2 + $0x24] sm:$0xf] %v824
          %857 = vst [vmem:[#allocation2 + $0x28] sm:$0xf] %v825
          %858 = vst [vmem:[#allocation2 + $0x2c] sm:$0xf] %v826
          %859 = vst [vmem:[#allocation2 + $0x30] sm:$0xf] %v827
          %860 = vst [vmem:[#allocation2 + $0x34] sm:$0xf] %v828
          %861 = vst [vmem:[#allocation2 + $0x38] sm:$0xf] %v829
          %862 = vst [vmem:[#allocation2 + $0x3c] sm:$0xf] %v830
          %v863 = vld [vmem:[%s6] sm:$0xf]
          %v864 = vld [vmem:[%s6 + $0x4] sm:$0xf]
          %v865 = vld [vmem:[%s6 + $0x8] sm:$0xf]
          %v866 = vld [vmem:[%s6 + $0xc] sm:$0xf]
          %v867 = vld [vmem:[%s6 + $0x10] sm:$0xf]
          %v868 = vld [vmem:[%s6 + $0x14] sm:$0xf]
          %v869 = vld [vmem:[%s6 + $0x18] sm:$0xf]
          %v870 = vld [vmem:[%s6 + $0x1c] sm:$0xf]
          %v871 = vld [vmem:[%s6 + $0x20] sm:$0xf]
          %v872 = vld [vmem:[%s6 + $0x24] sm:$0xf]
          %v873 = vld [vmem:[%s6 + $0x28] sm:$0xf]
          %v874 = vld [vmem:[%s6 + $0x2c] sm:$0xf]
          %v875 = vld [vmem:[%s6 + $0x30] sm:$0xf]
          %v876 = vld [vmem:[%s6 + $0x34] sm:$0xf]
          %v877 = vld [vmem:[%s6 + $0x38] sm:$0xf]
          %v878 = vld [vmem:[%s6 + $0x3c] sm:$0xf]
          %v895 = vunpack.c.l.b16 %v863
          %v896 = vunpack.c.l.b16 %v864
          %v897 = vunpack.c.l.b16 %v865
          %v898 = vunpack.c.l.b16 %v866
          %v899 = vunpack.c.l.b16 %v867
          %v900 = vunpack.c.l.b16 %v868
          %v901 = vunpack.c.l.b16 %v869
          %v902 = vunpack.c.l.b16 %v870
          %v903 = vunpack.c.l.b16 %v871
          %v904 = vunpack.c.l.b16 %v872
          %v905 = vunpack.c.l.b16 %v873
          %v906 = vunpack.c.l.b16 %v874
          %v907 = vunpack.c.l.b16 %v875
          %v908 = vunpack.c.l.b16 %v876
          %v909 = vunpack.c.l.b16 %v877
          %v910 = vunpack.c.l.b16 %v878
          %v911 = vpack.c.b16 %v896, %v895
          %v912 = vpack.c.b16 %v898, %v897
          %v913 = vpack.c.b16 %v900, %v899
          %v914 = vpack.c.b16 %v902, %v901
          %v915 = vpack.c.b16 %v904, %v903
          %v916 = vpack.c.b16 %v906, %v905
          %v917 = vpack.c.b16 %v908, %v907
          %v918 = vpack.c.b16 %v910, %v909
          %927 = vmatprep.subr.bf16.mxu0 0
          %928 = vmatpush1.bf16.msra.mxu0 %v918
          %929 = vmatprep.subr.bf16.mxu0 0
          %930 = vmatpush1.bf16.msra.mxu0 %v917
          %931 = vmatprep.subr.bf16.mxu0 0
          %932 = vmatpush1.bf16.msra.mxu0 %v916
          %933 = vmatprep.subr.bf16.mxu0 0
          %934 = vmatpush1.bf16.msra.mxu0 %v915
          %935 = vmatprep.subr.bf16.mxu0 0
          %936 = vmatpush1.bf16.msra.mxu0 %v914
          %937 = vmatprep.subr.bf16.mxu0 0
          %938 = vmatpush1.bf16.msra.mxu0 %v913
          %939 = vmatprep.subr.bf16.mxu0 0
          %940 = vmatpush1.bf16.msra.mxu0 %v912
          %941 = vmatprep.subr.bf16.mxu0 0
          %942 = vmatpush1.bf16.msra.mxu0 %v911
          %943 = vmatprep.subr.bf16.mxu0 0
          %944 = vmatpush2.bf16.msra.mxu0 0
          %945 = vmatprep.subr.bf16.mxu0 0
          %946 = vmatpush2.bf16.msra.mxu0 0
          %947 = vmatprep.subr.bf16.mxu0 0
          %948 = vmatpush2.bf16.msra.mxu0 0
          %949 = vmatprep.subr.bf16.mxu0 0
          %950 = vmatpush2.bf16.msra.mxu0 0
          %951 = vmatprep.subr.bf16.mxu0 0
          %952 = vmatpush2.bf16.msra.mxu0 0
          %953 = vmatprep.subr.bf16.mxu0 0
          %954 = vmatpush2.bf16.msra.mxu0 0
          %955 = vmatprep.subr.bf16.mxu0 0
          %956 = vmatpush2.bf16.msra.mxu0 0
          %957 = vmatprep.subr.bf16.mxu0 0
          %958 = vmatpush2.bf16.msra.mxu0 0
          %959 = vmatprep.mubr.bf16.mxu0 0
          %960 = vmatmul.mubr.bf16.gmra.mxu0 %v614
          %v961 = vpop.f32.mrf.mxu0
          %v962 = vadd.f32 0.0, %v961
          %v963 = vpop.f32.mrf.mxu0
          %v964 = vpop.f32.mrf.mxu0
          %v965 = vadd.f32 0.0, %v964
          %v966 = vpop.f32.mrf.mxu0
          %967 = vmatprep.mubr.bf16.mxu0 0
          %968 = vmatmul.mubr.bf16.gmra.mxu0 %v615
          %v969 = vpop.f32.mrf.mxu0
          %v970 = vadd.f32 0.0, %v969
          %v971 = vpop.f32.mrf.mxu0
          %v972 = vpop.f32.mrf.mxu0
          %v973 = vadd.f32 0.0, %v972
          %v974 = vpop.f32.mrf.mxu0
          %975 = vmatprep.mubr.bf16.mxu0 0
          %976 = vmatmul.mubr.bf16.gmra.mxu0 %v616
          %v977 = vpop.f32.mrf.mxu0
          %v978 = vadd.f32 0.0, %v977
          %v979 = vpop.f32.mrf.mxu0
          %v980 = vpop.f32.mrf.mxu0
          %v981 = vadd.f32 0.0, %v980
          %v982 = vpop.f32.mrf.mxu0
          %983 = vmatprep.mubr.bf16.mxu0 0
          %984 = vmatmul.mubr.bf16.gmra.mxu0 %v617
          %v985 = vpop.f32.mrf.mxu0
          %v986 = vadd.f32 0.0, %v985
          %v987 = vpop.f32.mrf.mxu0
          %v988 = vpop.f32.mrf.mxu0
          %v989 = vadd.f32 0.0, %v988
          %v990 = vpop.f32.mrf.mxu0
          %991 = vmatprep.mubr.bf16.mxu0 0
          %992 = vmatmul.mubr.bf16.gmra.mxu0 %v618
          %v993 = vpop.f32.mrf.mxu0
          %v994 = vadd.f32 0.0, %v993
          %v995 = vpop.f32.mrf.mxu0
          %v996 = vpop.f32.mrf.mxu0
          %v997 = vadd.f32 0.0, %v996
          %v998 = vpop.f32.mrf.mxu0
          %999 = vmatprep.mubr.bf16.mxu0 0
          %1000 = vmatmul.mubr.bf16.gmra.mxu0 %v619
          %v1001 = vpop.f32.mrf.mxu0
          %v1002 = vadd.f32 0.0, %v1001
          %v1003 = vpop.f32.mrf.mxu0
          %v1004 = vpop.f32.mrf.mxu0
          %v1005 = vadd.f32 0.0, %v1004
          %v1006 = vpop.f32.mrf.mxu0
          %1007 = vmatprep.mubr.bf16.mxu0 0
          %1008 = vmatmul.mubr.bf16.gmra.mxu0 %v620
          %v1009 = vpop.f32.mrf.mxu0
          %v1010 = vadd.f32 0.0, %v1009
          %v1011 = vpop.f32.mrf.mxu0
          %v1012 = vpop.f32.mrf.mxu0
          %v1013 = vadd.f32 0.0, %v1012
          %v1014 = vpop.f32.mrf.mxu0
          %1015 = vmatprep.mubr.bf16.mxu0 0
          %1016 = vmatmul.mubr.bf16.gmra.mxu0 %v621
          %v1017 = vpop.f32.mrf.mxu0
          %v1018 = vadd.f32 0.0, %v1017
          %v1019 = vpop.f32.mrf.mxu0
          %v1020 = vpop.f32.mrf.mxu0
          %v1021 = vadd.f32 0.0, %v1020
          %v1022 = vpop.f32.mrf.mxu0
          %1023 = vdwg.mxu0
          %1024 = vst [vmem:[#allocation3] sm:$0xff] %v962
          %1025 = vst [vmem:[#allocation3 + $0x8] sm:$0xff] %v965
          %1026 = vst [vmem:[#allocation3 + $0x10] sm:$0xff] %v970
          %1027 = vst [vmem:[#allocation3 + $0x18] sm:$0xff] %v973
          %1028 = vst [vmem:[#allocation3 + $0x20] sm:$0xff] %v978
          %1029 = vst [vmem:[#allocation3 + $0x28] sm:$0xff] %v981
          %1030 = vst [vmem:[#allocation3 + $0x30] sm:$0xff] %v986
          %1031 = vst [vmem:[#allocation3 + $0x38] sm:$0xff] %v989
          %1032 = vst [vmem:[#allocation3 + $0x40] sm:$0xff] %v994
          %1033 = vst [vmem:[#allocation3 + $0x48] sm:$0xff] %v997
          %1034 = vst [vmem:[#allocation3 + $0x50] sm:$0xff] %v1002
          %1035 = vst [vmem:[#allocation3 + $0x58] sm:$0xff] %v1005
          %1036 = vst [vmem:[#allocation3 + $0x60] sm:$0xff] %v1010
          %1037 = vst [vmem:[#allocation3 + $0x68] sm:$0xff] %v1013
          %1038 = vst [vmem:[#allocation3 + $0x70] sm:$0xff] %v1018
          %1039 = vst [vmem:[#allocation3 + $0x78] sm:$0xff] %v1021
          %vm1040 = vcmask 31744
          %1041 = vst.msk [vmem:[#allocation4] sm:$0xff] %vm1040, 0.0
          %1042 = vst.msk [vmem:[#allocation4 + $0x8] sm:$0xff] %vm1040, 0.0
          %1043 = vst.msk [vmem:[#allocation4 + $0x10] sm:$0xff] %vm1040, 0.0
          %1044 = vst.msk [vmem:[#allocation4 + $0x18] sm:$0xff] %vm1040, 0.0
          %1045 = vst.msk [vmem:[#allocation4 + $0x20] sm:$0xff] %vm1040, 0.0
          %1046 = vst.msk [vmem:[#allocation4 + $0x28] sm:$0xff] %vm1040, 0.0
          %1047 = vst.msk [vmem:[#allocation4 + $0x30] sm:$0xff] %vm1040, 0.0
          %1048 = vst.msk [vmem:[#allocation4 + $0x38] sm:$0xff] %vm1040, 0.0
          %1049 = vst.msk [vmem:[#allocation4 + $0x40] sm:$0xff] %vm1040, 0.0
          %1050 = vst.msk [vmem:[#allocation4 + $0x48] sm:$0xff] %vm1040, 0.0
          %1051 = vst.msk [vmem:[#allocation4 + $0x50] sm:$0xff] %vm1040, 0.0
          %1052 = vst.msk [vmem:[#allocation4 + $0x58] sm:$0xff] %vm1040, 0.0
          %1053 = vst.msk [vmem:[#allocation4 + $0x60] sm:$0xff] %vm1040, 0.0
          %1054 = vst.msk [vmem:[#allocation4 + $0x68] sm:$0xff] %vm1040, 0.0
          %1055 = vst.msk [vmem:[#allocation4 + $0x70] sm:$0xff] %vm1040, 0.0
          %1056 = vst.msk [vmem:[#allocation4 + $0x78] sm:$0xff] %vm1040, 0.0
          %1057 = vst [vmem:[#allocation5] sm:$0xff] 0.0
          %1058 = vst [vmem:[#allocation5 + $0x8] sm:$0xff] 0.0
          %1059 = vst [vmem:[#allocation5 + $0x10] sm:$0xff] 0.0
          %1060 = vst [vmem:[#allocation5 + $0x18] sm:$0xff] 0.0
          %1061 = vst [vmem:[#allocation5 + $0x20] sm:$0xff] 0.0
          %1062 = vst [vmem:[#allocation5 + $0x28] sm:$0xff] 0.0
          %1063 = vst [vmem:[#allocation5 + $0x30] sm:$0xff] 0.0
          %1064 = vst [vmem:[#allocation5 + $0x38] sm:$0xff] 0.0
          %1065 = vst [vmem:[#allocation5 + $0x40] sm:$0xff] 0.0
          %1066 = vst [vmem:[#allocation5 + $0x48] sm:$0xff] 0.0
          %1067 = vst [vmem:[#allocation5 + $0x50] sm:$0xff] 0.0
          %1068 = vst [vmem:[#allocation5 + $0x58] sm:$0xff] 0.0
          %1069 = vst [vmem:[#allocation5 + $0x60] sm:$0xff] 0.0
          %1070 = vst [vmem:[#allocation5 + $0x68] sm:$0xff] 0.0
          %1071 = vst [vmem:[#allocation5 + $0x70] sm:$0xff] 0.0
          %1072 = vst [vmem:[#allocation5 + $0x78] sm:$0xff] 0.0
        $region84: #{graph_transformer_layer.1} parent=79 // pred_fallthru
          _
        %v1073 = vld [vmem:[#allocation2] sm:$0xf]
        %v1074 = vld [vmem:[#allocation2 + $0x4] sm:$0xf]
        %v1075 = vld [vmem:[#allocation2 + $0x8] sm:$0xf]
        %v1076 = vld [vmem:[#allocation2 + $0xc] sm:$0xf]
        %v1077 = vld [vmem:[#allocation2 + $0x10] sm:$0xf]
        %v1078 = vld [vmem:[#allocation2 + $0x14] sm:$0xf]
        %v1079 = vld [vmem:[#allocation2 + $0x18] sm:$0xf]
        %v1080 = vld [vmem:[#allocation2 + $0x1c] sm:$0xf]
        %v1081 = vld [vmem:[#allocation2 + $0x20] sm:$0xf]
        %v1082 = vld [vmem:[#allocation2 + $0x24] sm:$0xf]
        %v1083 = vld [vmem:[#allocation2 + $0x28] sm:$0xf]
        %v1084 = vld [vmem:[#allocation2 + $0x2c] sm:$0xf]
        %v1085 = vld [vmem:[#allocation2 + $0x30] sm:$0xf]
        %v1086 = vld [vmem:[#allocation2 + $0x34] sm:$0xf]
        %v1087 = vld [vmem:[#allocation2 + $0x38] sm:$0xf]
        %v1088 = vld [vmem:[#allocation2 + $0x3c] sm:$0xf]
        %v1089 = vld [vmem:[%s589] sm:$0xff]
        %v1090 = vld [vmem:[%s589 + $0x8] sm:$0xff]
        %v1091 = vld [vmem:[%s589 + $0x10] sm:$0xff]
        %v1092 = vld [vmem:[%s589 + $0x18] sm:$0xff]
        %v1093 = vld [vmem:[%s589 + $0x20] sm:$0xff]
        %v1094 = vld [vmem:[%s589 + $0x28] sm:$0xff]
        %v1095 = vld [vmem:[%s589 + $0x30] sm:$0xff]
        %v1096 = vld [vmem:[%s589 + $0x38] sm:$0xff]
        %v1097 = vunpack.c.0.s8 %v1089
        %v1098 = vunpack.c.0.s8 %v1090
        %v1099 = vunpack.c.1.s8 %v1089
        %v1100 = vunpack.c.1.s8 %v1090
        %v1101 = vunpack.c.2.s8 %v1089
        %v1102 = vunpack.c.2.s8 %v1090
        %v1103 = vunpack.c.3.s8 %v1089
        %v1104 = vunpack.c.3.s8 %v1090
        %v1105 = vunpack.c.0.s8 %v1091
        %v1106 = vunpack.c.0.s8 %v1092
        %v1107 = vunpack.c.1.s8 %v1091
        %v1108 = vunpack.c.1.s8 %v1092
        %v1109 = vunpack.c.2.s8 %v1091
        %v1110 = vunpack.c.2.s8 %v1092
        %v1111 = vunpack.c.3.s8 %v1091
        %v1112 = vunpack.c.3.s8 %v1092
        %v1113 = vunpack.c.0.s8 %v1093
        %v1114 = vunpack.c.0.s8 %v1094
        %v1115 = vunpack.c.1.s8 %v1093
        %v1116 = vunpack.c.1.s8 %v1094
        %v1117 = vunpack.c.2.s8 %v1093
        %v1118 = vunpack.c.2.s8 %v1094
        %v1119 = vunpack.c.3.s8 %v1093
        %v1120 = vunpack.c.3.s8 %v1094
        %v1121 = vunpack.c.0.s8 %v1095
        %v1122 = vunpack.c.0.s8 %v1096
        %v1123 = vunpack.c.1.s8 %v1095
        %v1124 = vunpack.c.1.s8 %v1096
        %v1125 = vunpack.c.2.s8 %v1095
        %v1126 = vunpack.c.2.s8 %v1096
        %v1127 = vunpack.c.3.s8 %v1095
        %v1128 = vunpack.c.3.s8 %v1096
        %v1129 = vcvt.s32.f32 %v1097
        %v1130 = vcvt.s32.f32 %v1098
        %v1131 = vcvt.s32.f32 %v1099
        %v1132 = vcvt.s32.f32 %v1100
        %v1133 = vcvt.s32.f32 %v1101
        %v1134 = vcvt.s32.f32 %v1102
        %v1135 = vcvt.s32.f32 %v1103
        %v1136 = vcvt.s32.f32 %v1104
        %v1137 = vcvt.s32.f32 %v1105
        %v1138 = vcvt.s32.f32 %v1106
        %v1139 = vcvt.s32.f32 %v1107
        %v1140 = vcvt.s32.f32 %v1108
        %v1141 = vcvt.s32.f32 %v1109
        %v1142 = vcvt.s32.f32 %v1110
        %v1143 = vcvt.s32.f32 %v1111
        %v1144 = vcvt.s32.f32 %v1112
        %v1145 = vcvt.s32.f32 %v1113
        %v1146 = vcvt.s32.f32 %v1114
        %v1147 = vcvt.s32.f32 %v1115
        %v1148 = vcvt.s32.f32 %v1116
        %v1149 = vcvt.s32.f32 %v1117
        %v1150 = vcvt.s32.f32 %v1118
        %v1151 = vcvt.s32.f32 %v1119
        %v1152 = vcvt.s32.f32 %v1120
        %v1153 = vcvt.s32.f32 %v1121
        %v1154 = vcvt.s32.f32 %v1122
        %v1155 = vcvt.s32.f32 %v1123
        %v1156 = vcvt.s32.f32 %v1124
        %v1157 = vcvt.s32.f32 %v1125
        %v1158 = vcvt.s32.f32 %v1126
        %v1159 = vcvt.s32.f32 %v1127
        %v1160 = vcvt.s32.f32 %v1128
        %v1161 = vld [vmem:[%s572] sm:$0xff]
        %v1162 = vld [vmem:[%s572 + $0x8] sm:$0xff]
        %v1163 = vld [vmem:[%s572 + $0x10] sm:$0xff]
        %v1164 = vld [vmem:[%s572 + $0x18] sm:$0xff]
        %v1181 = vunpack.c.l.b16 %v1073
        %v1182 = vunpack.c.l.b16 %v1074
        %v1183 = vunpack.c.l.b16 %v1075
        %v1184 = vunpack.c.l.b16 %v1076
        %v1185 = vunpack.c.l.b16 %v1077
        %v1186 = vunpack.c.l.b16 %v1078
        %v1187 = vunpack.c.l.b16 %v1079
        %v1188 = vunpack.c.l.b16 %v1080
        %v1189 = vunpack.c.l.b16 %v1081
        %v1190 = vunpack.c.l.b16 %v1082
        %v1191 = vunpack.c.l.b16 %v1083
        %v1192 = vunpack.c.l.b16 %v1084
        %v1193 = vunpack.c.l.b16 %v1085
        %v1194 = vunpack.c.l.b16 %v1086
        %v1195 = vunpack.c.l.b16 %v1087
        %v1196 = vunpack.c.l.b16 %v1088
        %v1197 = vpack.c.b16 %v1182, %v1181
        %v1198 = vpack.c.b16 %v1184, %v1183
        %v1199 = vpack.c.b16 %v1186, %v1185
        %v1200 = vpack.c.b16 %v1188, %v1187
        %v1201 = vpack.c.b16 %v1190, %v1189
        %v1202 = vpack.c.b16 %v1192, %v1191
        %v1203 = vpack.c.b16 %v1194, %v1193
        %v1204 = vpack.c.b16 %v1196, %v1195
        %v1209 = vunpack.c.l.b16 %v1161
        %v1210 = vunpack.c.h.b16 %v1161
        %v1211 = vunpack.c.l.b16 %v1162
        %v1212 = vunpack.c.h.b16 %v1162
        %v1213 = vunpack.c.l.b16 %v1163
        %v1214 = vunpack.c.h.b16 %v1163
        %v1215 = vunpack.c.l.b16 %v1164
        %v1216 = vunpack.c.h.b16 %v1164
        %v1217 = vpack.c.b16 %v1211, %v1209
        %v1218 = vpack.c.b16 %v1212, %v1210
        %v1219 = vpack.c.b16 %v1215, %v1213
        %v1220 = vpack.c.b16 %v1216, %v1214
        %vm1225 = vcmask 261120
        %v1227 = vsel %vm1225, %v1197, 0
        %v1230 = vsel %vm1225, %v1198, 0
        %v1233 = vsel %vm1225, %v1199, 0
        %v1236 = vsel %vm1225, %v1200, 0
        %v1239 = vsel %vm1225, %v1201, 0
        %v1242 = vsel %vm1225, %v1202, 0
        %v1245 = vsel %vm1225, %v1203, 0
        %v1248 = vsel %vm1225, %v1204, 0
        %1250 = vmatprep.subr.bf16.mxu0 0
        %1251 = vmatpush1.bf16.msra.mxu0 0
        %1252 = vmatprep.subr.bf16.mxu0 0
        %1253 = vmatpush1.bf16.msra.mxu0 0
        %1254 = vmatprep.subr.bf16.mxu0 0
        %1255 = vmatpush1.bf16.msra.mxu0 0
        %1256 = vmatprep.subr.bf16.mxu0 0
        %1257 = vmatpush1.bf16.msra.mxu0 0
        %1258 = vmatprep.subr.bf16.mxu0 0
        %1259 = vmatpush1.bf16.msra.mxu0 0
        %1260 = vmatprep.subr.bf16.mxu0 0
        %1261 = vmatpush1.bf16.msra.mxu0 0
        %1262 = vmatprep.subr.bf16.mxu0 %v1220
        %1263 = vmatpush1.bf16.msra.mxu0 %v1219
        %1264 = vmatprep.subr.bf16.mxu0 %v1218
        %1265 = vmatpush1.bf16.msra.mxu0 %v1217
        %1266 = vmatprep.subr.bf16.mxu0 0
        %1267 = vmatpush2.bf16.msra.mxu0 0
        %1268 = vmatprep.subr.bf16.mxu0 0
        %1269 = vmatpush2.bf16.msra.mxu0 0
        %1270 = vmatprep.subr.bf16.mxu0 0
        %1271 = vmatpush2.bf16.msra.mxu0 0
        %1272 = vmatprep.subr.bf16.mxu0 0
        %1273 = vmatpush2.bf16.msra.mxu0 0
        %1274 = vmatprep.subr.bf16.mxu0 0
        %1275 = vmatpush2.bf16.msra.mxu0 0
        %1276 = vmatprep.subr.bf16.mxu0 0
        %1277 = vmatpush2.bf16.msra.mxu0 0
        %1278 = vmatprep.subr.bf16.mxu0 0
        %1279 = vmatpush2.bf16.msra.mxu0 0
        %1280 = vmatprep.subr.bf16.mxu0 0
        %1281 = vmatpush2.bf16.msra.mxu0 0
        %1282 = vmatprep.mubr.bf16.mxu0 0
        %1283 = vmatmul.mubr.bf16.gmra.mxu0 %v1227
        %v1284 = vpop.f32.mrf.mxu0
        %v1285 = vadd.f32 0.0, %v1284
        %v1286 = vpop.f32.mrf.mxu0
        %v1287 = vadd.f32 0.0, %v1286
        %v1288 = vpop.f32.mrf.mxu0
        %v1289 = vadd.f32 0.0, %v1288
        %v1290 = vpop.f32.mrf.mxu0
        %v1291 = vadd.f32 0.0, %v1290
        %1292 = vmatprep.mubr.bf16.mxu0 0
        %1293 = vmatmul.mubr.bf16.gmra.mxu0 %v1230
        %v1294 = vpop.f32.mrf.mxu0
        %v1295 = vadd.f32 0.0, %v1294
        %v1296 = vpop.f32.mrf.mxu0
        %v1297 = vadd.f32 0.0, %v1296
        %v1298 = vpop.f32.mrf.mxu0
        %v1299 = vadd.f32 0.0, %v1298
        %v1300 = vpop.f32.mrf.mxu0
        %v1301 = vadd.f32 0.0, %v1300
        %1302 = vmatprep.mubr.bf16.mxu0 0
        %1303 = vmatmul.mubr.bf16.gmra.mxu0 %v1233
        %v1304 = vpop.f32.mrf.mxu0
        %v1305 = vadd.f32 0.0, %v1304
        %v1306 = vpop.f32.mrf.mxu0
        %v1307 = vadd.f32 0.0, %v1306
        %v1308 = vpop.f32.mrf.mxu0
        %v1309 = vadd.f32 0.0, %v1308
        %v1310 = vpop.f32.mrf.mxu0
        %v1311 = vadd.f32 0.0, %v1310
        %1312 = vmatprep.mubr.bf16.mxu0 0
        %1313 = vmatmul.mubr.bf16.gmra.mxu0 %v1236
        %v1314 = vpop.f32.mrf.mxu0
        %v1315 = vadd.f32 0.0, %v1314
        %v1316 = vpop.f32.mrf.mxu0
        %v1317 = vadd.f32 0.0, %v1316
        %v1318 = vpop.f32.mrf.mxu0
        %v1319 = vadd.f32 0.0, %v1318
        %v1320 = vpop.f32.mrf.mxu0
        %v1321 = vadd.f32 0.0, %v1320
        %1322 = vmatprep.mubr.bf16.mxu0 0
        %1323 = vmatmul.mubr.bf16.gmra.mxu0 %v1239
        %v1324 = vpop.f32.mrf.mxu0
        %v1325 = vadd.f32 0.0, %v1324
        %v1326 = vpop.f32.mrf.mxu0
        %v1327 = vadd.f32 0.0, %v1326
        %v1328 = vpop.f32.mrf.mxu0
        %v1329 = vadd.f32 0.0, %v1328
        %v1330 = vpop.f32.mrf.mxu0
        %v1331 = vadd.f32 0.0, %v1330
        %1332 = vmatprep.mubr.bf16.mxu0 0
        %1333 = vmatmul.mubr.bf16.gmra.mxu0 %v1242
        %v1334 = vpop.f32.mrf.mxu0
        %v1335 = vadd.f32 0.0, %v1334
        %v1336 = vpop.f32.mrf.mxu0
        %v1337 = vadd.f32 0.0, %v1336
        %v1338 = vpop.f32.mrf.mxu0
        %v1339 = vadd.f32 0.0, %v1338
        %v1340 = vpop.f32.mrf.mxu0
        %v1341 = vadd.f32 0.0, %v1340
        %1342 = vmatprep.mubr.bf16.mxu0 0
        %1343 = vmatmul.mubr.bf16.gmra.mxu0 %v1245
        %v1344 = vpop.f32.mrf.mxu0
        %v1345 = vadd.f32 0.0, %v1344
        %v1346 = vpop.f32.mrf.mxu0
        %v1347 = vadd.f32 0.0, %v1346
        %v1348 = vpop.f32.mrf.mxu0
        %v1349 = vadd.f32 0.0, %v1348
        %v1350 = vpop.f32.mrf.mxu0
        %v1351 = vadd.f32 0.0, %v1350
        %1352 = vmatprep.mubr.bf16.mxu0 0
        %1353 = vmatmul.mubr.bf16.gmra.mxu0 %v1248
        %v1354 = vpop.f32.mrf.mxu0
        %v1355 = vadd.f32 0.0, %v1354
        %v1356 = vpop.f32.mrf.mxu0
        %v1357 = vadd.f32 0.0, %v1356
        %v1358 = vpop.f32.mrf.mxu0
        %v1359 = vadd.f32 0.0, %v1358
        %v1360 = vpop.f32.mrf.mxu0
        %v1361 = vadd.f32 0.0, %v1360
        %1362 = vdwg.mxu0
        %v1363 = vmax.f32 %v1285, -28.284271
        %v1364 = vmax.f32 %v1287, -28.284271
        %v1365 = vmax.f32 %v1289, -28.284271
        %v1366 = vmax.f32 %v1291, -28.284271
        %v1367 = vmax.f32 %v1295, -28.284271
        %v1368 = vmax.f32 %v1297, -28.284271
        %v1369 = vmax.f32 %v1299, -28.284271
        %v1370 = vmax.f32 %v1301, -28.284271
        %v1371 = vmax.f32 %v1305, -28.284271
        %v1372 = vmax.f32 %v1307, -28.284271
        %v1373 = vmax.f32 %v1309, -28.284271
        %v1374 = vmax.f32 %v1311, -28.284271
        %v1375 = vmax.f32 %v1315, -28.284271
        %v1376 = vmax.f32 %v1317, -28.284271
        %v1377 = vmax.f32 %v1319, -28.284271
        %v1378 = vmax.f32 %v1321, -28.284271
        %v1379 = vmax.f32 %v1325, -28.284271
        %v1380 = vmax.f32 %v1327, -28.284271
        %v1381 = vmax.f32 %v1329, -28.284271
        %v1382 = vmax.f32 %v1331, -28.284271
        %v1383 = vmax.f32 %v1335, -28.284271
        %v1384 = vmax.f32 %v1337, -28.284271
        %v1385 = vmax.f32 %v1339, -28.284271
        %v1386 = vmax.f32 %v1341, -28.284271
        %v1387 = vmax.f32 %v1345, -28.284271
        %v1388 = vmax.f32 %v1347, -28.284271
        %v1389 = vmax.f32 %v1349, -28.284271
        %v1390 = vmax.f32 %v1351, -28.284271
        %v1391 = vmax.f32 %v1355, -28.284271
        %v1392 = vmax.f32 %v1357, -28.284271
        %v1393 = vmax.f32 %v1359, -28.284271
        %v1394 = vmax.f32 %v1361, -28.284271
        %v1395 = vmin.f32 %v1363, 28.284271
        %v1396 = vmin.f32 %v1364, 28.284271
        %v1397 = vmin.f32 %v1365, 28.284271
        %v1398 = vmin.f32 %v1366, 28.284271
        %v1399 = vmin.f32 %v1367, 28.284271
        %v1400 = vmin.f32 %v1368, 28.284271
        %v1401 = vmin.f32 %v1369, 28.284271
        %v1402 = vmin.f32 %v1370, 28.284271
        %v1403 = vmin.f32 %v1371, 28.284271
        %v1404 = vmin.f32 %v1372, 28.284271
        %v1405 = vmin.f32 %v1373, 28.284271
        %v1406 = vmin.f32 %v1374, 28.284271
        %v1407 = vmin.f32 %v1375, 28.284271
        %v1408 = vmin.f32 %v1376, 28.284271
        %v1409 = vmin.f32 %v1377, 28.284271
        %v1410 = vmin.f32 %v1378, 28.284271
        %v1411 = vmin.f32 %v1379, 28.284271
        %v1412 = vmin.f32 %v1380, 28.284271
        %v1413 = vmin.f32 %v1381, 28.284271
        %v1414 = vmin.f32 %v1382, 28.284271
        %v1415 = vmin.f32 %v1383, 28.284271
        %v1416 = vmin.f32 %v1384, 28.284271
        %v1417 = vmin.f32 %v1385, 28.284271
        %v1418 = vmin.f32 %v1386, 28.284271
        %v1419 = vmin.f32 %v1387, 28.284271
        %v1420 = vmin.f32 %v1388, 28.284271
        %v1421 = vmin.f32 %v1389, 28.284271
        %v1422 = vmin.f32 %v1390, 28.284271
        %v1423 = vmin.f32 %v1391, 28.284271
        %v1424 = vmin.f32 %v1392, 28.284271
        %v1425 = vmin.f32 %v1393, 28.284271
        %v1426 = vmin.f32 %v1394, 28.284271
        %v1427 = vsub.f32 %v1395, 28.284271
        %v1428 = vsub.f32 %v1396, 28.284271
        %v1429 = vsub.f32 %v1397, 28.284271
        %v1430 = vsub.f32 %v1398, 28.284271
        %v1431 = vsub.f32 %v1399, 28.284271
        %v1432 = vsub.f32 %v1400, 28.284271
        %v1433 = vsub.f32 %v1401, 28.284271
        %v1434 = vsub.f32 %v1402, 28.284271
        %v1435 = vsub.f32 %v1403, 28.284271
        %v1436 = vsub.f32 %v1404, 28.284271
        %v1437 = vsub.f32 %v1405, 28.284271
        %v1438 = vsub.f32 %v1406, 28.284271
        %v1439 = vsub.f32 %v1407, 28.284271
        %v1440 = vsub.f32 %v1408, 28.284271
        %v1441 = vsub.f32 %v1409, 28.284271
        %v1442 = vsub.f32 %v1410, 28.284271
        %v1443 = vsub.f32 %v1411, 28.284271
        %v1444 = vsub.f32 %v1412, 28.284271
        %v1445 = vsub.f32 %v1413, 28.284271
        %v1446 = vsub.f32 %v1414, 28.284271
        %v1447 = vsub.f32 %v1415, 28.284271
        %v1448 = vsub.f32 %v1416, 28.284271
        %v1449 = vsub.f32 %v1417, 28.284271
        %v1450 = vsub.f32 %v1418, 28.284271
        %v1451 = vsub.f32 %v1419, 28.284271
        %v1452 = vsub.f32 %v1420, 28.284271
        %v1453 = vsub.f32 %v1421, 28.284271
        %v1454 = vsub.f32 %v1422, 28.284271
        %v1455 = vsub.f32 %v1423, 28.284271
        %v1456 = vsub.f32 %v1424, 28.284271
        %v1457 = vsub.f32 %v1425, 28.284271
        %v1458 = vsub.f32 %v1426, 28.284271
        %v1459 = vmul.f32 %v1427, 1.442695
        %v1460 = vpow.pop %v1459
        %v1461 = vmul.f32 %v1428, 1.442695
        %v1462 = vpow.pop %v1461
        %v1463 = vmul.f32 %v1429, 1.442695
        %v1464 = vpow.pop %v1463
        %v1465 = vmul.f32 %v1430, 1.442695
        %v1466 = vpow.pop %v1465
        %v1467 = vmul.f32 %v1431, 1.442695
        %v1468 = vpow.pop %v1467
        %v1469 = vmul.f32 %v1432, 1.442695
        %v1470 = vpow.pop %v1469
        %v1471 = vmul.f32 %v1433, 1.442695
        %v1472 = vpow.pop %v1471
        %v1473 = vmul.f32 %v1434, 1.442695
        %v1474 = vpow.pop %v1473
        %v1475 = vmul.f32 %v1435, 1.442695
        %v1476 = vpow.pop %v1475
        %v1477 = vmul.f32 %v1436, 1.442695
        %v1478 = vpow.pop %v1477
        %v1479 = vmul.f32 %v1437, 1.442695
        %v1480 = vpow.pop %v1479
        %v1481 = vmul.f32 %v1438, 1.442695
        %v1482 = vpow.pop %v1481
        %v1483 = vmul.f32 %v1439, 1.442695
        %v1484 = vpow.pop %v1483
        %v1485 = vmul.f32 %v1440, 1.442695
        %v1486 = vpow.pop %v1485
        %v1487 = vmul.f32 %v1441, 1.442695
        %v1488 = vpow.pop %v1487
        %v1489 = vmul.f32 %v1442, 1.442695
        %v1490 = vpow.pop %v1489
        %v1491 = vmul.f32 %v1443, 1.442695
        %v1492 = vpow.pop %v1491
        %v1493 = vmul.f32 %v1444, 1.442695
        %v1494 = vpow.pop %v1493
        %v1495 = vmul.f32 %v1445, 1.442695
        %v1496 = vpow.pop %v1495
        %v1497 = vmul.f32 %v1446, 1.442695
        %v1498 = vpow.pop %v1497
        %v1499 = vmul.f32 %v1447, 1.442695
        %v1500 = vpow.pop %v1499
        %v1501 = vmul.f32 %v1448, 1.442695
        %v1502 = vpow.pop %v1501
        %v1503 = vmul.f32 %v1449, 1.442695
        %v1504 = vpow.pop %v1503
        %v1505 = vmul.f32 %v1450, 1.442695
        %v1506 = vpow.pop %v1505
        %v1507 = vmul.f32 %v1451, 1.442695
        %v1508 = vpow.pop %v1507
        %v1509 = vmul.f32 %v1452, 1.442695
        %v1510 = vpow.pop %v1509
        %v1511 = vmul.f32 %v1453, 1.442695
        %v1512 = vpow.pop %v1511
        %v1513 = vmul.f32 %v1454, 1.442695
        %v1514 = vpow.pop %v1513
        %v1515 = vmul.f32 %v1455, 1.442695
        %v1516 = vpow.pop %v1515
        %v1517 = vmul.f32 %v1456, 1.442695
        %v1518 = vpow.pop %v1517
        %v1519 = vmul.f32 %v1457, 1.442695
        %v1520 = vpow.pop %v1519
        %v1521 = vmul.f32 %v1458, 1.442695
        %v1522 = vpow.pop %v1521
        %v1523 = vmul.f32 %v1460, %v1129
        %v1524 = vmul.f32 %v1462, %v1130
        %v1525 = vmul.f32 %v1464, %v1131
        %v1526 = vmul.f32 %v1466, %v1132
        %v1527 = vmul.f32 %v1468, %v1133
        %v1528 = vmul.f32 %v1470, %v1134
        %v1529 = vmul.f32 %v1472, %v1135
        %v1530 = vmul.f32 %v1474, %v1136
        %v1531 = vmul.f32 %v1476, %v1137
        %v1532 = vmul.f32 %v1478, %v1138
        %v1533 = vmul.f32 %v1480, %v1139
        %v1534 = vmul.f32 %v1482, %v1140
        %v1535 = vmul.f32 %v1484, %v1141
        %v1536 = vmul.f32 %v1486, %v1142
        %v1537 = vmul.f32 %v1488, %v1143
        %v1538 = vmul.f32 %v1490, %v1144
        %v1539 = vmul.f32 %v1492, %v1145
        %v1540 = vmul.f32 %v1494, %v1146
        %v1541 = vmul.f32 %v1496, %v1147
        %v1542 = vmul.f32 %v1498, %v1148
        %v1543 = vmul.f32 %v1500, %v1149
        %v1544 = vmul.f32 %v1502, %v1150
        %v1545 = vmul.f32 %v1504, %v1151
        %v1546 = vmul.f32 %v1506, %v1152
        %v1547 = vmul.f32 %v1508, %v1153
        %v1548 = vmul.f32 %v1510, %v1154
        %v1549 = vmul.f32 %v1512, %v1155
        %v1550 = vmul.f32 %v1514, %v1156
        %v1551 = vmul.f32 %v1516, %v1157
        %v1552 = vmul.f32 %v1518, %v1158
        %v1553 = vmul.f32 %v1520, %v1159
        %v1554 = vmul.f32 %v1522, %v1160
        %v1555 = vadd.f32 %v1523, %v1524
        %1556 = vadd.xlane.f32.xlu0 %v1555
        %v1557 = vpop.xlane.xlu0 %1556
        %v1558 = vadd.f32 %v1525, %v1526
        %1559 = vadd.xlane.f32.xlu0 %v1558
        %v1560 = vpop.xlane.xlu0 %1559
        %v1561 = vadd.f32 %v1527, %v1528
        %1562 = vadd.xlane.f32.xlu0 %v1561
        %v1563 = vpop.xlane.xlu0 %1562
        %v1564 = vadd.f32 %v1529, %v1530
        %1565 = vadd.xlane.f32.xlu0 %v1564
        %v1566 = vpop.xlane.xlu0 %1565
        %v1567 = vadd.f32 %v1531, %v1532
        %1568 = vadd.xlane.f32.xlu0 %v1567
        %v1569 = vpop.xlane.xlu0 %1568
        %v1570 = vadd.f32 %v1533, %v1534
        %1571 = vadd.xlane.f32.xlu0 %v1570
        %v1572 = vpop.xlane.xlu0 %1571
        %v1573 = vadd.f32 %v1535, %v1536
        %1574 = vadd.xlane.f32.xlu0 %v1573
        %v1575 = vpop.xlane.xlu0 %1574
        %v1576 = vadd.f32 %v1537, %v1538
        %1577 = vadd.xlane.f32.xlu0 %v1576
        %v1578 = vpop.xlane.xlu0 %1577
        %v1579 = vadd.f32 %v1539, %v1540
        %1580 = vadd.xlane.f32.xlu0 %v1579
        %v1581 = vpop.xlane.xlu0 %1580
        %v1582 = vadd.f32 %v1541, %v1542
        %1583 = vadd.xlane.f32.xlu0 %v1582
        %v1584 = vpop.xlane.xlu0 %1583
        %v1585 = vadd.f32 %v1543, %v1544
        %1586 = vadd.xlane.f32.xlu0 %v1585
        %v1587 = vpop.xlane.xlu0 %1586
        %v1588 = vadd.f32 %v1545, %v1546
        %1589 = vadd.xlane.f32.xlu0 %v1588
        %v1590 = vpop.xlane.xlu0 %1589
        %v1591 = vadd.f32 %v1547, %v1548
        %1592 = vadd.xlane.f32.xlu0 %v1591
        %v1593 = vpop.xlane.xlu0 %1592
        %v1594 = vadd.f32 %v1549, %v1550
        %1595 = vadd.xlane.f32.xlu0 %v1594
        %v1596 = vpop.xlane.xlu0 %1595
        %v1597 = vadd.f32 %v1551, %v1552
        %1598 = vadd.xlane.f32.xlu0 %v1597
        %v1599 = vpop.xlane.xlu0 %1598
        %v1600 = vadd.f32 %v1553, %v1554
        %1601 = vadd.xlane.f32.xlu0 %v1600
        %v1602 = vpop.xlane.xlu0 %1601
        %v1603 = vpack.c.bf16 %v1525, %v1523
        %v1604 = vpack.c.bf16 %v1526, %v1524
        %v1605 = vpack.c.bf16 %v1529, %v1527
        %v1606 = vpack.c.bf16 %v1530, %v1528
        %v1607 = vpack.c.bf16 %v1533, %v1531
        %v1608 = vpack.c.bf16 %v1534, %v1532
        %v1609 = vpack.c.bf16 %v1537, %v1535
        %v1610 = vpack.c.bf16 %v1538, %v1536
        %v1611 = vpack.c.bf16 %v1541, %v1539
        %v1612 = vpack.c.bf16 %v1542, %v1540
        %v1613 = vpack.c.bf16 %v1545, %v1543
        %v1614 = vpack.c.bf16 %v1546, %v1544
        %v1615 = vpack.c.bf16 %v1549, %v1547
        %v1616 = vpack.c.bf16 %v1550, %v1548
        %v1617 = vpack.c.bf16 %v1553, %v1551
        %v1618 = vpack.c.bf16 %v1554, %v1552
        %v1619 = vld [vmem:[%s578] sm:$0xf]
        %v1620 = vld [vmem:[%s578 + $0x4] sm:$0xf]
        %v1621 = vld [vmem:[%s578 + $0x8] sm:$0xf]
        %v1622 = vld [vmem:[%s578 + $0xc] sm:$0xf]
        %v1623 = vld [vmem:[%s578 + $0x10] sm:$0xf]
        %v1624 = vld [vmem:[%s578 + $0x14] sm:$0xf]
        %v1625 = vld [vmem:[%s578 + $0x18] sm:$0xf]
        %v1626 = vld [vmem:[%s578 + $0x1c] sm:$0xf]
        %v1627 = vld [vmem:[%s578 + $0x20] sm:$0xf]
        %v1628 = vld [vmem:[%s578 + $0x24] sm:$0xf]
        %v1629 = vld [vmem:[%s578 + $0x28] sm:$0xf]
        %v1630 = vld [vmem:[%s578 + $0x2c] sm:$0xf]
        %v1631 = vld [vmem:[%s578 + $0x30] sm:$0xf]
        %v1632 = vld [vmem:[%s578 + $0x34] sm:$0xf]
        %v1633 = vld [vmem:[%s578 + $0x38] sm:$0xf]
        %v1634 = vld [vmem:[%s578 + $0x3c] sm:$0xf]
        %v1635 = vld [vmem:[%s578 + $0x40] sm:$0xf]
        %v1636 = vld [vmem:[%s578 + $0x44] sm:$0xf]
        %v1637 = vld [vmem:[%s578 + $0x48] sm:$0xf]
        %v1638 = vld [vmem:[%s578 + $0x4c] sm:$0xf]
        %v1639 = vld [vmem:[%s578 + $0x50] sm:$0xf]
        %v1640 = vld [vmem:[%s578 + $0x54] sm:$0xf]
        %v1641 = vld [vmem:[%s578 + $0x58] sm:$0xf]
        %v1642 = vld [vmem:[%s578 + $0x5c] sm:$0xf]
        %v1643 = vld [vmem:[%s578 + $0x60] sm:$0xf]
        %v1644 = vld [vmem:[%s578 + $0x64] sm:$0xf]
        %v1645 = vld [vmem:[%s578 + $0x68] sm:$0xf]
        %v1646 = vld [vmem:[%s578 + $0x6c] sm:$0xf]
        %v1647 = vld [vmem:[%s578 + $0x70] sm:$0xf]
        %v1648 = vld [vmem:[%s578 + $0x74] sm:$0xf]
        %v1649 = vld [vmem:[%s578 + $0x78] sm:$0xf]
        %v1650 = vld [vmem:[%s578 + $0x7c] sm:$0xf]
        %v1683 = vunpack.c.l.b16 %v1619
        %v1684 = vunpack.c.l.b16 %v1620
        %v1685 = vunpack.c.l.b16 %v1621
        %v1686 = vunpack.c.l.b16 %v1622
        %v1687 = vunpack.c.l.b16 %v1623
        %v1688 = vunpack.c.l.b16 %v1624
        %v1689 = vunpack.c.l.b16 %v1625
        %v1690 = vunpack.c.l.b16 %v1626
        %v1691 = vunpack.c.l.b16 %v1627
        %v1692 = vunpack.c.l.b16 %v1628
        %v1693 = vunpack.c.l.b16 %v1629
        %v1694 = vunpack.c.l.b16 %v1630
        %v1695 = vunpack.c.l.b16 %v1631
        %v1696 = vunpack.c.l.b16 %v1632
        %v1697 = vunpack.c.l.b16 %v1633
        %v1698 = vunpack.c.l.b16 %v1634
        %v1699 = vunpack.c.l.b16 %v1635
        %v1700 = vunpack.c.l.b16 %v1636
        %v1701 = vunpack.c.l.b16 %v1637
        %v1702 = vunpack.c.l.b16 %v1638
        %v1703 = vunpack.c.l.b16 %v1639
        %v1704 = vunpack.c.l.b16 %v1640
        %v1705 = vunpack.c.l.b16 %v1641
        %v1706 = vunpack.c.l.b16 %v1642
        %v1707 = vunpack.c.l.b16 %v1643
        %v1708 = vunpack.c.l.b16 %v1644
        %v1709 = vunpack.c.l.b16 %v1645
        %v1710 = vunpack.c.l.b16 %v1646
        %v1711 = vunpack.c.l.b16 %v1647
        %v1712 = vunpack.c.l.b16 %v1648
        %v1713 = vunpack.c.l.b16 %v1649
        %v1714 = vunpack.c.l.b16 %v1650
        %v1715 = vpack.c.b16 %v1684, %v1683
        %v1716 = vpack.c.b16 %v1686, %v1685
        %v1717 = vpack.c.b16 %v1688, %v1687
        %v1718 = vpack.c.b16 %v1690, %v1689
        %v1719 = vpack.c.b16 %v1692, %v1691
        %v1720 = vpack.c.b16 %v1694, %v1693
        %v1721 = vpack.c.b16 %v1696, %v1695
        %v1722 = vpack.c.b16 %v1698, %v1697
        %v1723 = vpack.c.b16 %v1700, %v1699
        %v1724 = vpack.c.b16 %v1702, %v1701
        %v1725 = vpack.c.b16 %v1704, %v1703
        %v1726 = vpack.c.b16 %v1706, %v1705
        %v1727 = vpack.c.b16 %v1708, %v1707
        %v1728 = vpack.c.b16 %v1710, %v1709
        %v1729 = vpack.c.b16 %v1712, %v1711
        %v1730 = vpack.c.b16 %v1714, %v1713
        %1747 = vmatprep.subr.bf16.mxu0 0
        %1748 = vmatpush1.bf16.msra.mxu0 %v1722
        %1749 = vmatprep.subr.bf16.mxu0 0
        %1750 = vmatpush1.bf16.msra.mxu0 %v1721
        %1751 = vmatprep.subr.bf16.mxu0 0
        %1752 = vmatpush1.bf16.msra.mxu0 %v1720
        %1753 = vmatprep.subr.bf16.mxu0 0
        %1754 = vmatpush1.bf16.msra.mxu0 %v1719
        %1755 = vmatprep.subr.bf16.mxu0 0
        %1756 = vmatpush1.bf16.msra.mxu0 %v1718
        %1757 = vmatprep.subr.bf16.mxu0 0
        %1758 = vmatpush1.bf16.msra.mxu0 %v1717
        %1759 = vmatprep.subr.bf16.mxu0 0
        %1760 = vmatpush1.bf16.msra.mxu0 %v1716
        %1761 = vmatprep.subr.bf16.mxu0 0
        %1762 = vmatpush1.bf16.msra.mxu0 %v1715
        %1763 = vmatprep.subr.bf16.mxu0 0
        %1764 = vmatpush2.bf16.msra.mxu0 %v1730
        %1765 = vmatprep.subr.bf16.mxu0 0
        %1766 = vmatpush2.bf16.msra.mxu0 %v1729
        %1767 = vmatprep.subr.bf16.mxu0 0
        %1768 = vmatpush2.bf16.msra.mxu0 %v1728
        %1769 = vmatprep.subr.bf16.mxu0 0
        %1770 = vmatpush2.bf16.msra.mxu0 %v1727
        %1771 = vmatprep.subr.bf16.mxu0 0
        %1772 = vmatpush2.bf16.msra.mxu0 %v1726
        %1773 = vmatprep.subr.bf16.mxu0 0
        %1774 = vmatpush2.bf16.msra.mxu0 %v1725
        %1775 = vmatprep.subr.bf16.mxu0 0
        %1776 = vmatpush2.bf16.msra.mxu0 %v1724
        %1777 = vmatprep.subr.bf16.mxu0 0
        %1778 = vmatpush2.bf16.msra.mxu0 %v1723
        %1779 = vmatprep.mubr.bf16.mxu0 %v1604
        %1780 = vmatmul.mubr.bf16.gmra.mxu0 %v1603
        %v1781 = vpop.f32.mrf.mxu0
        %v1782 = vadd.f32 0.0, %v1781
        %v1783 = vpop.f32.mrf.mxu0
        %v1784 = vpop.f32.mrf.mxu0
        %v1785 = vadd.f32 0.0, %v1784
        %v1786 = vpop.f32.mrf.mxu0
        %1787 = vmatprep.mubr.bf16.mxu0 %v1606
        %1788 = vmatmul.mubr.bf16.gmra.mxu0 %v1605
        %v1789 = vpop.f32.mrf.mxu0
        %v1790 = vadd.f32 0.0, %v1789
        %v1791 = vpop.f32.mrf.mxu0
        %v1792 = vpop.f32.mrf.mxu0
        %v1793 = vadd.f32 0.0, %v1792
        %v1794 = vpop.f32.mrf.mxu0
        %1795 = vmatprep.mubr.bf16.mxu0 %v1608
        %1796 = vmatmul.mubr.bf16.gmra.mxu0 %v1607
        %v1797 = vpop.f32.mrf.mxu0
        %v1798 = vadd.f32 0.0, %v1797
        %v1799 = vpop.f32.mrf.mxu0
        %v1800 = vpop.f32.mrf.mxu0
        %v1801 = vadd.f32 0.0, %v1800
        %v1802 = vpop.f32.mrf.mxu0
        %1803 = vmatprep.mubr.bf16.mxu0 %v1610
        %1804 = vmatmul.mubr.bf16.gmra.mxu0 %v1609
        %v1805 = vpop.f32.mrf.mxu0
        %v1806 = vadd.f32 0.0, %v1805
        %v1807 = vpop.f32.mrf.mxu0
        %v1808 = vpop.f32.mrf.mxu0
        %v1809 = vadd.f32 0.0, %v1808
        %v1810 = vpop.f32.mrf.mxu0
        %1811 = vmatprep.mubr.bf16.mxu0 %v1612
        %1812 = vmatmul.mubr.bf16.gmra.mxu0 %v1611
        %v1813 = vpop.f32.mrf.mxu0
        %v1814 = vadd.f32 0.0, %v1813
        %v1815 = vpop.f32.mrf.mxu0
        %v1816 = vpop.f32.mrf.mxu0
        %v1817 = vadd.f32 0.0, %v1816
        %v1818 = vpop.f32.mrf.mxu0
        %1819 = vmatprep.mubr.bf16.mxu0 %v1614
        %1820 = vmatmul.mubr.bf16.gmra.mxu0 %v1613
        %v1821 = vpop.f32.mrf.mxu0
        %v1822 = vadd.f32 0.0, %v1821
        %v1823 = vpop.f32.mrf.mxu0
        %v1824 = vpop.f32.mrf.mxu0
        %v1825 = vadd.f32 0.0, %v1824
        %v1826 = vpop.f32.mrf.mxu0
        %1827 = vmatprep.mubr.bf16.mxu0 %v1616
        %1828 = vmatmul.mubr.bf16.gmra.mxu0 %v1615
        %v1829 = vpop.f32.mrf.mxu0
        %v1830 = vadd.f32 0.0, %v1829
        %v1831 = vpop.f32.mrf.mxu0
        %v1832 = vpop.f32.mrf.mxu0
        %v1833 = vadd.f32 0.0, %v1832
        %v1834 = vpop.f32.mrf.mxu0
        %1835 = vmatprep.mubr.bf16.mxu0 %v1618
        %1836 = vmatmul.mubr.bf16.gmra.mxu0 %v1617
        %v1837 = vpop.f32.mrf.mxu0
        %v1838 = vadd.f32 0.0, %v1837
        %v1839 = vpop.f32.mrf.mxu0
        %v1840 = vpop.f32.mrf.mxu0
        %v1841 = vadd.f32 0.0, %v1840
        %v1842 = vpop.f32.mrf.mxu0
        %1843 = vdwg.mxu0
        %v1844 = vld [vmem:[%s572 + $0x20] sm:$0xff]
        %v1845 = vld [vmem:[%s572 + $0x28] sm:$0xff]
        %v1846 = vld [vmem:[%s572 + $0x30] sm:$0xff]
        %v1847 = vld [vmem:[%s572 + $0x38] sm:$0xff]
        %1848 = vrot.lane.b32.xlu0 %v1197, 96
        %v1849 = vpop.permute.xlu0 %1848
        %1850 = vrot.lane.b32.xlu0 %v1198, 96
        %v1851 = vpop.permute.xlu0 %1850
        %1852 = vrot.lane.b32.xlu0 %v1199, 96
        %v1853 = vpop.permute.xlu0 %1852
        %1854 = vrot.lane.b32.xlu0 %v1200, 96
        %v1855 = vpop.permute.xlu0 %1854
        %1856 = vrot.lane.b32.xlu0 %v1201, 96
        %v1857 = vpop.permute.xlu0 %1856
        %1858 = vrot.lane.b32.xlu0 %v1202, 96
        %v1859 = vpop.permute.xlu0 %1858
        %1860 = vrot.lane.b32.xlu0 %v1203, 96
        %v1861 = vpop.permute.xlu0 %1860
        %1862 = vrot.lane.b32.xlu0 %v1204, 96
        %v1863 = vpop.permute.xlu0 %1862
        %v1868 = vunpack.c.l.b16 %v1844
        %v1869 = vunpack.c.h.b16 %v1844
        %v1870 = vunpack.c.l.b16 %v1845
        %v1871 = vunpack.c.h.b16 %v1845
        %v1872 = vunpack.c.l.b16 %v1846
        %v1873 = vunpack.c.h.b16 %v1846
        %v1874 = vunpack.c.l.b16 %v1847
        %v1875 = vunpack.c.h.b16 %v1847
        %v1876 = vpack.c.b16 %v1870, %v1868
        %v1877 = vpack.c.b16 %v1871, %v1869
        %v1878 = vpack.c.b16 %v1874, %v1872
        %v1879 = vpack.c.b16 %v1875, %v1873
        %v1885 = vsel %vm1225, %v1849, 0
        %v1888 = vsel %vm1225, %v1851, 0
        %v1891 = vsel %vm1225, %v1853, 0
        %v1894 = vsel %vm1225, %v1855, 0
        %v1897 = vsel %vm1225, %v1857, 0
        %v1900 = vsel %vm1225, %v1859, 0
        %v1903 = vsel %vm1225, %v1861, 0
        %v1906 = vsel %vm1225, %v1863, 0
        %1908 = vmatprep.subr.bf16.mxu0 0
        %1909 = vmatpush1.bf16.msra.mxu0 0
        %1910 = vmatprep.subr.bf16.mxu0 0
        %1911 = vmatpush1.bf16.msra.mxu0 0
        %1912 = vmatprep.subr.bf16.mxu0 0
        %1913 = vmatpush1.bf16.msra.mxu0 0
        %1914 = vmatprep.subr.bf16.mxu0 0
        %1915 = vmatpush1.bf16.msra.mxu0 0
        %1916 = vmatprep.subr.bf16.mxu0 0
        %1917 = vmatpush1.bf16.msra.mxu0 0
        %1918 = vmatprep.subr.bf16.mxu0 0
        %1919 = vmatpush1.bf16.msra.mxu0 0
        %1920 = vmatprep.subr.bf16.mxu0 %v1879
        %1921 = vmatpush1.bf16.msra.mxu0 %v1878
        %1922 = vmatprep.subr.bf16.mxu0 %v1877
        %1923 = vmatpush1.bf16.msra.mxu0 %v1876
        %1924 = vmatprep.subr.bf16.mxu0 0
        %1925 = vmatpush2.bf16.msra.mxu0 0
        %1926 = vmatprep.subr.bf16.mxu0 0
        %1927 = vmatpush2.bf16.msra.mxu0 0
        %1928 = vmatprep.subr.bf16.mxu0 0
        %1929 = vmatpush2.bf16.msra.mxu0 0
        %1930 = vmatprep.subr.bf16.mxu0 0
        %1931 = vmatpush2.bf16.msra.mxu0 0
        %1932 = vmatprep.subr.bf16.mxu0 0
        %1933 = vmatpush2.bf16.msra.mxu0 0
        %1934 = vmatprep.subr.bf16.mxu0 0
        %1935 = vmatpush2.bf16.msra.mxu0 0
        %1936 = vmatprep.subr.bf16.mxu0 0
        %1937 = vmatpush2.bf16.msra.mxu0 0
        %1938 = vmatprep.subr.bf16.mxu0 0
        %1939 = vmatpush2.bf16.msra.mxu0 0
        %1940 = vmatprep.mubr.bf16.mxu0 0
        %1941 = vmatmul.mubr.bf16.gmra.mxu0 %v1885
        %v1942 = vpop.f32.mrf.mxu0
        %v1943 = vadd.f32 0.0, %v1942
        %v1944 = vpop.f32.mrf.mxu0
        %v1945 = vadd.f32 0.0, %v1944
        %v1946 = vpop.f32.mrf.mxu0
        %v1947 = vadd.f32 0.0, %v1946
        %v1948 = vpop.f32.mrf.mxu0
        %v1949 = vadd.f32 0.0, %v1948
        %1950 = vmatprep.mubr.bf16.mxu0 0
        %1951 = vmatmul.mubr.bf16.gmra.mxu0 %v1888
        %v1952 = vpop.f32.mrf.mxu0
        %v1953 = vadd.f32 0.0, %v1952
        %v1954 = vpop.f32.mrf.mxu0
        %v1955 = vadd.f32 0.0, %v1954
        %v1956 = vpop.f32.mrf.mxu0
        %v1957 = vadd.f32 0.0, %v1956
        %v1958 = vpop.f32.mrf.mxu0
        %v1959 = vadd.f32 0.0, %v1958
        %1960 = vmatprep.mubr.bf16.mxu0 0
        %1961 = vmatmul.mubr.bf16.gmra.mxu0 %v1891
        %v1962 = vpop.f32.mrf.mxu0
        %v1963 = vadd.f32 0.0, %v1962
        %v1964 = vpop.f32.mrf.mxu0
        %v1965 = vadd.f32 0.0, %v1964
        %v1966 = vpop.f32.mrf.mxu0
        %v1967 = vadd.f32 0.0, %v1966
        %v1968 = vpop.f32.mrf.mxu0
        %v1969 = vadd.f32 0.0, %v1968
        %1970 = vmatprep.mubr.bf16.mxu0 0
        %1971 = vmatmul.mubr.bf16.gmra.mxu0 %v1894
        %v1972 = vpop.f32.mrf.mxu0
        %v1973 = vadd.f32 0.0, %v1972
        %v1974 = vpop.f32.mrf.mxu0
        %v1975 = vadd.f32 0.0, %v1974
        %v1976 = vpop.f32.mrf.mxu0
        %v1977 = vadd.f32 0.0, %v1976
        %v1978 = vpop.f32.mrf.mxu0
        %v1979 = vadd.f32 0.0, %v1978
        %1980 = vmatprep.mubr.bf16.mxu0 0
        %1981 = vmatmul.mubr.bf16.gmra.mxu0 %v1897
        %v1982 = vpop.f32.mrf.mxu0
        %v1983 = vadd.f32 0.0, %v1982
        %v1984 = vpop.f32.mrf.mxu0
        %v1985 = vadd.f32 0.0, %v1984
        %v1986 = vpop.f32.mrf.mxu0
        %v1987 = vadd.f32 0.0, %v1986
        %v1988 = vpop.f32.mrf.mxu0
        %v1989 = vadd.f32 0.0, %v1988
        %1990 = vmatprep.mubr.bf16.mxu0 0
        %1991 = vmatmul.mubr.bf16.gmra.mxu0 %v1900
        %v1992 = vpop.f32.mrf.mxu0
        %v1993 = vadd.f32 0.0, %v1992
        %v1994 = vpop.f32.mrf.mxu0
        %v1995 = vadd.f32 0.0, %v1994
        %v1996 = vpop.f32.mrf.mxu0
        %v1997 = vadd.f32 0.0, %v1996
        %v1998 = vpop.f32.mrf.mxu0
        %v1999 = vadd.f32 0.0, %v1998
        %2000 = vmatprep.mubr.bf16.mxu0 0
        %2001 = vmatmul.mubr.bf16.gmra.mxu0 %v1903
        %v2002 = vpop.f32.mrf.mxu0
        %v2003 = vadd.f32 0.0, %v2002
        %v2004 = vpop.f32.mrf.mxu0
        %v2005 = vadd.f32 0.0, %v2004
        %v2006 = vpop.f32.mrf.mxu0
        %v2007 = vadd.f32 0.0, %v2006
        %v2008 = vpop.f32.mrf.mxu0
        %v2009 = vadd.f32 0.0, %v2008
        %2010 = vmatprep.mubr.bf16.mxu0 0
        %2011 = vmatmul.mubr.bf16.gmra.mxu0 %v1906
        %v2012 = vpop.f32.mrf.mxu0
        %v2013 = vadd.f32 0.0, %v2012
        %v2014 = vpop.f32.mrf.mxu0
        %v2015 = vadd.f32 0.0, %v2014
        %v2016 = vpop.f32.mrf.mxu0
        %v2017 = vadd.f32 0.0, %v2016
        %v2018 = vpop.f32.mrf.mxu0
        %v2019 = vadd.f32 0.0, %v2018
        %2020 = vdwg.mxu0
        %v2021 = vmax.f32 %v1943, -28.284271
        %v2022 = vmax.f32 %v1945, -28.284271
        %v2023 = vmax.f32 %v1947, -28.284271
        %v2024 = vmax.f32 %v1949, -28.284271
        %v2025 = vmax.f32 %v1953, -28.284271
        %v2026 = vmax.f32 %v1955, -28.284271
        %v2027 = vmax.f32 %v1957, -28.284271
        %v2028 = vmax.f32 %v1959, -28.284271
        %v2029 = vmax.f32 %v1963, -28.284271
        %v2030 = vmax.f32 %v1965, -28.284271
        %v2031 = vmax.f32 %v1967, -28.284271
        %v2032 = vmax.f32 %v1969, -28.284271
        %v2033 = vmax.f32 %v1973, -28.284271
        %v2034 = vmax.f32 %v1975, -28.284271
        %v2035 = vmax.f32 %v1977, -28.284271
        %v2036 = vmax.f32 %v1979, -28.284271
        %v2037 = vmax.f32 %v1983, -28.284271
        %v2038 = vmax.f32 %v1985, -28.284271
        %v2039 = vmax.f32 %v1987, -28.284271
        %v2040 = vmax.f32 %v1989, -28.284271
        %v2041 = vmax.f32 %v1993, -28.284271
        %v2042 = vmax.f32 %v1995, -28.284271
        %v2043 = vmax.f32 %v1997, -28.284271
        %v2044 = vmax.f32 %v1999, -28.284271
        %v2045 = vmax.f32 %v2003, -28.284271
        %v2046 = vmax.f32 %v2005, -28.284271
        %v2047 = vmax.f32 %v2007, -28.284271
        %v2048 = vmax.f32 %v2009, -28.284271
        %v2049 = vmax.f32 %v2013, -28.284271
        %v2050 = vmax.f32 %v2015, -28.284271
        %v2051 = vmax.f32 %v2017, -28.284271
        %v2052 = vmax.f32 %v2019, -28.284271
        %v2053 = vmin.f32 %v2021, 28.284271
        %v2054 = vmin.f32 %v2022, 28.284271
        %v2055 = vmin.f32 %v2023, 28.284271
        %v2056 = vmin.f32 %v2024, 28.284271
        %v2057 = vmin.f32 %v2025, 28.284271
        %v2058 = vmin.f32 %v2026, 28.284271
        %v2059 = vmin.f32 %v2027, 28.284271
        %v2060 = vmin.f32 %v2028, 28.284271
        %v2061 = vmin.f32 %v2029, 28.284271
        %v2062 = vmin.f32 %v2030, 28.284271
        %v2063 = vmin.f32 %v2031, 28.284271
        %v2064 = vmin.f32 %v2032, 28.284271
        %v2065 = vmin.f32 %v2033, 28.284271
        %v2066 = vmin.f32 %v2034, 28.284271
        %v2067 = vmin.f32 %v2035, 28.284271
        %v2068 = vmin.f32 %v2036, 28.284271
        %v2069 = vmin.f32 %v2037, 28.284271
        %v2070 = vmin.f32 %v2038, 28.284271
        %v2071 = vmin.f32 %v2039, 28.284271
        %v2072 = vmin.f32 %v2040, 28.284271
        %v2073 = vmin.f32 %v2041, 28.284271
        %v2074 = vmin.f32 %v2042, 28.284271
        %v2075 = vmin.f32 %v2043, 28.284271
        %v2076 = vmin.f32 %v2044, 28.284271
        %v2077 = vmin.f32 %v2045, 28.284271
        %v2078 = vmin.f32 %v2046, 28.284271
        %v2079 = vmin.f32 %v2047, 28.284271
        %v2080 = vmin.f32 %v2048, 28.284271
        %v2081 = vmin.f32 %v2049, 28.284271
        %v2082 = vmin.f32 %v2050, 28.284271
        %v2083 = vmin.f32 %v2051, 28.284271
        %v2084 = vmin.f32 %v2052, 28.284271
        %v2085 = vsub.f32 %v2053, 28.284271
        %v2086 = vsub.f32 %v2054, 28.284271
        %v2087 = vsub.f32 %v2055, 28.284271
        %v2088 = vsub.f32 %v2056, 28.284271
        %v2089 = vsub.f32 %v2057, 28.284271
        %v2090 = vsub.f32 %v2058, 28.284271
        %v2091 = vsub.f32 %v2059, 28.284271
        %v2092 = vsub.f32 %v2060, 28.284271
        %v2093 = vsub.f32 %v2061, 28.284271
        %v2094 = vsub.f32 %v2062, 28.284271
        %v2095 = vsub.f32 %v2063, 28.284271
        %v2096 = vsub.f32 %v2064, 28.284271
        %v2097 = vsub.f32 %v2065, 28.284271
        %v2098 = vsub.f32 %v2066, 28.284271
        %v2099 = vsub.f32 %v2067, 28.284271
        %v2100 = vsub.f32 %v2068, 28.284271
        %v2101 = vsub.f32 %v2069, 28.284271
        %v2102 = vsub.f32 %v2070, 28.284271
        %v2103 = vsub.f32 %v2071, 28.284271
        %v2104 = vsub.f32 %v2072, 28.284271
        %v2105 = vsub.f32 %v2073, 28.284271
        %v2106 = vsub.f32 %v2074, 28.284271
        %v2107 = vsub.f32 %v2075, 28.284271
        %v2108 = vsub.f32 %v2076, 28.284271
        %v2109 = vsub.f32 %v2077, 28.284271
        %v2110 = vsub.f32 %v2078, 28.284271
        %v2111 = vsub.f32 %v2079, 28.284271
        %v2112 = vsub.f32 %v2080, 28.284271
        %v2113 = vsub.f32 %v2081, 28.284271
        %v2114 = vsub.f32 %v2082, 28.284271
        %v2115 = vsub.f32 %v2083, 28.284271
        %v2116 = vsub.f32 %v2084, 28.284271
        %v2117 = vmul.f32 %v2085, 1.442695
        %v2118 = vpow.pop %v2117
        %v2119 = vmul.f32 %v2086, 1.442695
        %v2120 = vpow.pop %v2119
        %v2121 = vmul.f32 %v2087, 1.442695
        %v2122 = vpow.pop %v2121
        %v2123 = vmul.f32 %v2088, 1.442695
        %v2124 = vpow.pop %v2123
        %v2125 = vmul.f32 %v2089, 1.442695
        %v2126 = vpow.pop %v2125
        %v2127 = vmul.f32 %v2090, 1.442695
        %v2128 = vpow.pop %v2127
        %v2129 = vmul.f32 %v2091, 1.442695
        %v2130 = vpow.pop %v2129
        %v2131 = vmul.f32 %v2092, 1.442695
        %v2132 = vpow.pop %v2131
        %v2133 = vmul.f32 %v2093, 1.442695
        %v2134 = vpow.pop %v2133
        %v2135 = vmul.f32 %v2094, 1.442695
        %v2136 = vpow.pop %v2135
        %v2137 = vmul.f32 %v2095, 1.442695
        %v2138 = vpow.pop %v2137
        %v2139 = vmul.f32 %v2096, 1.442695
        %v2140 = vpow.pop %v2139
        %v2141 = vmul.f32 %v2097, 1.442695
        %v2142 = vpow.pop %v2141
        %v2143 = vmul.f32 %v2098, 1.442695
        %v2144 = vpow.pop %v2143
        %v2145 = vmul.f32 %v2099, 1.442695
        %v2146 = vpow.pop %v2145
        %v2147 = vmul.f32 %v2100, 1.442695
        %v2148 = vpow.pop %v2147
        %v2149 = vmul.f32 %v2101, 1.442695
        %v2150 = vpow.pop %v2149
        %v2151 = vmul.f32 %v2102, 1.442695
        %v2152 = vpow.pop %v2151
        %v2153 = vmul.f32 %v2103, 1.442695
        %v2154 = vpow.pop %v2153
        %v2155 = vmul.f32 %v2104, 1.442695
        %v2156 = vpow.pop %v2155
        %v2157 = vmul.f32 %v2105, 1.442695
        %v2158 = vpow.pop %v2157
        %v2159 = vmul.f32 %v2106, 1.442695
        %v2160 = vpow.pop %v2159
        %v2161 = vmul.f32 %v2107, 1.442695
        %v2162 = vpow.pop %v2161
        %v2163 = vmul.f32 %v2108, 1.442695
        %v2164 = vpow.pop %v2163
        %v2165 = vmul.f32 %v2109, 1.442695
        %v2166 = vpow.pop %v2165
        %v2167 = vmul.f32 %v2110, 1.442695
        %v2168 = vpow.pop %v2167
        %v2169 = vmul.f32 %v2111, 1.442695
        %v2170 = vpow.pop %v2169
        %v2171 = vmul.f32 %v2112, 1.442695
        %v2172 = vpow.pop %v2171
        %v2173 = vmul.f32 %v2113, 1.442695
        %v2174 = vpow.pop %v2173
        %v2175 = vmul.f32 %v2114, 1.442695
        %v2176 = vpow.pop %v2175
        %v2177 = vmul.f32 %v2115, 1.442695
        %v2178 = vpow.pop %v2177
        %v2179 = vmul.f32 %v2116, 1.442695
        %v2180 = vpow.pop %v2179
        %v2181 = vmul.f32 %v2118, %v1129
        %v2182 = vmul.f32 %v2120, %v1130
        %v2183 = vmul.f32 %v2122, %v1131
        %v2184 = vmul.f32 %v2124, %v1132
        %v2185 = vmul.f32 %v2126, %v1133
        %v2186 = vmul.f32 %v2128, %v1134
        %v2187 = vmul.f32 %v2130, %v1135
        %v2188 = vmul.f32 %v2132, %v1136
        %v2189 = vmul.f32 %v2134, %v1137
        %v2190 = vmul.f32 %v2136, %v1138
        %v2191 = vmul.f32 %v2138, %v1139
        %v2192 = vmul.f32 %v2140, %v1140
        %v2193 = vmul.f32 %v2142, %v1141
        %v2194 = vmul.f32 %v2144, %v1142
        %v2195 = vmul.f32 %v2146, %v1143
        %v2196 = vmul.f32 %v2148, %v1144
        %v2197 = vmul.f32 %v2150, %v1145
        %v2198 = vmul.f32 %v2152, %v1146
        %v2199 = vmul.f32 %v2154, %v1147
        %v2200 = vmul.f32 %v2156, %v1148
        %v2201 = vmul.f32 %v2158, %v1149
        %v2202 = vmul.f32 %v2160, %v1150
        %v2203 = vmul.f32 %v2162, %v1151
        %v2204 = vmul.f32 %v2164, %v1152
        %v2205 = vmul.f32 %v2166, %v1153
        %v2206 = vmul.f32 %v2168, %v1154
        %v2207 = vmul.f32 %v2170, %v1155
        %v2208 = vmul.f32 %v2172, %v1156
        %v2209 = vmul.f32 %v2174, %v1157
        %v2210 = vmul.f32 %v2176, %v1158
        %v2211 = vmul.f32 %v2178, %v1159
        %v2212 = vmul.f32 %v2180, %v1160
        %v2213 = vadd.f32 %v2181, %v2182
        %2214 = vadd.xlane.f32.xlu0 %v2213
        %v2215 = vpop.xlane.xlu0 %2214
        %v2216 = vadd.f32 %v2183, %v2184
        %2217 = vadd.xlane.f32.xlu0 %v2216
        %v2218 = vpop.xlane.xlu0 %2217
        %v2219 = vadd.f32 %v2185, %v2186
        %2220 = vadd.xlane.f32.xlu0 %v2219
        %v2221 = vpop.xlane.xlu0 %2220
        %v2222 = vadd.f32 %v2187, %v2188
        %2223 = vadd.xlane.f32.xlu0 %v2222
        %v2224 = vpop.xlane.xlu0 %2223
        %v2225 = vadd.f32 %v2189, %v2190
        %2226 = vadd.xlane.f32.xlu0 %v2225
        %v2227 = vpop.xlane.xlu0 %2226
        %v2228 = vadd.f32 %v2191, %v2192
        %2229 = vadd.xlane.f32.xlu0 %v2228
        %v2230 = vpop.xlane.xlu0 %2229
        %v2231 = vadd.f32 %v2193, %v2194
        %2232 = vadd.xlane.f32.xlu0 %v2231
        %v2233 = vpop.xlane.xlu0 %2232
        %v2234 = vadd.f32 %v2195, %v2196
        %2235 = vadd.xlane.f32.xlu0 %v2234
        %v2236 = vpop.xlane.xlu0 %2235
        %v2237 = vadd.f32 %v2197, %v2198
        %2238 = vadd.xlane.f32.xlu0 %v2237
        %v2239 = vpop.xlane.xlu0 %2238
        %v2240 = vadd.f32 %v2199, %v2200
        %2241 = vadd.xlane.f32.xlu0 %v2240
        %v2242 = vpop.xlane.xlu0 %2241
        %v2243 = vadd.f32 %v2201, %v2202
        %2244 = vadd.xlane.f32.xlu0 %v2243
        %v2245 = vpop.xlane.xlu0 %2244
        %v2246 = vadd.f32 %v2203, %v2204
        %2247 = vadd.xlane.f32.xlu0 %v2246
        %v2248 = vpop.xlane.xlu0 %2247
        %v2249 = vadd.f32 %v2205, %v2206
        %2250 = vadd.xlane.f32.xlu0 %v2249
        %v2251 = vpop.xlane.xlu0 %2250
        %v2252 = vadd.f32 %v2207, %v2208
        %2253 = vadd.xlane.f32.xlu0 %v2252
        %v2254 = vpop.xlane.xlu0 %2253
        %v2255 = vadd.f32 %v2209, %v2210
        %2256 = vadd.xlane.f32.xlu0 %v2255
        %v2257 = vpop.xlane.xlu0 %2256
        %v2258 = vadd.f32 %v2211, %v2212
        %2259 = vadd.xlane.f32.xlu0 %v2258
        %v2260 = vpop.xlane.xlu0 %2259
        %v2261 = vpack.c.bf16 %v2183, %v2181
        %v2262 = vpack.c.bf16 %v2184, %v2182
        %v2263 = vpack.c.bf16 %v2187, %v2185
        %v2264 = vpack.c.bf16 %v2188, %v2186
        %v2265 = vpack.c.bf16 %v2191, %v2189
        %v2266 = vpack.c.bf16 %v2192, %v2190
        %v2267 = vpack.c.bf16 %v2195, %v2193
        %v2268 = vpack.c.bf16 %v2196, %v2194
        %v2269 = vpack.c.bf16 %v2199, %v2197
        %v2270 = vpack.c.bf16 %v2200, %v2198
        %v2271 = vpack.c.bf16 %v2203, %v2201
        %v2272 = vpack.c.bf16 %v2204, %v2202
        %v2273 = vpack.c.bf16 %v2207, %v2205
        %v2274 = vpack.c.bf16 %v2208, %v2206
        %v2275 = vpack.c.bf16 %v2211, %v2209
        %v2276 = vpack.c.bf16 %v2212, %v2210
        %2277 = vrot.lane.b32.xlu0 %v1715, 96
        %v2278 = vpop.permute.xlu0 %2277
        %2279 = vrot.lane.b32.xlu0 %v1716, 96
        %v2280 = vpop.permute.xlu0 %2279
        %2281 = vrot.lane.b32.xlu0 %v1717, 96
        %v2282 = vpop.permute.xlu0 %2281
        %2283 = vrot.lane.b32.xlu0 %v1718, 96
        %v2284 = vpop.permute.xlu0 %2283
        %2285 = vrot.lane.b32.xlu0 %v1719, 96
        %v2286 = vpop.permute.xlu0 %2285
        %2287 = vrot.lane.b32.xlu0 %v1720, 96
        %v2288 = vpop.permute.xlu0 %2287
        %2289 = vrot.lane.b32.xlu0 %v1721, 96
        %v2290 = vpop.permute.xlu0 %2289
        %2291 = vrot.lane.b32.xlu0 %v1722, 96
        %v2292 = vpop.permute.xlu0 %2291
        %2293 = vrot.lane.b32.xlu0 %v1723, 96
        %v2294 = vpop.permute.xlu0 %2293
        %2295 = vrot.lane.b32.xlu0 %v1724, 96
        %v2296 = vpop.permute.xlu0 %2295
        %2297 = vrot.lane.b32.xlu0 %v1725, 96
        %v2298 = vpop.permute.xlu0 %2297
        %2299 = vrot.lane.b32.xlu0 %v1726, 96
        %v2300 = vpop.permute.xlu0 %2299
        %2301 = vrot.lane.b32.xlu0 %v1727, 96
        %v2302 = vpop.permute.xlu0 %2301
        %2303 = vrot.lane.b32.xlu0 %v1728, 96
        %v2304 = vpop.permute.xlu0 %2303
        %2305 = vrot.lane.b32.xlu0 %v1729, 96
        %v2306 = vpop.permute.xlu0 %2305
        %2307 = vrot.lane.b32.xlu0 %v1730, 96
        %v2308 = vpop.permute.xlu0 %2307
        %2325 = vmatprep.subr.bf16.mxu0 0
        %2326 = vmatpush1.bf16.msra.mxu0 %v2292
        %2327 = vmatprep.subr.bf16.mxu0 0
        %2328 = vmatpush1.bf16.msra.mxu0 %v2290
        %2329 = vmatprep.subr.bf16.mxu0 0
        %2330 = vmatpush1.bf16.msra.mxu0 %v2288
        %2331 = vmatprep.subr.bf16.mxu0 0
        %2332 = vmatpush1.bf16.msra.mxu0 %v2286
        %2333 = vmatprep.subr.bf16.mxu0 0
        %2334 = vmatpush1.bf16.msra.mxu0 %v2284
        %2335 = vmatprep.subr.bf16.mxu0 0
        %2336 = vmatpush1.bf16.msra.mxu0 %v2282
        %2337 = vmatprep.subr.bf16.mxu0 0
        %2338 = vmatpush1.bf16.msra.mxu0 %v2280
        %2339 = vmatprep.subr.bf16.mxu0 0
        %2340 = vmatpush1.bf16.msra.mxu0 %v2278
        %2341 = vmatprep.subr.bf16.mxu0 0
        %2342 = vmatpush2.bf16.msra.mxu0 %v2308
        %2343 = vmatprep.subr.bf16.mxu0 0
        %2344 = vmatpush2.bf16.msra.mxu0 %v2306
        %2345 = vmatprep.subr.bf16.mxu0 0
        %2346 = vmatpush2.bf16.msra.mxu0 %v2304
        %2347 = vmatprep.subr.bf16.mxu0 0
        %2348 = vmatpush2.bf16.msra.mxu0 %v2302
        %2349 = vmatprep.subr.bf16.mxu0 0
        %2350 = vmatpush2.bf16.msra.mxu0 %v2300
        %2351 = vmatprep.subr.bf16.mxu0 0
        %2352 = vmatpush2.bf16.msra.mxu0 %v2298
        %2353 = vmatprep.subr.bf16.mxu0 0
        %2354 = vmatpush2.bf16.msra.mxu0 %v2296
        %2355 = vmatprep.subr.bf16.mxu0 0
        %2356 = vmatpush2.bf16.msra.mxu0 %v2294
        %2357 = vmatprep.mubr.bf16.mxu0 %v2262
        %2358 = vmatmul.mubr.bf16.gmra.mxu0 %v2261
        %v2359 = vpop.f32.mrf.mxu0
        %v2360 = vadd.f32 0.0, %v2359
        %v2361 = vpop.f32.mrf.mxu0
        %v2362 = vpop.f32.mrf.mxu0
        %v2363 = vadd.f32 0.0, %v2362
        %v2364 = vpop.f32.mrf.mxu0
        %2365 = vmatprep.mubr.bf16.mxu0 %v2264
        %2366 = vmatmul.mubr.bf16.gmra.mxu0 %v2263
        %v2367 = vpop.f32.mrf.mxu0
        %v2368 = vadd.f32 0.0, %v2367
        %v2369 = vpop.f32.mrf.mxu0
        %v2370 = vpop.f32.mrf.mxu0
        %v2371 = vadd.f32 0.0, %v2370
        %v2372 = vpop.f32.mrf.mxu0
        %2373 = vmatprep.mubr.bf16.mxu0 %v2266
        %2374 = vmatmul.mubr.bf16.gmra.mxu0 %v2265
        %v2375 = vpop.f32.mrf.mxu0
        %v2376 = vadd.f32 0.0, %v2375
        %v2377 = vpop.f32.mrf.mxu0
        %v2378 = vpop.f32.mrf.mxu0
        %v2379 = vadd.f32 0.0, %v2378
        %v2380 = vpop.f32.mrf.mxu0
        %2381 = vmatprep.mubr.bf16.mxu0 %v2268
        %2382 = vmatmul.mubr.bf16.gmra.mxu0 %v2267
        %v2383 = vpop.f32.mrf.mxu0
        %v2384 = vadd.f32 0.0, %v2383
        %v2385 = vpop.f32.mrf.mxu0
        %v2386 = vpop.f32.mrf.mxu0
        %v2387 = vadd.f32 0.0, %v2386
        %v2388 = vpop.f32.mrf.mxu0
        %2389 = vmatprep.mubr.bf16.mxu0 %v2270
        %2390 = vmatmul.mubr.bf16.gmra.mxu0 %v2269
        %v2391 = vpop.f32.mrf.mxu0
        %v2392 = vadd.f32 0.0, %v2391
        %v2393 = vpop.f32.mrf.mxu0
        %v2394 = vpop.f32.mrf.mxu0
        %v2395 = vadd.f32 0.0, %v2394
        %v2396 = vpop.f32.mrf.mxu0
        %2397 = vmatprep.mubr.bf16.mxu0 %v2272
        %2398 = vmatmul.mubr.bf16.gmra.mxu0 %v2271
        %v2399 = vpop.f32.mrf.mxu0
        %v2400 = vadd.f32 0.0, %v2399
        %v2401 = vpop.f32.mrf.mxu0
        %v2402 = vpop.f32.mrf.mxu0
        %v2403 = vadd.f32 0.0, %v2402
        %v2404 = vpop.f32.mrf.mxu0
        %2405 = vmatprep.mubr.bf16.mxu0 %v2274
        %2406 = vmatmul.mubr.bf16.gmra.mxu0 %v2273
        %v2407 = vpop.f32.mrf.mxu0
        %v2408 = vadd.f32 0.0, %v2407
        %v2409 = vpop.f32.mrf.mxu0
        %v2410 = vpop.f32.mrf.mxu0
        %v2411 = vadd.f32 0.0, %v2410
        %v2412 = vpop.f32.mrf.mxu0
        %2413 = vmatprep.mubr.bf16.mxu0 %v2276
        %2414 = vmatmul.mubr.bf16.gmra.mxu0 %v2275
        %v2415 = vpop.f32.mrf.mxu0
        %v2416 = vadd.f32 0.0, %v2415
        %v2417 = vpop.f32.mrf.mxu0
        %v2418 = vpop.f32.mrf.mxu0
        %v2419 = vadd.f32 0.0, %v2418
        %v2420 = vpop.f32.mrf.mxu0
        %2421 = vdwg.mxu0
        %v2422 = vld [vmem:[%s572 + $0x40] sm:$0xff]
        %v2423 = vld [vmem:[%s572 + $0x48] sm:$0xff]
        %v2424 = vld [vmem:[%s572 + $0x50] sm:$0xff]
        %v2425 = vld [vmem:[%s572 + $0x58] sm:$0xff]
        %2426 = vrot.lane.b32.xlu0 %v1197, 64
        %v2427 = vpop.permute.xlu0 %2426
        %2428 = vrot.lane.b32.xlu0 %v1198, 64
        %v2429 = vpop.permute.xlu0 %2428
        %2430 = vrot.lane.b32.xlu0 %v1199, 64
        %v2431 = vpop.permute.xlu0 %2430
        %2432 = vrot.lane.b32.xlu0 %v1200, 64
        %v2433 = vpop.permute.xlu0 %2432
        %2434 = vrot.lane.b32.xlu0 %v1201, 64
        %v2435 = vpop.permute.xlu0 %2434
        %2436 = vrot.lane.b32.xlu0 %v1202, 64
        %v2437 = vpop.permute.xlu0 %2436
        %2438 = vrot.lane.b32.xlu0 %v1203, 64
        %v2439 = vpop.permute.xlu0 %2438
        %2440 = vrot.lane.b32.xlu0 %v1204, 64
        %v2441 = vpop.permute.xlu0 %2440
        %v2446 = vunpack.c.l.b16 %v2422
        %v2447 = vunpack.c.h.b16 %v2422
        %v2448 = vunpack.c.l.b16 %v2423
        %v2449 = vunpack.c.h.b16 %v2423
        %v2450 = vunpack.c.l.b16 %v2424
        %v2451 = vunpack.c.h.b16 %v2424
        %v2452 = vunpack.c.l.b16 %v2425
        %v2453 = vunpack.c.h.b16 %v2425
        %v2454 = vpack.c.b16 %v2448, %v2446
        %v2455 = vpack.c.b16 %v2449, %v2447
        %v2456 = vpack.c.b16 %v2452, %v2450
        %v2457 = vpack.c.b16 %v2453, %v2451
        %v2463 = vsel %vm1225, %v2427, 0
        %v2466 = vsel %vm1225, %v2429, 0
        %v2469 = vsel %vm1225, %v2431, 0
        %v2472 = vsel %vm1225, %v2433, 0
        %v2475 = vsel %vm1225, %v2435, 0
        %v2478 = vsel %vm1225, %v2437, 0
        %v2481 = vsel %vm1225, %v2439, 0
        %v2484 = vsel %vm1225, %v2441, 0
        %2486 = vmatprep.subr.bf16.mxu0 0
        %2487 = vmatpush1.bf16.msra.mxu0 0
        %2488 = vmatprep.subr.bf16.mxu0 0
        %2489 = vmatpush1.bf16.msra.mxu0 0
        %2490 = vmatprep.subr.bf16.mxu0 0
        %2491 = vmatpush1.bf16.msra.mxu0 0
        %2492 = vmatprep.subr.bf16.mxu0 0
        %2493 = vmatpush1.bf16.msra.mxu0 0
        %2494 = vmatprep.subr.bf16.mxu0 0
        %2495 = vmatpush1.bf16.msra.mxu0 0
        %2496 = vmatprep.subr.bf16.mxu0 0
        %2497 = vmatpush1.bf16.msra.mxu0 0
        %2498 = vmatprep.subr.bf16.mxu0 %v2457
        %2499 = vmatpush1.bf16.msra.mxu0 %v2456
        %2500 = vmatprep.subr.bf16.mxu0 %v2455
        %2501 = vmatpush1.bf16.msra.mxu0 %v2454
        %2502 = vmatprep.subr.bf16.mxu0 0
        %2503 = vmatpush2.bf16.msra.mxu0 0
        %2504 = vmatprep.subr.bf16.mxu0 0
        %2505 = vmatpush2.bf16.msra.mxu0 0
        %2506 = vmatprep.subr.bf16.mxu0 0
        %2507 = vmatpush2.bf16.msra.mxu0 0
        %2508 = vmatprep.subr.bf16.mxu0 0
        %2509 = vmatpush2.bf16.msra.mxu0 0
        %2510 = vmatprep.subr.bf16.mxu0 0
        %2511 = vmatpush2.bf16.msra.mxu0 0
        %2512 = vmatprep.subr.bf16.mxu0 0
        %2513 = vmatpush2.bf16.msra.mxu0 0
        %2514 = vmatprep.subr.bf16.mxu0 0
        %2515 = vmatpush2.bf16.msra.mxu0 0
        %2516 = vmatprep.subr.bf16.mxu0 0
        %2517 = vmatpush2.bf16.msra.mxu0 0
        %2518 = vmatprep.mubr.bf16.mxu0 0
        %2519 = vmatmul.mubr.bf16.gmra.mxu0 %v2463
        %v2520 = vpop.f32.mrf.mxu0
        %v2521 = vadd.f32 0.0, %v2520
        %v2522 = vpop.f32.mrf.mxu0
        %v2523 = vadd.f32 0.0, %v2522
        %v2524 = vpop.f32.mrf.mxu0
        %v2525 = vadd.f32 0.0, %v2524
        %v2526 = vpop.f32.mrf.mxu0
        %v2527 = vadd.f32 0.0, %v2526
        %2528 = vmatprep.mubr.bf16.mxu0 0
        %2529 = vmatmul.mubr.bf16.gmra.mxu0 %v2466
        %v2530 = vpop.f32.mrf.mxu0
        %v2531 = vadd.f32 0.0, %v2530
        %v2532 = vpop.f32.mrf.mxu0
        %v2533 = vadd.f32 0.0, %v2532
        %v2534 = vpop.f32.mrf.mxu0
        %v2535 = vadd.f32 0.0, %v2534
        %v2536 = vpop.f32.mrf.mxu0
        %v2537 = vadd.f32 0.0, %v2536
        %2538 = vmatprep.mubr.bf16.mxu0 0
        %2539 = vmatmul.mubr.bf16.gmra.mxu0 %v2469
        %v2540 = vpop.f32.mrf.mxu0
        %v2541 = vadd.f32 0.0, %v2540
        %v2542 = vpop.f32.mrf.mxu0
        %v2543 = vadd.f32 0.0, %v2542
        %v2544 = vpop.f32.mrf.mxu0
        %v2545 = vadd.f32 0.0, %v2544
        %v2546 = vpop.f32.mrf.mxu0
        %v2547 = vadd.f32 0.0, %v2546
        %2548 = vmatprep.mubr.bf16.mxu0 0
        %2549 = vmatmul.mubr.bf16.gmra.mxu0 %v2472
        %v2550 = vpop.f32.mrf.mxu0
        %v2551 = vadd.f32 0.0, %v2550
        %v2552 = vpop.f32.mrf.mxu0
        %v2553 = vadd.f32 0.0, %v2552
        %v2554 = vpop.f32.mrf.mxu0
        %v2555 = vadd.f32 0.0, %v2554
        %v2556 = vpop.f32.mrf.mxu0
        %v2557 = vadd.f32 0.0, %v2556
        %2558 = vmatprep.mubr.bf16.mxu0 0
        %2559 = vmatmul.mubr.bf16.gmra.mxu0 %v2475
        %v2560 = vpop.f32.mrf.mxu0
        %v2561 = vadd.f32 0.0, %v2560
        %v2562 = vpop.f32.mrf.mxu0
        %v2563 = vadd.f32 0.0, %v2562
        %v2564 = vpop.f32.mrf.mxu0
        %v2565 = vadd.f32 0.0, %v2564
        %v2566 = vpop.f32.mrf.mxu0
        %v2567 = vadd.f32 0.0, %v2566
        %2568 = vmatprep.mubr.bf16.mxu0 0
        %2569 = vmatmul.mubr.bf16.gmra.mxu0 %v2478
        %v2570 = vpop.f32.mrf.mxu0
        %v2571 = vadd.f32 0.0, %v2570
        %v2572 = vpop.f32.mrf.mxu0
        %v2573 = vadd.f32 0.0, %v2572
        %v2574 = vpop.f32.mrf.mxu0
        %v2575 = vadd.f32 0.0, %v2574
        %v2576 = vpop.f32.mrf.mxu0
        %v2577 = vadd.f32 0.0, %v2576
        %2578 = vmatprep.mubr.bf16.mxu0 0
        %2579 = vmatmul.mubr.bf16.gmra.mxu0 %v2481
        %v2580 = vpop.f32.mrf.mxu0
        %v2581 = vadd.f32 0.0, %v2580
        %v2582 = vpop.f32.mrf.mxu0
        %v2583 = vadd.f32 0.0, %v2582
        %v2584 = vpop.f32.mrf.mxu0
        %v2585 = vadd.f32 0.0, %v2584
        %v2586 = vpop.f32.mrf.mxu0
        %v2587 = vadd.f32 0.0, %v2586
        %2588 = vmatprep.mubr.bf16.mxu0 0
        %2589 = vmatmul.mubr.bf16.gmra.mxu0 %v2484
        %v2590 = vpop.f32.mrf.mxu0
        %v2591 = vadd.f32 0.0, %v2590
        %v2592 = vpop.f32.mrf.mxu0
        %v2593 = vadd.f32 0.0, %v2592
        %v2594 = vpop.f32.mrf.mxu0
        %v2595 = vadd.f32 0.0, %v2594
        %v2596 = vpop.f32.mrf.mxu0
        %v2597 = vadd.f32 0.0, %v2596
        %2598 = vdwg.mxu0
        %v2599 = vmax.f32 %v2521, -28.284271
        %v2600 = vmax.f32 %v2523, -28.284271
        %v2601 = vmax.f32 %v2525, -28.284271
        %v2602 = vmax.f32 %v2527, -28.284271
        %v2603 = vmax.f32 %v2531, -28.284271
        %v2604 = vmax.f32 %v2533, -28.284271
        %v2605 = vmax.f32 %v2535, -28.284271
        %v2606 = vmax.f32 %v2537, -28.284271
        %v2607 = vmax.f32 %v2541, -28.284271
        %v2608 = vmax.f32 %v2543, -28.284271
        %v2609 = vmax.f32 %v2545, -28.284271
        %v2610 = vmax.f32 %v2547, -28.284271
        %v2611 = vmax.f32 %v2551, -28.284271
        %v2612 = vmax.f32 %v2553, -28.284271
        %v2613 = vmax.f32 %v2555, -28.284271
        %v2614 = vmax.f32 %v2557, -28.284271
        %v2615 = vmax.f32 %v2561, -28.284271
        %v2616 = vmax.f32 %v2563, -28.284271
        %v2617 = vmax.f32 %v2565, -28.284271
        %v2618 = vmax.f32 %v2567, -28.284271
        %v2619 = vmax.f32 %v2571, -28.284271
        %v2620 = vmax.f32 %v2573, -28.284271
        %v2621 = vmax.f32 %v2575, -28.284271
        %v2622 = vmax.f32 %v2577, -28.284271
        %v2623 = vmax.f32 %v2581, -28.284271
        %v2624 = vmax.f32 %v2583, -28.284271
        %v2625 = vmax.f32 %v2585, -28.284271
        %v2626 = vmax.f32 %v2587, -28.284271
        %v2627 = vmax.f32 %v2591, -28.284271
        %v2628 = vmax.f32 %v2593, -28.284271
        %v2629 = vmax.f32 %v2595, -28.284271
        %v2630 = vmax.f32 %v2597, -28.284271
        %v2631 = vmin.f32 %v2599, 28.284271
        %v2632 = vmin.f32 %v2600, 28.284271
        %v2633 = vmin.f32 %v2601, 28.284271
        %v2634 = vmin.f32 %v2602, 28.284271
        %v2635 = vmin.f32 %v2603, 28.284271
        %v2636 = vmin.f32 %v2604, 28.284271
        %v2637 = vmin.f32 %v2605, 28.284271
        %v2638 = vmin.f32 %v2606, 28.284271
        %v2639 = vmin.f32 %v2607, 28.284271
        %v2640 = vmin.f32 %v2608, 28.284271
        %v2641 = vmin.f32 %v2609, 28.284271
        %v2642 = vmin.f32 %v2610, 28.284271
        %v2643 = vmin.f32 %v2611, 28.284271
        %v2644 = vmin.f32 %v2612, 28.284271
        %v2645 = vmin.f32 %v2613, 28.284271
        %v2646 = vmin.f32 %v2614, 28.284271
        %v2647 = vmin.f32 %v2615, 28.284271
        %v2648 = vmin.f32 %v2616, 28.284271
        %v2649 = vmin.f32 %v2617, 28.284271
        %v2650 = vmin.f32 %v2618, 28.284271
        %v2651 = vmin.f32 %v2619, 28.284271
        %v2652 = vmin.f32 %v2620, 28.284271
        %v2653 = vmin.f32 %v2621, 28.284271
        %v2654 = vmin.f32 %v2622, 28.284271
        %v2655 = vmin.f32 %v2623, 28.284271
        %v2656 = vmin.f32 %v2624, 28.284271
        %v2657 = vmin.f32 %v2625, 28.284271
        %v2658 = vmin.f32 %v2626, 28.284271
        %v2659 = vmin.f32 %v2627, 28.284271
        %v2660 = vmin.f32 %v2628, 28.284271
        %v2661 = vmin.f32 %v2629, 28.284271
        %v2662 = vmin.f32 %v2630, 28.284271
        %v2663 = vsub.f32 %v2631, 28.284271
        %v2664 = vsub.f32 %v2632, 28.284271
        %v2665 = vsub.f32 %v2633, 28.284271
        %v2666 = vsub.f32 %v2634, 28.284271
        %v2667 = vsub.f32 %v2635, 28.284271
        %v2668 = vsub.f32 %v2636, 28.284271
        %v2669 = vsub.f32 %v2637, 28.284271
        %v2670 = vsub.f32 %v2638, 28.284271
        %v2671 = vsub.f32 %v2639, 28.284271
        %v2672 = vsub.f32 %v2640, 28.284271
        %v2673 = vsub.f32 %v2641, 28.284271
        %v2674 = vsub.f32 %v2642, 28.284271
        %v2675 = vsub.f32 %v2643, 28.284271
        %v2676 = vsub.f32 %v2644, 28.284271
        %v2677 = vsub.f32 %v2645, 28.284271
        %v2678 = vsub.f32 %v2646, 28.284271
        %v2679 = vsub.f32 %v2647, 28.284271
        %v2680 = vsub.f32 %v2648, 28.284271
        %v2681 = vsub.f32 %v2649, 28.284271
        %v2682 = vsub.f32 %v2650, 28.284271
        %v2683 = vsub.f32 %v2651, 28.284271
        %v2684 = vsub.f32 %v2652, 28.284271
        %v2685 = vsub.f32 %v2653, 28.284271
        %v2686 = vsub.f32 %v2654, 28.284271
        %v2687 = vsub.f32 %v2655, 28.284271
        %v2688 = vsub.f32 %v2656, 28.284271
        %v2689 = vsub.f32 %v2657, 28.284271
        %v2690 = vsub.f32 %v2658, 28.284271
        %v2691 = vsub.f32 %v2659, 28.284271
        %v2692 = vsub.f32 %v2660, 28.284271
        %v2693 = vsub.f32 %v2661, 28.284271
        %v2694 = vsub.f32 %v2662, 28.284271
        %v2695 = vmul.f32 %v2663, 1.442695
        %v2696 = vpow.pop %v2695
        %v2697 = vmul.f32 %v2664, 1.442695
        %v2698 = vpow.pop %v2697
        %v2699 = vmul.f32 %v2665, 1.442695
        %v2700 = vpow.pop %v2699
        %v2701 = vmul.f32 %v2666, 1.442695
        %v2702 = vpow.pop %v2701
        %v2703 = vmul.f32 %v2667, 1.442695
        %v2704 = vpow.pop %v2703
        %v2705 = vmul.f32 %v2668, 1.442695
        %v2706 = vpow.pop %v2705
        %v2707 = vmul.f32 %v2669, 1.442695
        %v2708 = vpow.pop %v2707
        %v2709 = vmul.f32 %v2670, 1.442695
        %v2710 = vpow.pop %v2709
        %v2711 = vmul.f32 %v2671, 1.442695
        %v2712 = vpow.pop %v2711
        %v2713 = vmul.f32 %v2672, 1.442695
        %v2714 = vpow.pop %v2713
        %v2715 = vmul.f32 %v2673, 1.442695
        %v2716 = vpow.pop %v2715
        %v2717 = vmul.f32 %v2674, 1.442695
        %v2718 = vpow.pop %v2717
        %v2719 = vmul.f32 %v2675, 1.442695
        %v2720 = vpow.pop %v2719
        %v2721 = vmul.f32 %v2676, 1.442695
        %v2722 = vpow.pop %v2721
        %v2723 = vmul.f32 %v2677, 1.442695
        %v2724 = vpow.pop %v2723
        %v2725 = vmul.f32 %v2678, 1.442695
        %v2726 = vpow.pop %v2725
        %v2727 = vmul.f32 %v2679, 1.442695
        %v2728 = vpow.pop %v2727
        %v2729 = vmul.f32 %v2680, 1.442695
        %v2730 = vpow.pop %v2729
        %v2731 = vmul.f32 %v2681, 1.442695
        %v2732 = vpow.pop %v2731
        %v2733 = vmul.f32 %v2682, 1.442695
        %v2734 = vpow.pop %v2733
        %v2735 = vmul.f32 %v2683, 1.442695
        %v2736 = vpow.pop %v2735
        %v2737 = vmul.f32 %v2684, 1.442695
        %v2738 = vpow.pop %v2737
        %v2739 = vmul.f32 %v2685, 1.442695
        %v2740 = vpow.pop %v2739
        %v2741 = vmul.f32 %v2686, 1.442695
        %v2742 = vpow.pop %v2741
        %v2743 = vmul.f32 %v2687, 1.442695
        %v2744 = vpow.pop %v2743
        %v2745 = vmul.f32 %v2688, 1.442695
        %v2746 = vpow.pop %v2745
        %v2747 = vmul.f32 %v2689, 1.442695
        %v2748 = vpow.pop %v2747
        %v2749 = vmul.f32 %v2690, 1.442695
        %v2750 = vpow.pop %v2749
        %v2751 = vmul.f32 %v2691, 1.442695
        %v2752 = vpow.pop %v2751
        %v2753 = vmul.f32 %v2692, 1.442695
        %v2754 = vpow.pop %v2753
        %v2755 = vmul.f32 %v2693, 1.442695
        %v2756 = vpow.pop %v2755
        %v2757 = vmul.f32 %v2694, 1.442695
        %v2758 = vpow.pop %v2757
        %v2759 = vmul.f32 %v2696, %v1129
        %v2760 = vmul.f32 %v2698, %v1130
        %v2761 = vmul.f32 %v2700, %v1131
        %v2762 = vmul.f32 %v2702, %v1132
        %v2763 = vmul.f32 %v2704, %v1133
        %v2764 = vmul.f32 %v2706, %v1134
        %v2765 = vmul.f32 %v2708, %v1135
        %v2766 = vmul.f32 %v2710, %v1136
        %v2767 = vmul.f32 %v2712, %v1137
        %v2768 = vmul.f32 %v2714, %v1138
        %v2769 = vmul.f32 %v2716, %v1139
        %v2770 = vmul.f32 %v2718, %v1140
        %v2771 = vmul.f32 %v2720, %v1141
        %v2772 = vmul.f32 %v2722, %v1142
        %v2773 = vmul.f32 %v2724, %v1143
        %v2774 = vmul.f32 %v2726, %v1144
        %v2775 = vmul.f32 %v2728, %v1145
        %v2776 = vmul.f32 %v2730, %v1146
        %v2777 = vmul.f32 %v2732, %v1147
        %v2778 = vmul.f32 %v2734, %v1148
        %v2779 = vmul.f32 %v2736, %v1149
        %v2780 = vmul.f32 %v2738, %v1150
        %v2781 = vmul.f32 %v2740, %v1151
        %v2782 = vmul.f32 %v2742, %v1152
        %v2783 = vmul.f32 %v2744, %v1153
        %v2784 = vmul.f32 %v2746, %v1154
        %v2785 = vmul.f32 %v2748, %v1155
        %v2786 = vmul.f32 %v2750, %v1156
        %v2787 = vmul.f32 %v2752, %v1157
        %v2788 = vmul.f32 %v2754, %v1158
        %v2789 = vmul.f32 %v2756, %v1159
        %v2790 = vmul.f32 %v2758, %v1160
        %v2791 = vadd.f32 %v2759, %v2760
        %2792 = vadd.xlane.f32.xlu0 %v2791
        %v2793 = vpop.xlane.xlu0 %2792
        %v2794 = vadd.f32 %v2761, %v2762
        %2795 = vadd.xlane.f32.xlu0 %v2794
        %v2796 = vpop.xlane.xlu0 %2795
        %v2797 = vadd.f32 %v2763, %v2764
        %2798 = vadd.xlane.f32.xlu0 %v2797
        %v2799 = vpop.xlane.xlu0 %2798
        %v2800 = vadd.f32 %v2765, %v2766
        %2801 = vadd.xlane.f32.xlu0 %v2800
        %v2802 = vpop.xlane.xlu0 %2801
        %v2803 = vadd.f32 %v2767, %v2768
        %2804 = vadd.xlane.f32.xlu0 %v2803
        %v2805 = vpop.xlane.xlu0 %2804
        %v2806 = vadd.f32 %v2769, %v2770
        %2807 = vadd.xlane.f32.xlu0 %v2806
        %v2808 = vpop.xlane.xlu0 %2807
        %v2809 = vadd.f32 %v2771, %v2772
        %2810 = vadd.xlane.f32.xlu0 %v2809
        %v2811 = vpop.xlane.xlu0 %2810
        %v2812 = vadd.f32 %v2773, %v2774
        %2813 = vadd.xlane.f32.xlu0 %v2812
        %v2814 = vpop.xlane.xlu0 %2813
        %v2815 = vadd.f32 %v2775, %v2776
        %2816 = vadd.xlane.f32.xlu0 %v2815
        %v2817 = vpop.xlane.xlu0 %2816
        %v2818 = vadd.f32 %v2777, %v2778
        %2819 = vadd.xlane.f32.xlu0 %v2818
        %v2820 = vpop.xlane.xlu0 %2819
        %v2821 = vadd.f32 %v2779, %v2780
        %2822 = vadd.xlane.f32.xlu0 %v2821
        %v2823 = vpop.xlane.xlu0 %2822
        %v2824 = vadd.f32 %v2781, %v2782
        %2825 = vadd.xlane.f32.xlu0 %v2824
        %v2826 = vpop.xlane.xlu0 %2825
        %v2827 = vadd.f32 %v2783, %v2784
        %2828 = vadd.xlane.f32.xlu0 %v2827
        %v2829 = vpop.xlane.xlu0 %2828
        %v2830 = vadd.f32 %v2785, %v2786
        %2831 = vadd.xlane.f32.xlu0 %v2830
        %v2832 = vpop.xlane.xlu0 %2831
        %v2833 = vadd.f32 %v2787, %v2788
        %2834 = vadd.xlane.f32.xlu0 %v2833
        %v2835 = vpop.xlane.xlu0 %2834
        %v2836 = vadd.f32 %v2789, %v2790
        %2837 = vadd.xlane.f32.xlu0 %v2836
        %v2838 = vpop.xlane.xlu0 %2837
        %v2839 = vpack.c.bf16 %v2761, %v2759
        %v2840 = vpack.c.bf16 %v2762, %v2760
        %v2841 = vpack.c.bf16 %v2765, %v2763
        %v2842 = vpack.c.bf16 %v2766, %v2764
        %v2843 = vpack.c.bf16 %v2769, %v2767
        %v2844 = vpack.c.bf16 %v2770, %v2768
        %v2845 = vpack.c.bf16 %v2773, %v2771
        %v2846 = vpack.c.bf16 %v2774, %v2772
        %v2847 = vpack.c.bf16 %v2777, %v2775
        %v2848 = vpack.c.bf16 %v2778, %v2776
        %v2849 = vpack.c.bf16 %v2781, %v2779
        %v2850 = vpack.c.bf16 %v2782, %v2780
        %v2851 = vpack.c.bf16 %v2785, %v2783
        %v2852 = vpack.c.bf16 %v2786, %v2784
        %v2853 = vpack.c.bf16 %v2789, %v2787
        %v2854 = vpack.c.bf16 %v2790, %v2788
        %2855 = vrot.lane.b32.xlu0 %v1715, 64
        %v2856 = vpop.permute.xlu0 %2855
        %2857 = vrot.lane.b32.xlu0 %v1716, 64
        %v2858 = vpop.permute.xlu0 %2857
        %2859 = vrot.lane.b32.xlu0 %v1717, 64
        %v2860 = vpop.permute.xlu0 %2859
        %2861 = vrot.lane.b32.xlu0 %v1718, 64
        %v2862 = vpop.permute.xlu0 %2861
        %2863 = vrot.lane.b32.xlu0 %v1719, 64
        %v2864 = vpop.permute.xlu0 %2863
        %2865 = vrot.lane.b32.xlu0 %v1720, 64
        %v2866 = vpop.permute.xlu0 %2865
        %2867 = vrot.lane.b32.xlu0 %v1721, 64
        %v2868 = vpop.permute.xlu0 %2867
        %2869 = vrot.lane.b32.xlu0 %v1722, 64
        %v2870 = vpop.permute.xlu0 %2869
        %2871 = vrot.lane.b32.xlu0 %v1723, 64
        %v2872 = vpop.permute.xlu0 %2871
        %2873 = vrot.lane.b32.xlu0 %v1724, 64
        %v2874 = vpop.permute.xlu0 %2873
        %2875 = vrot.lane.b32.xlu0 %v1725, 64
        %v2876 = vpop.permute.xlu0 %2875
        %2877 = vrot.lane.b32.xlu0 %v1726, 64
        %v2878 = vpop.permute.xlu0 %2877
        %2879 = vrot.lane.b32.xlu0 %v1727, 64
        %v2880 = vpop.permute.xlu0 %2879
        %2881 = vrot.lane.b32.xlu0 %v1728, 64
        %v2882 = vpop.permute.xlu0 %2881
        %2883 = vrot.lane.b32.xlu0 %v1729, 64
        %v2884 = vpop.permute.xlu0 %2883
        %2885 = vrot.lane.b32.xlu0 %v1730, 64
        %v2886 = vpop.permute.xlu0 %2885
        %2903 = vmatprep.subr.bf16.mxu0 0
        %2904 = vmatpush1.bf16.msra.mxu0 %v2870
        %2905 = vmatprep.subr.bf16.mxu0 0
        %2906 = vmatpush1.bf16.msra.mxu0 %v2868
        %2907 = vmatprep.subr.bf16.mxu0 0
        %2908 = vmatpush1.bf16.msra.mxu0 %v2866
        %2909 = vmatprep.subr.bf16.mxu0 0
        %2910 = vmatpush1.bf16.msra.mxu0 %v2864
        %2911 = vmatprep.subr.bf16.mxu0 0
        %2912 = vmatpush1.bf16.msra.mxu0 %v2862
        %2913 = vmatprep.subr.bf16.mxu0 0
        %2914 = vmatpush1.bf16.msra.mxu0 %v2860
        %2915 = vmatprep.subr.bf16.mxu0 0
        %2916 = vmatpush1.bf16.msra.mxu0 %v2858
        %2917 = vmatprep.subr.bf16.mxu0 0
        %2918 = vmatpush1.bf16.msra.mxu0 %v2856
        %2919 = vmatprep.subr.bf16.mxu0 0
        %2920 = vmatpush2.bf16.msra.mxu0 %v2886
        %2921 = vmatprep.subr.bf16.mxu0 0
        %2922 = vmatpush2.bf16.msra.mxu0 %v2884
        %2923 = vmatprep.subr.bf16.mxu0 0
        %2924 = vmatpush2.bf16.msra.mxu0 %v2882
        %2925 = vmatprep.subr.bf16.mxu0 0
        %2926 = vmatpush2.bf16.msra.mxu0 %v2880
        %2927 = vmatprep.subr.bf16.mxu0 0
        %2928 = vmatpush2.bf16.msra.mxu0 %v2878
        %2929 = vmatprep.subr.bf16.mxu0 0
        %2930 = vmatpush2.bf16.msra.mxu0 %v2876
        %2931 = vmatprep.subr.bf16.mxu0 0
        %2932 = vmatpush2.bf16.msra.mxu0 %v2874
        %2933 = vmatprep.subr.bf16.mxu0 0
        %2934 = vmatpush2.bf16.msra.mxu0 %v2872
        %2935 = vmatprep.mubr.bf16.mxu0 %v2840
        %2936 = vmatmul.mubr.bf16.gmra.mxu0 %v2839
        %v2937 = vpop.f32.mrf.mxu0
        %v2938 = vadd.f32 0.0, %v2937
        %v2939 = vpop.f32.mrf.mxu0
        %v2940 = vpop.f32.mrf.mxu0
        %v2941 = vadd.f32 0.0, %v2940
        %v2942 = vpop.f32.mrf.mxu0
        %2943 = vmatprep.mubr.bf16.mxu0 %v2842
        %2944 = vmatmul.mubr.bf16.gmra.mxu0 %v2841
        %v2945 = vpop.f32.mrf.mxu0
        %v2946 = vadd.f32 0.0, %v2945
        %v2947 = vpop.f32.mrf.mxu0
        %v2948 = vpop.f32.mrf.mxu0
        %v2949 = vadd.f32 0.0, %v2948
        %v2950 = vpop.f32.mrf.mxu0
        %2951 = vmatprep.mubr.bf16.mxu0 %v2844
        %2952 = vmatmul.mubr.bf16.gmra.mxu0 %v2843
        %v2953 = vpop.f32.mrf.mxu0
        %v2954 = vadd.f32 0.0, %v2953
        %v2955 = vpop.f32.mrf.mxu0
        %v2956 = vpop.f32.mrf.mxu0
        %v2957 = vadd.f32 0.0, %v2956
        %v2958 = vpop.f32.mrf.mxu0
        %2959 = vmatprep.mubr.bf16.mxu0 %v2846
        %2960 = vmatmul.mubr.bf16.gmra.mxu0 %v2845
        %v2961 = vpop.f32.mrf.mxu0
        %v2962 = vadd.f32 0.0, %v2961
        %v2963 = vpop.f32.mrf.mxu0
        %v2964 = vpop.f32.mrf.mxu0
        %v2965 = vadd.f32 0.0, %v2964
        %v2966 = vpop.f32.mrf.mxu0
        %2967 = vmatprep.mubr.bf16.mxu0 %v2848
        %2968 = vmatmul.mubr.bf16.gmra.mxu0 %v2847
        %v2969 = vpop.f32.mrf.mxu0
        %v2970 = vadd.f32 0.0, %v2969
        %v2971 = vpop.f32.mrf.mxu0
        %v2972 = vpop.f32.mrf.mxu0
        %v2973 = vadd.f32 0.0, %v2972
        %v2974 = vpop.f32.mrf.mxu0
        %2975 = vmatprep.mubr.bf16.mxu0 %v2850
        %2976 = vmatmul.mubr.bf16.gmra.mxu0 %v2849
        %v2977 = vpop.f32.mrf.mxu0
        %v2978 = vadd.f32 0.0, %v2977
        %v2979 = vpop.f32.mrf.mxu0
        %v2980 = vpop.f32.mrf.mxu0
        %v2981 = vadd.f32 0.0, %v2980
        %v2982 = vpop.f32.mrf.mxu0
        %2983 = vmatprep.mubr.bf16.mxu0 %v2852
        %2984 = vmatmul.mubr.bf16.gmra.mxu0 %v2851
        %v2985 = vpop.f32.mrf.mxu0
        %v2986 = vadd.f32 0.0, %v2985
        %v2987 = vpop.f32.mrf.mxu0
        %v2988 = vpop.f32.mrf.mxu0
        %v2989 = vadd.f32 0.0, %v2988
        %v2990 = vpop.f32.mrf.mxu0
        %2991 = vmatprep.mubr.bf16.mxu0 %v2854
        %2992 = vmatmul.mubr.bf16.gmra.mxu0 %v2853
        %v2993 = vpop.f32.mrf.mxu0
        %v2994 = vadd.f32 0.0, %v2993
        %v2995 = vpop.f32.mrf.mxu0
        %v2996 = vpop.f32.mrf.mxu0
        %v2997 = vadd.f32 0.0, %v2996
        %v2998 = vpop.f32.mrf.mxu0
        %2999 = vdwg.mxu0
        %v3000 = vld [vmem:[%s572 + $0x60] sm:$0xff]
        %v3001 = vld [vmem:[%s572 + $0x68] sm:$0xff]
        %v3002 = vld [vmem:[%s572 + $0x70] sm:$0xff]
        %v3003 = vld [vmem:[%s572 + $0x78] sm:$0xff]
        %3004 = vrot.lane.b32.xlu0 %v1197, 32
        %v3005 = vpop.permute.xlu0 %3004
        %3006 = vrot.lane.b32.xlu0 %v1198, 32
        %v3007 = vpop.permute.xlu0 %3006
        %3008 = vrot.lane.b32.xlu0 %v1199, 32
        %v3009 = vpop.permute.xlu0 %3008
        %3010 = vrot.lane.b32.xlu0 %v1200, 32
        %v3011 = vpop.permute.xlu0 %3010
        %3012 = vrot.lane.b32.xlu0 %v1201, 32
        %v3013 = vpop.permute.xlu0 %3012
        %3014 = vrot.lane.b32.xlu0 %v1202, 32
        %v3015 = vpop.permute.xlu0 %3014
        %3016 = vrot.lane.b32.xlu0 %v1203, 32
        %v3017 = vpop.permute.xlu0 %3016
        %3018 = vrot.lane.b32.xlu0 %v1204, 32
        %v3019 = vpop.permute.xlu0 %3018
        %v3024 = vunpack.c.l.b16 %v3000
        %v3025 = vunpack.c.h.b16 %v3000
        %v3026 = vunpack.c.l.b16 %v3001
        %v3027 = vunpack.c.h.b16 %v3001
        %v3028 = vunpack.c.l.b16 %v3002
        %v3029 = vunpack.c.h.b16 %v3002
        %v3030 = vunpack.c.l.b16 %v3003
        %v3031 = vunpack.c.h.b16 %v3003
        %v3032 = vpack.c.b16 %v3026, %v3024
        %v3033 = vpack.c.b16 %v3027, %v3025
        %v3034 = vpack.c.b16 %v3030, %v3028
        %v3035 = vpack.c.b16 %v3031, %v3029
        %v3041 = vsel %vm1225, %v3005, 0
        %v3044 = vsel %vm1225, %v3007, 0
        %v3047 = vsel %vm1225, %v3009, 0
        %v3050 = vsel %vm1225, %v3011, 0
        %v3053 = vsel %vm1225, %v3013, 0
        %v3056 = vsel %vm1225, %v3015, 0
        %v3059 = vsel %vm1225, %v3017, 0
        %v3062 = vsel %vm1225, %v3019, 0
        %3064 = vmatprep.subr.bf16.mxu0 0
        %3065 = vmatpush1.bf16.msra.mxu0 0
        %3066 = vmatprep.subr.bf16.mxu0 0
        %3067 = vmatpush1.bf16.msra.mxu0 0
        %3068 = vmatprep.subr.bf16.mxu0 0
        %3069 = vmatpush1.bf16.msra.mxu0 0
        %3070 = vmatprep.subr.bf16.mxu0 0
        %3071 = vmatpush1.bf16.msra.mxu0 0
        %3072 = vmatprep.subr.bf16.mxu0 0
        %3073 = vmatpush1.bf16.msra.mxu0 0
        %3074 = vmatprep.subr.bf16.mxu0 0
        %3075 = vmatpush1.bf16.msra.mxu0 0
        %3076 = vmatprep.subr.bf16.mxu0 %v3035
        %3077 = vmatpush1.bf16.msra.mxu0 %v3034
        %3078 = vmatprep.subr.bf16.mxu0 %v3033
        %3079 = vmatpush1.bf16.msra.mxu0 %v3032
        %3080 = vmatprep.subr.bf16.mxu0 0
        %3081 = vmatpush2.bf16.msra.mxu0 0
        %3082 = vmatprep.subr.bf16.mxu0 0
        %3083 = vmatpush2.bf16.msra.mxu0 0
        %3084 = vmatprep.subr.bf16.mxu0 0
        %3085 = vmatpush2.bf16.msra.mxu0 0
        %3086 = vmatprep.subr.bf16.mxu0 0
        %3087 = vmatpush2.bf16.msra.mxu0 0
        %3088 = vmatprep.subr.bf16.mxu0 0
        %3089 = vmatpush2.bf16.msra.mxu0 0
        %3090 = vmatprep.subr.bf16.mxu0 0
        %3091 = vmatpush2.bf16.msra.mxu0 0
        %3092 = vmatprep.subr.bf16.mxu0 0
        %3093 = vmatpush2.bf16.msra.mxu0 0
        %3094 = vmatprep.subr.bf16.mxu0 0
        %3095 = vmatpush2.bf16.msra.mxu0 0
        %3096 = vmatprep.mubr.bf16.mxu0 0
        %3097 = vmatmul.mubr.bf16.gmra.mxu0 %v3041
        %v3098 = vpop.f32.mrf.mxu0
        %v3099 = vadd.f32 0.0, %v3098
        %v3100 = vpop.f32.mrf.mxu0
        %v3101 = vadd.f32 0.0, %v3100
        %v3102 = vpop.f32.mrf.mxu0
        %v3103 = vadd.f32 0.0, %v3102
        %v3104 = vpop.f32.mrf.mxu0
        %v3105 = vadd.f32 0.0, %v3104
        %3106 = vmatprep.mubr.bf16.mxu0 0
        %3107 = vmatmul.mubr.bf16.gmra.mxu0 %v3044
        %v3108 = vpop.f32.mrf.mxu0
        %v3109 = vadd.f32 0.0, %v3108
        %v3110 = vpop.f32.mrf.mxu0
        %v3111 = vadd.f32 0.0, %v3110
        %v3112 = vpop.f32.mrf.mxu0
        %v3113 = vadd.f32 0.0, %v3112
        %v3114 = vpop.f32.mrf.mxu0
        %v3115 = vadd.f32 0.0, %v3114
        %3116 = vmatprep.mubr.bf16.mxu0 0
        %3117 = vmatmul.mubr.bf16.gmra.mxu0 %v3047
        %v3118 = vpop.f32.mrf.mxu0
        %v3119 = vadd.f32 0.0, %v3118
        %v3120 = vpop.f32.mrf.mxu0
        %v3121 = vadd.f32 0.0, %v3120
        %v3122 = vpop.f32.mrf.mxu0
        %v3123 = vadd.f32 0.0, %v3122
        %v3124 = vpop.f32.mrf.mxu0
        %v3125 = vadd.f32 0.0, %v3124
        %3126 = vmatprep.mubr.bf16.mxu0 0
        %3127 = vmatmul.mubr.bf16.gmra.mxu0 %v3050
        %v3128 = vpop.f32.mrf.mxu0
        %v3129 = vadd.f32 0.0, %v3128
        %v3130 = vpop.f32.mrf.mxu0
        %v3131 = vadd.f32 0.0, %v3130
        %v3132 = vpop.f32.mrf.mxu0
        %v3133 = vadd.f32 0.0, %v3132
        %v3134 = vpop.f32.mrf.mxu0
        %v3135 = vadd.f32 0.0, %v3134
        %3136 = vmatprep.mubr.bf16.mxu0 0
        %3137 = vmatmul.mubr.bf16.gmra.mxu0 %v3053
        %v3138 = vpop.f32.mrf.mxu0
        %v3139 = vadd.f32 0.0, %v3138
        %v3140 = vpop.f32.mrf.mxu0
        %v3141 = vadd.f32 0.0, %v3140
        %v3142 = vpop.f32.mrf.mxu0
        %v3143 = vadd.f32 0.0, %v3142
        %v3144 = vpop.f32.mrf.mxu0
        %v3145 = vadd.f32 0.0, %v3144
        %3146 = vmatprep.mubr.bf16.mxu0 0
        %3147 = vmatmul.mubr.bf16.gmra.mxu0 %v3056
        %v3148 = vpop.f32.mrf.mxu0
        %v3149 = vadd.f32 0.0, %v3148
        %v3150 = vpop.f32.mrf.mxu0
        %v3151 = vadd.f32 0.0, %v3150
        %v3152 = vpop.f32.mrf.mxu0
        %v3153 = vadd.f32 0.0, %v3152
        %v3154 = vpop.f32.mrf.mxu0
        %v3155 = vadd.f32 0.0, %v3154
        %3156 = vmatprep.mubr.bf16.mxu0 0
        %3157 = vmatmul.mubr.bf16.gmra.mxu0 %v3059
        %v3158 = vpop.f32.mrf.mxu0
        %v3159 = vadd.f32 0.0, %v3158
        %v3160 = vpop.f32.mrf.mxu0
        %v3161 = vadd.f32 0.0, %v3160
        %v3162 = vpop.f32.mrf.mxu0
        %v3163 = vadd.f32 0.0, %v3162
        %v3164 = vpop.f32.mrf.mxu0
        %v3165 = vadd.f32 0.0, %v3164
        %3166 = vmatprep.mubr.bf16.mxu0 0
        %3167 = vmatmul.mubr.bf16.gmra.mxu0 %v3062
        %v3168 = vpop.f32.mrf.mxu0
        %v3169 = vadd.f32 0.0, %v3168
        %v3170 = vpop.f32.mrf.mxu0
        %v3171 = vadd.f32 0.0, %v3170
        %v3172 = vpop.f32.mrf.mxu0
        %v3173 = vadd.f32 0.0, %v3172
        %v3174 = vpop.f32.mrf.mxu0
        %v3175 = vadd.f32 0.0, %v3174
        %3176 = vdwg.mxu0
        %v3177 = vmax.f32 %v3099, -28.284271
        %v3178 = vmax.f32 %v3101, -28.284271
        %v3179 = vmax.f32 %v3103, -28.284271
        %v3180 = vmax.f32 %v3105, -28.284271
        %v3181 = vmax.f32 %v3109, -28.284271
        %v3182 = vmax.f32 %v3111, -28.284271
        %v3183 = vmax.f32 %v3113, -28.284271
        %v3184 = vmax.f32 %v3115, -28.284271
        %v3185 = vmax.f32 %v3119, -28.284271
        %v3186 = vmax.f32 %v3121, -28.284271
        %v3187 = vmax.f32 %v3123, -28.284271
        %v3188 = vmax.f32 %v3125, -28.284271
        %v3189 = vmax.f32 %v3129, -28.284271
        %v3190 = vmax.f32 %v3131, -28.284271
        %v3191 = vmax.f32 %v3133, -28.284271
        %v3192 = vmax.f32 %v3135, -28.284271
        %v3193 = vmax.f32 %v3139, -28.284271
        %v3194 = vmax.f32 %v3141, -28.284271
        %v3195 = vmax.f32 %v3143, -28.284271
        %v3196 = vmax.f32 %v3145, -28.284271
        %v3197 = vmax.f32 %v3149, -28.284271
        %v3198 = vmax.f32 %v3151, -28.284271
        %v3199 = vmax.f32 %v3153, -28.284271
        %v3200 = vmax.f32 %v3155, -28.284271
        %v3201 = vmax.f32 %v3159, -28.284271
        %v3202 = vmax.f32 %v3161, -28.284271
        %v3203 = vmax.f32 %v3163, -28.284271
        %v3204 = vmax.f32 %v3165, -28.284271
        %v3205 = vmax.f32 %v3169, -28.284271
        %v3206 = vmax.f32 %v3171, -28.284271
        %v3207 = vmax.f32 %v3173, -28.284271
        %v3208 = vmax.f32 %v3175, -28.284271
        %v3209 = vmin.f32 %v3177, 28.284271
        %v3210 = vmin.f32 %v3178, 28.284271
        %v3211 = vmin.f32 %v3179, 28.284271
        %v3212 = vmin.f32 %v3180, 28.284271
        %v3213 = vmin.f32 %v3181, 28.284271
        %v3214 = vmin.f32 %v3182, 28.284271
        %v3215 = vmin.f32 %v3183, 28.284271
        %v3216 = vmin.f32 %v3184, 28.284271
        %v3217 = vmin.f32 %v3185, 28.284271
        %v3218 = vmin.f32 %v3186, 28.284271
        %v3219 = vmin.f32 %v3187, 28.284271
        %v3220 = vmin.f32 %v3188, 28.284271
        %v3221 = vmin.f32 %v3189, 28.284271
        %v3222 = vmin.f32 %v3190, 28.284271
        %v3223 = vmin.f32 %v3191, 28.284271
        %v3224 = vmin.f32 %v3192, 28.284271
        %v3225 = vmin.f32 %v3193, 28.284271
        %v3226 = vmin.f32 %v3194, 28.284271
        %v3227 = vmin.f32 %v3195, 28.284271
        %v3228 = vmin.f32 %v3196, 28.284271
        %v3229 = vmin.f32 %v3197, 28.284271
        %v3230 = vmin.f32 %v3198, 28.284271
        %v3231 = vmin.f32 %v3199, 28.284271
        %v3232 = vmin.f32 %v3200, 28.284271
        %v3233 = vmin.f32 %v3201, 28.284271
        %v3234 = vmin.f32 %v3202, 28.284271
        %v3235 = vmin.f32 %v3203, 28.284271
        %v3236 = vmin.f32 %v3204, 28.284271
        %v3237 = vmin.f32 %v3205, 28.284271
        %v3238 = vmin.f32 %v3206, 28.284271
        %v3239 = vmin.f32 %v3207, 28.284271
        %v3240 = vmin.f32 %v3208, 28.284271
        %v3241 = vsub.f32 %v3209, 28.284271
        %v3242 = vsub.f32 %v3210, 28.284271
        %v3243 = vsub.f32 %v3211, 28.284271
        %v3244 = vsub.f32 %v3212, 28.284271
        %v3245 = vsub.f32 %v3213, 28.284271
        %v3246 = vsub.f32 %v3214, 28.284271
        %v3247 = vsub.f32 %v3215, 28.284271
        %v3248 = vsub.f32 %v3216, 28.284271
        %v3249 = vsub.f32 %v3217, 28.284271
        %v3250 = vsub.f32 %v3218, 28.284271
        %v3251 = vsub.f32 %v3219, 28.284271
        %v3252 = vsub.f32 %v3220, 28.284271
        %v3253 = vsub.f32 %v3221, 28.284271
        %v3254 = vsub.f32 %v3222, 28.284271
        %v3255 = vsub.f32 %v3223, 28.284271
        %v3256 = vsub.f32 %v3224, 28.284271
        %v3257 = vsub.f32 %v3225, 28.284271
        %v3258 = vsub.f32 %v3226, 28.284271
        %v3259 = vsub.f32 %v3227, 28.284271
        %v3260 = vsub.f32 %v3228, 28.284271
        %v3261 = vsub.f32 %v3229, 28.284271
        %v3262 = vsub.f32 %v3230, 28.284271
        %v3263 = vsub.f32 %v3231, 28.284271
        %v3264 = vsub.f32 %v3232, 28.284271
        %v3265 = vsub.f32 %v3233, 28.284271
        %v3266 = vsub.f32 %v3234, 28.284271
        %v3267 = vsub.f32 %v3235, 28.284271
        %v3268 = vsub.f32 %v3236, 28.284271
        %v3269 = vsub.f32 %v3237, 28.284271
        %v3270 = vsub.f32 %v3238, 28.284271
        %v3271 = vsub.f32 %v3239, 28.284271
        %v3272 = vsub.f32 %v3240, 28.284271
        %v3273 = vmul.f32 %v3241, 1.442695
        %v3274 = vpow.pop %v3273
        %v3275 = vmul.f32 %v3242, 1.442695
        %v3276 = vpow.pop %v3275
        %v3277 = vmul.f32 %v3243, 1.442695
        %v3278 = vpow.pop %v3277
        %v3279 = vmul.f32 %v3244, 1.442695
        %v3280 = vpow.pop %v3279
        %v3281 = vmul.f32 %v3245, 1.442695
        %v3282 = vpow.pop %v3281
        %v3283 = vmul.f32 %v3246, 1.442695
        %v3284 = vpow.pop %v3283
        %v3285 = vmul.f32 %v3247, 1.442695
        %v3286 = vpow.pop %v3285
        %v3287 = vmul.f32 %v3248, 1.442695
        %v3288 = vpow.pop %v3287
        %v3289 = vmul.f32 %v3249, 1.442695
        %v3290 = vpow.pop %v3289
        %v3291 = vmul.f32 %v3250, 1.442695
        %v3292 = vpow.pop %v3291
        %v3293 = vmul.f32 %v3251, 1.442695
        %v3294 = vpow.pop %v3293
        %v3295 = vmul.f32 %v3252, 1.442695
        %v3296 = vpow.pop %v3295
        %v3297 = vmul.f32 %v3253, 1.442695
        %v3298 = vpow.pop %v3297
        %v3299 = vmul.f32 %v3254, 1.442695
        %v3300 = vpow.pop %v3299
        %v3301 = vmul.f32 %v3255, 1.442695
        %v3302 = vpow.pop %v3301
        %v3303 = vmul.f32 %v3256, 1.442695
        %v3304 = vpow.pop %v3303
        %v3305 = vmul.f32 %v3257, 1.442695
        %v3306 = vpow.pop %v3305
        %v3307 = vmul.f32 %v3258, 1.442695
        %v3308 = vpow.pop %v3307
        %v3309 = vmul.f32 %v3259, 1.442695
        %v3310 = vpow.pop %v3309
        %v3311 = vmul.f32 %v3260, 1.442695
        %v3312 = vpow.pop %v3311
        %v3313 = vmul.f32 %v3261, 1.442695
        %v3314 = vpow.pop %v3313
        %v3315 = vmul.f32 %v3262, 1.442695
        %v3316 = vpow.pop %v3315
        %v3317 = vmul.f32 %v3263, 1.442695
        %v3318 = vpow.pop %v3317
        %v3319 = vmul.f32 %v3264, 1.442695
        %v3320 = vpow.pop %v3319
        %v3321 = vmul.f32 %v3265, 1.442695
        %v3322 = vpow.pop %v3321
        %v3323 = vmul.f32 %v3266, 1.442695
        %v3324 = vpow.pop %v3323
        %v3325 = vmul.f32 %v3267, 1.442695
        %v3326 = vpow.pop %v3325
        %v3327 = vmul.f32 %v3268, 1.442695
        %v3328 = vpow.pop %v3327
        %v3329 = vmul.f32 %v3269, 1.442695
        %v3330 = vpow.pop %v3329
        %v3331 = vmul.f32 %v3270, 1.442695
        %v3332 = vpow.pop %v3331
        %v3333 = vmul.f32 %v3271, 1.442695
        %v3334 = vpow.pop %v3333
        %v3335 = vmul.f32 %v3272, 1.442695
        %v3336 = vpow.pop %v3335
        %v3337 = vmul.f32 %v3274, %v1129
        %v3338 = vmul.f32 %v3276, %v1130
        %v3339 = vmul.f32 %v3278, %v1131
        %v3340 = vmul.f32 %v3280, %v1132
        %v3341 = vmul.f32 %v3282, %v1133
        %v3342 = vmul.f32 %v3284, %v1134
        %v3343 = vmul.f32 %v3286, %v1135
        %v3344 = vmul.f32 %v3288, %v1136
        %v3345 = vmul.f32 %v3290, %v1137
        %v3346 = vmul.f32 %v3292, %v1138
        %v3347 = vmul.f32 %v3294, %v1139
        %v3348 = vmul.f32 %v3296, %v1140
        %v3349 = vmul.f32 %v3298, %v1141
        %v3350 = vmul.f32 %v3300, %v1142
        %v3351 = vmul.f32 %v3302, %v1143
        %v3352 = vmul.f32 %v3304, %v1144
        %v3353 = vmul.f32 %v3306, %v1145
        %v3354 = vmul.f32 %v3308, %v1146
        %v3355 = vmul.f32 %v3310, %v1147
        %v3356 = vmul.f32 %v3312, %v1148
        %v3357 = vmul.f32 %v3314, %v1149
        %v3358 = vmul.f32 %v3316, %v1150
        %v3359 = vmul.f32 %v3318, %v1151
        %v3360 = vmul.f32 %v3320, %v1152
        %v3361 = vmul.f32 %v3322, %v1153
        %v3362 = vmul.f32 %v3324, %v1154
        %v3363 = vmul.f32 %v3326, %v1155
        %v3364 = vmul.f32 %v3328, %v1156
        %v3365 = vmul.f32 %v3330, %v1157
        %v3366 = vmul.f32 %v3332, %v1158
        %v3367 = vmul.f32 %v3334, %v1159
        %v3368 = vmul.f32 %v3336, %v1160
        %v3369 = vadd.f32 %v3337, %v3338
        %3370 = vadd.xlane.f32.xlu0 %v3369
        %v3371 = vpop.xlane.xlu0 %3370
        %v3372 = vadd.f32 %v3339, %v3340
        %3373 = vadd.xlane.f32.xlu0 %v3372
        %v3374 = vpop.xlane.xlu0 %3373
        %v3375 = vadd.f32 %v3341, %v3342
        %3376 = vadd.xlane.f32.xlu0 %v3375
        %v3377 = vpop.xlane.xlu0 %3376
        %v3378 = vadd.f32 %v3343, %v3344
        %3379 = vadd.xlane.f32.xlu0 %v3378
        %v3380 = vpop.xlane.xlu0 %3379
        %v3381 = vadd.f32 %v3345, %v3346
        %3382 = vadd.xlane.f32.xlu0 %v3381
        %v3383 = vpop.xlane.xlu0 %3382
        %v3384 = vadd.f32 %v3347, %v3348
        %3385 = vadd.xlane.f32.xlu0 %v3384
        %v3386 = vpop.xlane.xlu0 %3385
        %v3387 = vadd.f32 %v3349, %v3350
        %3388 = vadd.xlane.f32.xlu0 %v3387
        %v3389 = vpop.xlane.xlu0 %3388
        %v3390 = vadd.f32 %v3351, %v3352
        %3391 = vadd.xlane.f32.xlu0 %v3390
        %v3392 = vpop.xlane.xlu0 %3391
        %v3393 = vadd.f32 %v3353, %v3354
        %3394 = vadd.xlane.f32.xlu0 %v3393
        %v3395 = vpop.xlane.xlu0 %3394
        %v3396 = vadd.f32 %v3355, %v3356
        %3397 = vadd.xlane.f32.xlu0 %v3396
        %v3398 = vpop.xlane.xlu0 %3397
        %v3399 = vadd.f32 %v3357, %v3358
        %3400 = vadd.xlane.f32.xlu0 %v3399
        %v3401 = vpop.xlane.xlu0 %3400
        %v3402 = vadd.f32 %v3359, %v3360
        %3403 = vadd.xlane.f32.xlu0 %v3402
        %v3404 = vpop.xlane.xlu0 %3403
        %v3405 = vadd.f32 %v3361, %v3362
        %3406 = vadd.xlane.f32.xlu0 %v3405
        %v3407 = vpop.xlane.xlu0 %3406
        %v3408 = vadd.f32 %v3363, %v3364
        %3409 = vadd.xlane.f32.xlu0 %v3408
        %v3410 = vpop.xlane.xlu0 %3409
        %v3411 = vadd.f32 %v3365, %v3366
        %3412 = vadd.xlane.f32.xlu0 %v3411
        %v3413 = vpop.xlane.xlu0 %3412
        %v3414 = vadd.f32 %v3367, %v3368
        %3415 = vadd.xlane.f32.xlu0 %v3414
        %v3416 = vpop.xlane.xlu0 %3415
        %v3417 = vpack.c.bf16 %v3339, %v3337
        %v3418 = vpack.c.bf16 %v3340, %v3338
        %v3419 = vpack.c.bf16 %v3343, %v3341
        %v3420 = vpack.c.bf16 %v3344, %v3342
        %v3421 = vpack.c.bf16 %v3347, %v3345
        %v3422 = vpack.c.bf16 %v3348, %v3346
        %v3423 = vpack.c.bf16 %v3351, %v3349
        %v3424 = vpack.c.bf16 %v3352, %v3350
        %v3425 = vpack.c.bf16 %v3355, %v3353
        %v3426 = vpack.c.bf16 %v3356, %v3354
        %v3427 = vpack.c.bf16 %v3359, %v3357
        %v3428 = vpack.c.bf16 %v3360, %v3358
        %v3429 = vpack.c.bf16 %v3363, %v3361
        %v3430 = vpack.c.bf16 %v3364, %v3362
        %v3431 = vpack.c.bf16 %v3367, %v3365
        %v3432 = vpack.c.bf16 %v3368, %v3366
        %3433 = vrot.lane.b32.xlu0 %v1715, 32
        %v3434 = vpop.permute.xlu0 %3433
        %3435 = vrot.lane.b32.xlu0 %v1716, 32
        %v3436 = vpop.permute.xlu0 %3435
        %3437 = vrot.lane.b32.xlu0 %v1717, 32
        %v3438 = vpop.permute.xlu0 %3437
        %3439 = vrot.lane.b32.xlu0 %v1718, 32
        %v3440 = vpop.permute.xlu0 %3439
        %3441 = vrot.lane.b32.xlu0 %v1719, 32
        %v3442 = vpop.permute.xlu0 %3441
        %3443 = vrot.lane.b32.xlu0 %v1720, 32
        %v3444 = vpop.permute.xlu0 %3443
        %3445 = vrot.lane.b32.xlu0 %v1721, 32
        %v3446 = vpop.permute.xlu0 %3445
        %3447 = vrot.lane.b32.xlu0 %v1722, 32
        %v3448 = vpop.permute.xlu0 %3447
        %3449 = vrot.lane.b32.xlu0 %v1723, 32
        %v3450 = vpop.permute.xlu0 %3449
        %3451 = vrot.lane.b32.xlu0 %v1724, 32
        %v3452 = vpop.permute.xlu0 %3451
        %3453 = vrot.lane.b32.xlu0 %v1725, 32
        %v3454 = vpop.permute.xlu0 %3453
        %3455 = vrot.lane.b32.xlu0 %v1726, 32
        %v3456 = vpop.permute.xlu0 %3455
        %3457 = vrot.lane.b32.xlu0 %v1727, 32
        %v3458 = vpop.permute.xlu0 %3457
        %3459 = vrot.lane.b32.xlu0 %v1728, 32
        %v3460 = vpop.permute.xlu0 %3459
        %3461 = vrot.lane.b32.xlu0 %v1729, 32
        %v3462 = vpop.permute.xlu0 %3461
        %3463 = vrot.lane.b32.xlu0 %v1730, 32
        %v3464 = vpop.permute.xlu0 %3463
        %3481 = vmatprep.subr.bf16.mxu0 0
        %3482 = vmatpush1.bf16.msra.mxu0 %v3448
        %3483 = vmatprep.subr.bf16.mxu0 0
        %3484 = vmatpush1.bf16.msra.mxu0 %v3446
        %3485 = vmatprep.subr.bf16.mxu0 0
        %3486 = vmatpush1.bf16.msra.mxu0 %v3444
        %3487 = vmatprep.subr.bf16.mxu0 0
        %3488 = vmatpush1.bf16.msra.mxu0 %v3442
        %3489 = vmatprep.subr.bf16.mxu0 0
        %3490 = vmatpush1.bf16.msra.mxu0 %v3440
        %3491 = vmatprep.subr.bf16.mxu0 0
        %3492 = vmatpush1.bf16.msra.mxu0 %v3438
        %3493 = vmatprep.subr.bf16.mxu0 0
        %3494 = vmatpush1.bf16.msra.mxu0 %v3436
        %3495 = vmatprep.subr.bf16.mxu0 0
        %3496 = vmatpush1.bf16.msra.mxu0 %v3434
        %3497 = vmatprep.subr.bf16.mxu0 0
        %3498 = vmatpush2.bf16.msra.mxu0 %v3464
        %3499 = vmatprep.subr.bf16.mxu0 0
        %3500 = vmatpush2.bf16.msra.mxu0 %v3462
        %3501 = vmatprep.subr.bf16.mxu0 0
        %3502 = vmatpush2.bf16.msra.mxu0 %v3460
        %3503 = vmatprep.subr.bf16.mxu0 0
        %3504 = vmatpush2.bf16.msra.mxu0 %v3458
        %3505 = vmatprep.subr.bf16.mxu0 0
        %3506 = vmatpush2.bf16.msra.mxu0 %v3456
        %3507 = vmatprep.subr.bf16.mxu0 0
        %3508 = vmatpush2.bf16.msra.mxu0 %v3454
        %3509 = vmatprep.subr.bf16.mxu0 0
        %3510 = vmatpush2.bf16.msra.mxu0 %v3452
        %3511 = vmatprep.subr.bf16.mxu0 0
        %3512 = vmatpush2.bf16.msra.mxu0 %v3450
        %3513 = vmatprep.mubr.bf16.mxu0 %v3418
        %3514 = vmatmul.mubr.bf16.gmra.mxu0 %v3417
        %v3515 = vpop.f32.mrf.mxu0
        %v3516 = vadd.f32 0.0, %v3515
        %v3517 = vpop.f32.mrf.mxu0
        %v3518 = vpop.f32.mrf.mxu0
        %v3519 = vadd.f32 0.0, %v3518
        %v3520 = vpop.f32.mrf.mxu0
        %3521 = vmatprep.mubr.bf16.mxu0 %v3420
        %3522 = vmatmul.mubr.bf16.gmra.mxu0 %v3419
        %v3523 = vpop.f32.mrf.mxu0
        %v3524 = vadd.f32 0.0, %v3523
        %v3525 = vpop.f32.mrf.mxu0
        %v3526 = vpop.f32.mrf.mxu0
        %v3527 = vadd.f32 0.0, %v3526
        %v3528 = vpop.f32.mrf.mxu0
        %3529 = vmatprep.mubr.bf16.mxu0 %v3422
        %3530 = vmatmul.mubr.bf16.gmra.mxu0 %v3421
        %v3531 = vpop.f32.mrf.mxu0
        %v3532 = vadd.f32 0.0, %v3531
        %v3533 = vpop.f32.mrf.mxu0
        %v3534 = vpop.f32.mrf.mxu0
        %v3535 = vadd.f32 0.0, %v3534
        %v3536 = vpop.f32.mrf.mxu0
        %3537 = vmatprep.mubr.bf16.mxu0 %v3424
        %3538 = vmatmul.mubr.bf16.gmra.mxu0 %v3423
        %v3539 = vpop.f32.mrf.mxu0
        %v3540 = vadd.f32 0.0, %v3539
        %v3541 = vpop.f32.mrf.mxu0
        %v3542 = vpop.f32.mrf.mxu0
        %v3543 = vadd.f32 0.0, %v3542
        %v3544 = vpop.f32.mrf.mxu0
        %3545 = vmatprep.mubr.bf16.mxu0 %v3426
        %3546 = vmatmul.mubr.bf16.gmra.mxu0 %v3425
        %v3547 = vpop.f32.mrf.mxu0
        %v3548 = vadd.f32 0.0, %v3547
        %v3549 = vpop.f32.mrf.mxu0
        %v3550 = vpop.f32.mrf.mxu0
        %v3551 = vadd.f32 0.0, %v3550
        %v3552 = vpop.f32.mrf.mxu0
        %3553 = vmatprep.mubr.bf16.mxu0 %v3428
        %3554 = vmatmul.mubr.bf16.gmra.mxu0 %v3427
        %v3555 = vpop.f32.mrf.mxu0
        %v3556 = vadd.f32 0.0, %v3555
        %v3557 = vpop.f32.mrf.mxu0
        %v3558 = vpop.f32.mrf.mxu0
        %v3559 = vadd.f32 0.0, %v3558
        %v3560 = vpop.f32.mrf.mxu0
        %3561 = vmatprep.mubr.bf16.mxu0 %v3430
        %3562 = vmatmul.mubr.bf16.gmra.mxu0 %v3429
        %v3563 = vpop.f32.mrf.mxu0
        %v3564 = vadd.f32 0.0, %v3563
        %v3565 = vpop.f32.mrf.mxu0
        %v3566 = vpop.f32.mrf.mxu0
        %v3567 = vadd.f32 0.0, %v3566
        %v3568 = vpop.f32.mrf.mxu0
        %3569 = vmatprep.mubr.bf16.mxu0 %v3432
        %3570 = vmatmul.mubr.bf16.gmra.mxu0 %v3431
        %v3571 = vpop.f32.mrf.mxu0
        %v3572 = vadd.f32 0.0, %v3571
        %v3573 = vpop.f32.mrf.mxu0
        %v3574 = vpop.f32.mrf.mxu0
        %v3575 = vadd.f32 0.0, %v3574
        %v3576 = vpop.f32.mrf.mxu0
        %3577 = vdwg.mxu0
        %v3578 = vld [vmem:[#allocation5] sm:$0xff]
        %v3579 = vld [vmem:[#allocation5 + $0x8] sm:$0xff]
        %v3580 = vld [vmem:[#allocation5 + $0x10] sm:$0xff]
        %v3581 = vld [vmem:[#allocation5 + $0x18] sm:$0xff]
        %v3582 = vld [vmem:[#allocation5 + $0x20] sm:$0xff]
        %v3583 = vld [vmem:[#allocation5 + $0x28] sm:$0xff]
        %v3584 = vld [vmem:[#allocation5 + $0x30] sm:$0xff]
        %v3585 = vld [vmem:[#allocation5 + $0x38] sm:$0xff]
        %v3586 = vld [vmem:[#allocation5 + $0x40] sm:$0xff]
        %v3587 = vld [vmem:[#allocation5 + $0x48] sm:$0xff]
        %v3588 = vld [vmem:[#allocation5 + $0x50] sm:$0xff]
        %v3589 = vld [vmem:[#allocation5 + $0x58] sm:$0xff]
        %v3590 = vld [vmem:[#allocation5 + $0x60] sm:$0xff]
        %v3591 = vld [vmem:[#allocation5 + $0x68] sm:$0xff]
        %v3592 = vld [vmem:[#allocation5 + $0x70] sm:$0xff]
        %v3593 = vld [vmem:[#allocation5 + $0x78] sm:$0xff]
        %3610 = vrot.lane.b32.xlu0 %v2360, 32
        %v3611 = vpop.permute.xlu0 %3610
        %3612 = vrot.lane.b32.xlu0 %v2363, 32
        %v3613 = vpop.permute.xlu0 %3612
        %3614 = vrot.lane.b32.xlu0 %v2368, 32
        %v3615 = vpop.permute.xlu0 %3614
        %3616 = vrot.lane.b32.xlu0 %v2371, 32
        %v3617 = vpop.permute.xlu0 %3616
        %3618 = vrot.lane.b32.xlu0 %v2376, 32
        %v3619 = vpop.permute.xlu0 %3618
        %3620 = vrot.lane.b32.xlu0 %v2379, 32
        %v3621 = vpop.permute.xlu0 %3620
        %3622 = vrot.lane.b32.xlu0 %v2384, 32
        %v3623 = vpop.permute.xlu0 %3622
        %3624 = vrot.lane.b32.xlu0 %v2387, 32
        %v3625 = vpop.permute.xlu0 %3624
        %3626 = vrot.lane.b32.xlu0 %v2392, 32
        %v3627 = vpop.permute.xlu0 %3626
        %3628 = vrot.lane.b32.xlu0 %v2395, 32
        %v3629 = vpop.permute.xlu0 %3628
        %3630 = vrot.lane.b32.xlu0 %v2400, 32
        %v3631 = vpop.permute.xlu0 %3630
        %3632 = vrot.lane.b32.xlu0 %v2403, 32
        %v3633 = vpop.permute.xlu0 %3632
        %3634 = vrot.lane.b32.xlu0 %v2408, 32
        %v3635 = vpop.permute.xlu0 %3634
        %3636 = vrot.lane.b32.xlu0 %v2411, 32
        %v3637 = vpop.permute.xlu0 %3636
        %3638 = vrot.lane.b32.xlu0 %v2416, 32
        %v3639 = vpop.permute.xlu0 %3638
        %3640 = vrot.lane.b32.xlu0 %v2419, 32
        %v3641 = vpop.permute.xlu0 %3640
        %3674 = vrot.lane.b32.xlu0 %v2938, 64
        %v3675 = vpop.permute.xlu0 %3674
        %3676 = vrot.lane.b32.xlu0 %v2941, 64
        %v3677 = vpop.permute.xlu0 %3676
        %3678 = vrot.lane.b32.xlu0 %v2946, 64
        %v3679 = vpop.permute.xlu0 %3678
        %3680 = vrot.lane.b32.xlu0 %v2949, 64
        %v3681 = vpop.permute.xlu0 %3680
        %3682 = vrot.lane.b32.xlu0 %v2954, 64
        %v3683 = vpop.permute.xlu0 %3682
        %3684 = vrot.lane.b32.xlu0 %v2957, 64
        %v3685 = vpop.permute.xlu0 %3684
        %3686 = vrot.lane.b32.xlu0 %v2962, 64
        %v3687 = vpop.permute.xlu0 %3686
        %3688 = vrot.lane.b32.xlu0 %v2965, 64
        %v3689 = vpop.permute.xlu0 %3688
        %3690 = vrot.lane.b32.xlu0 %v2970, 64
        %v3691 = vpop.permute.xlu0 %3690
        %3692 = vrot.lane.b32.xlu0 %v2973, 64
        %v3693 = vpop.permute.xlu0 %3692
        %3694 = vrot.lane.b32.xlu0 %v2978, 64
        %v3695 = vpop.permute.xlu0 %3694
        %3696 = vrot.lane.b32.xlu0 %v2981, 64
        %v3697 = vpop.permute.xlu0 %3696
        %3698 = vrot.lane.b32.xlu0 %v2986, 64
        %v3699 = vpop.permute.xlu0 %3698
        %3700 = vrot.lane.b32.xlu0 %v2989, 64
        %v3701 = vpop.permute.xlu0 %3700
        %3702 = vrot.lane.b32.xlu0 %v2994, 64
        %v3703 = vpop.permute.xlu0 %3702
        %3704 = vrot.lane.b32.xlu0 %v2997, 64
        %v3705 = vpop.permute.xlu0 %3704
        %3738 = vrot.lane.b32.xlu0 %v3516, 96
        %v3739 = vpop.permute.xlu0 %3738
        %3740 = vrot.lane.b32.xlu0 %v3519, 96
        %v3741 = vpop.permute.xlu0 %3740
        %3742 = vrot.lane.b32.xlu0 %v3524, 96
        %v3743 = vpop.permute.xlu0 %3742
        %3744 = vrot.lane.b32.xlu0 %v3527, 96
        %v3745 = vpop.permute.xlu0 %3744
        %3746 = vrot.lane.b32.xlu0 %v3532, 96
        %v3747 = vpop.permute.xlu0 %3746
        %3748 = vrot.lane.b32.xlu0 %v3535, 96
        %v3749 = vpop.permute.xlu0 %3748
        %3750 = vrot.lane.b32.xlu0 %v3540, 96
        %v3751 = vpop.permute.xlu0 %3750
        %3752 = vrot.lane.b32.xlu0 %v3543, 96
        %v3753 = vpop.permute.xlu0 %3752
        %3754 = vrot.lane.b32.xlu0 %v3548, 96
        %v3755 = vpop.permute.xlu0 %3754
        %3756 = vrot.lane.b32.xlu0 %v3551, 96
        %v3757 = vpop.permute.xlu0 %3756
        %3758 = vrot.lane.b32.xlu0 %v3556, 96
        %v3759 = vpop.permute.xlu0 %3758
        %3760 = vrot.lane.b32.xlu0 %v3559, 96
        %v3761 = vpop.permute.xlu0 %3760
        %3762 = vrot.lane.b32.xlu0 %v3564, 96
        %v3763 = vpop.permute.xlu0 %3762
        %3764 = vrot.lane.b32.xlu0 %v3567, 96
        %v3765 = vpop.permute.xlu0 %3764
        %3766 = vrot.lane.b32.xlu0 %v3572, 96
        %v3767 = vpop.permute.xlu0 %3766
        %3768 = vrot.lane.b32.xlu0 %v3575, 96
        %v3769 = vpop.permute.xlu0 %3768
        %v3786 = vsel %vm1225, %v1782, %v3611
        %v3787 = vsel %vm1225, %v1785, %v3613
        %v3788 = vsel %vm1225, %v1790, %v3615
        %v3789 = vsel %vm1225, %v1793, %v3617
        %v3790 = vsel %vm1225, %v1798, %v3619
        %v3791 = vsel %vm1225, %v1801, %v3621
        %v3792 = vsel %vm1225, %v1806, %v3623
        %v3793 = vsel %vm1225, %v1809, %v3625
        %v3794 = vsel %vm1225, %v1814, %v3627
        %v3795 = vsel %vm1225, %v1817, %v3629
        %v3796 = vsel %vm1225, %v1822, %v3631
        %v3797 = vsel %vm1225, %v1825, %v3633
        %v3798 = vsel %vm1225, %v1830, %v3635
        %v3799 = vsel %vm1225, %v1833, %v3637
        %v3800 = vsel %vm1225, %v1838, %v3639
        %v3801 = vsel %vm1225, %v1841, %v3641
        %vm3802 = vcmask 523264
        %v3803 = vsel %vm3802, %v3786, %v3675
        %v3804 = vsel %vm3802, %v3787, %v3677
        %v3805 = vsel %vm3802, %v3788, %v3679
        %v3806 = vsel %vm3802, %v3789, %v3681
        %v3807 = vsel %vm3802, %v3790, %v3683
        %v3808 = vsel %vm3802, %v3791, %v3685
        %v3809 = vsel %vm3802, %v3792, %v3687
        %v3810 = vsel %vm3802, %v3793, %v3689
        %v3811 = vsel %vm3802, %v3794, %v3691
        %v3812 = vsel %vm3802, %v3795, %v3693
        %v3813 = vsel %vm3802, %v3796, %v3695
        %v3814 = vsel %vm3802, %v3797, %v3697
        %v3815 = vsel %vm3802, %v3798, %v3699
        %v3816 = vsel %vm3802, %v3799, %v3701
        %v3817 = vsel %vm3802, %v3800, %v3703
        %v3818 = vsel %vm3802, %v3801, %v3705
        %vm3819 = vcmask 785408
        %v3820 = vsel %vm3819, %v3803, %v3739
        %v3821 = vsel %vm3819, %v3804, %v3741
        %v3822 = vsel %vm3819, %v3805, %v3743
        %v3823 = vsel %vm3819, %v3806, %v3745
        %v3824 = vsel %vm3819, %v3807, %v3747
        %v3825 = vsel %vm3819, %v3808, %v3749
        %v3826 = vsel %vm3819, %v3809, %v3751
        %v3827 = vsel %vm3819, %v3810, %v3753
        %v3828 = vsel %vm3819, %v3811, %v3755
        %v3829 = vsel %vm3819, %v3812, %v3757
        %v3830 = vsel %vm3819, %v3813, %v3759
        %v3831 = vsel %vm3819, %v3814, %v3761
        %v3832 = vsel %vm3819, %v3815, %v3763
        %v3833 = vsel %vm3819, %v3816, %v3765
        %v3834 = vsel %vm3819, %v3817, %v3767
        %v3835 = vsel %vm3819, %v3818, %v3769
        %v3836 = vadd.f32 %v3578, %v3820
        %v3837 = vadd.f32 %v3579, %v3821
        %v3838 = vadd.f32 %v3580, %v3822
        %v3839 = vadd.f32 %v3581, %v3823
        %v3840 = vadd.f32 %v3582, %v3824
        %v3841 = vadd.f32 %v3583, %v3825
        %v3842 = vadd.f32 %v3584, %v3826
        %v3843 = vadd.f32 %v3585, %v3827
        %v3844 = vadd.f32 %v3586, %v3828
        %v3845 = vadd.f32 %v3587, %v3829
        %v3846 = vadd.f32 %v3588, %v3830
        %v3847 = vadd.f32 %v3589, %v3831
        %v3848 = vadd.f32 %v3590, %v3832
        %v3849 = vadd.f32 %v3591, %v3833
        %v3850 = vadd.f32 %v3592, %v3834
        %v3851 = vadd.f32 %v3593, %v3835
        %3852 = vst [vmem:[#allocation5] sm:$0xff] %v3836
        %3853 = vst [vmem:[#allocation5 + $0x8] sm:$0xff] %v3837
        %3854 = vst [vmem:[#allocation5 + $0x10] sm:$0xff] %v3838
        %3855 = vst [vmem:[#allocation5 + $0x18] sm:$0xff] %v3839
        %3856 = vst [vmem:[#allocation5 + $0x20] sm:$0xff] %v3840
        %3857 = vst [vmem:[#allocation5 + $0x28] sm:$0xff] %v3841
        %3858 = vst [vmem:[#allocation5 + $0x30] sm:$0xff] %v3842
        %3859 = vst [vmem:[#allocation5 + $0x38] sm:$0xff] %v3843
        %3860 = vst [vmem:[#allocation5 + $0x40] sm:$0xff] %v3844
        %3861 = vst [vmem:[#allocation5 + $0x48] sm:$0xff] %v3845
        %3862 = vst [vmem:[#allocation5 + $0x50] sm:$0xff] %v3846
        %3863 = vst [vmem:[#allocation5 + $0x58] sm:$0xff] %v3847
        %3864 = vst [vmem:[#allocation5 + $0x60] sm:$0xff] %v3848
        %3865 = vst [vmem:[#allocation5 + $0x68] sm:$0xff] %v3849
        %3866 = vst [vmem:[#allocation5 + $0x70] sm:$0xff] %v3850
        %3867 = vst [vmem:[#allocation5 + $0x78] sm:$0xff] %v3851
        %v3868 = vld [vmem:[#allocation4] sm:$0xff]
        %v3869 = vld [vmem:[#allocation4 + $0x8] sm:$0xff]
        %v3870 = vld [vmem:[#allocation4 + $0x10] sm:$0xff]
        %v3871 = vld [vmem:[#allocation4 + $0x18] sm:$0xff]
        %v3872 = vld [vmem:[#allocation4 + $0x20] sm:$0xff]
        %v3873 = vld [vmem:[#allocation4 + $0x28] sm:$0xff]
        %v3874 = vld [vmem:[#allocation4 + $0x30] sm:$0xff]
        %v3875 = vld [vmem:[#allocation4 + $0x38] sm:$0xff]
        %v3876 = vld [vmem:[#allocation4 + $0x40] sm:$0xff]
        %v3877 = vld [vmem:[#allocation4 + $0x48] sm:$0xff]
        %v3878 = vld [vmem:[#allocation4 + $0x50] sm:$0xff]
        %v3879 = vld [vmem:[#allocation4 + $0x58] sm:$0xff]
        %v3880 = vld [vmem:[#allocation4 + $0x60] sm:$0xff]
        %v3881 = vld [vmem:[#allocation4 + $0x68] sm:$0xff]
        %v3882 = vld [vmem:[#allocation4 + $0x70] sm:$0xff]
        %v3883 = vld [vmem:[#allocation4 + $0x78] sm:$0xff]
        %vm3884 = vcmask 7168
        %v3885 = vsel %vm3884, %v1557, %v2215
        %v3886 = vsel %vm3884, %v1560, %v2218
        %v3887 = vsel %vm3884, %v1563, %v2221
        %v3888 = vsel %vm3884, %v1566, %v2224
        %v3889 = vsel %vm3884, %v1569, %v2227
        %v3890 = vsel %vm3884, %v1572, %v2230
        %v3891 = vsel %vm3884, %v1575, %v2233
        %v3892 = vsel %vm3884, %v1578, %v2236
        %v3893 = vsel %vm3884, %v1581, %v2239
        %v3894 = vsel %vm3884, %v1584, %v2242
        %v3895 = vsel %vm3884, %v1587, %v2245
        %v3896 = vsel %vm3884, %v1590, %v2248
        %v3897 = vsel %vm3884, %v1593, %v2251
        %v3898 = vsel %vm3884, %v1596, %v2254
        %v3899 = vsel %vm3884, %v1599, %v2257
        %v3900 = vsel %vm3884, %v1602, %v2260
        %vm3901 = vcmask 15360
        %v3902 = vsel %vm3901, %v3885, %v2793
        %v3903 = vsel %vm3901, %v3886, %v2796
        %v3904 = vsel %vm3901, %v3887, %v2799
        %v3905 = vsel %vm3901, %v3888, %v2802
        %v3906 = vsel %vm3901, %v3889, %v2805
        %v3907 = vsel %vm3901, %v3890, %v2808
        %v3908 = vsel %vm3901, %v3891, %v2811
        %v3909 = vsel %vm3901, %v3892, %v2814
        %v3910 = vsel %vm3901, %v3893, %v2817
        %v3911 = vsel %vm3901, %v3894, %v2820
        %v3912 = vsel %vm3901, %v3895, %v2823
        %v3913 = vsel %vm3901, %v3896, %v2826
        %v3914 = vsel %vm3901, %v3897, %v2829
        %v3915 = vsel %vm3901, %v3898, %v2832
        %v3916 = vsel %vm3901, %v3899, %v2835
        %v3917 = vsel %vm3901, %v3900, %v2838
        %vm3918 = vcmask 23552
        %v3919 = vsel %vm3918, %v3902, %v3371
        %v3920 = vsel %vm3918, %v3903, %v3374
        %v3921 = vsel %vm3918, %v3904, %v3377
        %v3922 = vsel %vm3918, %v3905, %v3380
        %v3923 = vsel %vm3918, %v3906, %v3383
        %v3924 = vsel %vm3918, %v3907, %v3386
        %v3925 = vsel %vm3918, %v3908, %v3389
        %v3926 = vsel %vm3918, %v3909, %v3392
        %v3927 = vsel %vm3918, %v3910, %v3395
        %v3928 = vsel %vm3918, %v3911, %v3398
        %v3929 = vsel %vm3918, %v3912, %v3401
        %v3930 = vsel %vm3918, %v3913, %v3404
        %v3931 = vsel %vm3918, %v3914, %v3407
        %v3932 = vsel %vm3918, %v3915, %v3410
        %v3933 = vsel %vm3918, %v3916, %v3413
        %v3934 = vsel %vm3918, %v3917, %v3416
        %v3935 = vadd.f32 %v3868, %v3919
        %v3936 = vadd.f32 %v3869, %v3920
        %v3937 = vadd.f32 %v3870, %v3921
        %v3938 = vadd.f32 %v3871, %v3922
        %v3939 = vadd.f32 %v3872, %v3923
        %v3940 = vadd.f32 %v3873, %v3924
        %v3941 = vadd.f32 %v3874, %v3925
        %v3942 = vadd.f32 %v3875, %v3926
        %v3943 = vadd.f32 %v3876, %v3927
        %v3944 = vadd.f32 %v3877, %v3928
        %v3945 = vadd.f32 %v3878, %v3929
        %v3946 = vadd.f32 %v3879, %v3930
        %v3947 = vadd.f32 %v3880, %v3931
        %v3948 = vadd.f32 %v3881, %v3932
        %v3949 = vadd.f32 %v3882, %v3933
        %v3950 = vadd.f32 %v3883, %v3934
        %vm3951 = vcmask 31744
        %3952 = vst.msk [vmem:[#allocation4] sm:$0xff] %vm3951, %v3935
        %3953 = vst.msk [vmem:[#allocation4 + $0x8] sm:$0xff] %vm3951, %v3936
        %3954 = vst.msk [vmem:[#allocation4 + $0x10] sm:$0xff] %vm3951, %v3937
        %3955 = vst.msk [vmem:[#allocation4 + $0x18] sm:$0xff] %vm3951, %v3938
        %3956 = vst.msk [vmem:[#allocation4 + $0x20] sm:$0xff] %vm3951, %v3939
        %3957 = vst.msk [vmem:[#allocation4 + $0x28] sm:$0xff] %vm3951, %v3940
        %3958 = vst.msk [vmem:[#allocation4 + $0x30] sm:$0xff] %vm3951, %v3941
        %3959 = vst.msk [vmem:[#allocation4 + $0x38] sm:$0xff] %vm3951, %v3942
        %3960 = vst.msk [vmem:[#allocation4 + $0x40] sm:$0xff] %vm3951, %v3943
        %3961 = vst.msk [vmem:[#allocation4 + $0x48] sm:$0xff] %vm3951, %v3944
        %3962 = vst.msk [vmem:[#allocation4 + $0x50] sm:$0xff] %vm3951, %v3945
        %3963 = vst.msk [vmem:[#allocation4 + $0x58] sm:$0xff] %vm3951, %v3946
        %3964 = vst.msk [vmem:[#allocation4 + $0x60] sm:$0xff] %vm3951, %v3947
        %3965 = vst.msk [vmem:[#allocation4 + $0x68] sm:$0xff] %vm3951, %v3948
        %3966 = vst.msk [vmem:[#allocation4 + $0x70] sm:$0xff] %vm3951, %v3949
        %3967 = vst.msk [vmem:[#allocation4 + $0x78] sm:$0xff] %vm3951, %v3950
        // Predicated region
        $region85: #{graph_transformer_layer.1} parent=79 // pred_check
          %p3968 = pneg %p594
        $region86: #{graph_transformer_layer.1} parent=79 // pred_check_branch
          %3970 = sbr.rel (%p3968) target = $region88
        $region87: #{graph_transformer_layer.1} parent=79 // pred_region
          %v3971 = vld [vmem:[#allocation3] sm:$0xff]
          %v3972 = vld [vmem:[#allocation3 + $0x8] sm:$0xff]
          %v3973 = vld [vmem:[#allocation3 + $0x10] sm:$0xff]
          %v3974 = vld [vmem:[#allocation3 + $0x18] sm:$0xff]
          %v3975 = vld [vmem:[#allocation3 + $0x20] sm:$0xff]
          %v3976 = vld [vmem:[#allocation3 + $0x28] sm:$0xff]
          %v3977 = vld [vmem:[#allocation3 + $0x30] sm:$0xff]
          %v3978 = vld [vmem:[#allocation3 + $0x38] sm:$0xff]
          %v3979 = vld [vmem:[#allocation3 + $0x40] sm:$0xff]
          %v3980 = vld [vmem:[#allocation3 + $0x48] sm:$0xff]
          %v3981 = vld [vmem:[#allocation3 + $0x50] sm:$0xff]
          %v3982 = vld [vmem:[#allocation3 + $0x58] sm:$0xff]
          %v3983 = vld [vmem:[#allocation3 + $0x60] sm:$0xff]
          %v3984 = vld [vmem:[#allocation3 + $0x68] sm:$0xff]
          %v3985 = vld [vmem:[#allocation3 + $0x70] sm:$0xff]
          %v3986 = vld [vmem:[#allocation3 + $0x78] sm:$0xff]
          %v3987 = vld [vmem:[#allocation4] sm:$0xff]
          %v3988 = vld [vmem:[#allocation4 + $0x8] sm:$0xff]
          %v3989 = vld [vmem:[#allocation4 + $0x10] sm:$0xff]
          %v3990 = vld [vmem:[#allocation4 + $0x18] sm:$0xff]
          %v3991 = vld [vmem:[#allocation4 + $0x20] sm:$0xff]
          %v3992 = vld [vmem:[#allocation4 + $0x28] sm:$0xff]
          %v3993 = vld [vmem:[#allocation4 + $0x30] sm:$0xff]
          %v3994 = vld [vmem:[#allocation4 + $0x38] sm:$0xff]
          %v3995 = vld [vmem:[#allocation4 + $0x40] sm:$0xff]
          %v3996 = vld [vmem:[#allocation4 + $0x48] sm:$0xff]
          %v3997 = vld [vmem:[#allocation4 + $0x50] sm:$0xff]
          %v3998 = vld [vmem:[#allocation4 + $0x58] sm:$0xff]
          %v3999 = vld [vmem:[#allocation4 + $0x60] sm:$0xff]
          %v4000 = vld [vmem:[#allocation4 + $0x68] sm:$0xff]
          %v4001 = vld [vmem:[#allocation4 + $0x70] sm:$0xff]
          %v4002 = vld [vmem:[#allocation4 + $0x78] sm:$0xff]
          %v4003 = vmax.f32 %v3987, 1e-30
          %v4004 = vmax.f32 %v3988, 1e-30
          %v4005 = vmax.f32 %v3989, 1e-30
          %v4006 = vmax.f32 %v3990, 1e-30
          %v4007 = vmax.f32 %v3991, 1e-30
          %v4008 = vmax.f32 %v3992, 1e-30
          %v4009 = vmax.f32 %v3993, 1e-30
          %v4010 = vmax.f32 %v3994, 1e-30
          %v4011 = vmax.f32 %v3995, 1e-30
          %v4012 = vmax.f32 %v3996, 1e-30
          %v4013 = vmax.f32 %v3997, 1e-30
          %v4014 = vmax.f32 %v3998, 1e-30
          %v4015 = vmax.f32 %v3999, 1e-30
          %v4016 = vmax.f32 %v4000, 1e-30
          %v4017 = vmax.f32 %v4001, 1e-30
          %v4018 = vmax.f32 %v4002, 1e-30
          %v4019 = vrcp.pop %v4003
          %v4020 = vrcp.pop %v4004
          %v4021 = vrcp.pop %v4005
          %v4022 = vrcp.pop %v4006
          %v4023 = vrcp.pop %v4007
          %v4024 = vrcp.pop %v4008
          %v4025 = vrcp.pop %v4009
          %v4026 = vrcp.pop %v4010
          %v4027 = vrcp.pop %v4011
          %v4028 = vrcp.pop %v4012
          %v4029 = vrcp.pop %v4013
          %v4030 = vrcp.pop %v4014
          %v4031 = vrcp.pop %v4015
          %v4032 = vrcp.pop %v4016
          %v4033 = vrcp.pop %v4017
          %v4034 = vrcp.pop %v4018
          %v4035 = vld [vmem:[#allocation5] sm:$0xff]
          %v4036 = vld [vmem:[#allocation5 + $0x8] sm:$0xff]
          %v4037 = vld [vmem:[#allocation5 + $0x10] sm:$0xff]
          %v4038 = vld [vmem:[#allocation5 + $0x18] sm:$0xff]
          %v4039 = vld [vmem:[#allocation5 + $0x20] sm:$0xff]
          %v4040 = vld [vmem:[#allocation5 + $0x28] sm:$0xff]
          %v4041 = vld [vmem:[#allocation5 + $0x30] sm:$0xff]
          %v4042 = vld [vmem:[#allocation5 + $0x38] sm:$0xff]
          %v4043 = vld [vmem:[#allocation5 + $0x40] sm:$0xff]
          %v4044 = vld [vmem:[#allocation5 + $0x48] sm:$0xff]
          %v4045 = vld [vmem:[#allocation5 + $0x50] sm:$0xff]
          %v4046 = vld [vmem:[#allocation5 + $0x58] sm:$0xff]
          %v4047 = vld [vmem:[#allocation5 + $0x60] sm:$0xff]
          %v4048 = vld [vmem:[#allocation5 + $0x68] sm:$0xff]
          %v4049 = vld [vmem:[#allocation5 + $0x70] sm:$0xff]
          %v4050 = vld [vmem:[#allocation5 + $0x78] sm:$0xff]
          %4052 = vset.pattern.permute.xlu0 0
          %4053 = vperm.xlu0 %4052, %v4019
          %v4054 = vpop.permute.xlu0 %4053
          %4057 = vset.pattern.permute.xlu0 0
          %4058 = vperm.xlu0 %4057, %v4020
          %v4059 = vpop.permute.xlu0 %4058
          %4062 = vset.pattern.permute.xlu0 0
          %4063 = vperm.xlu0 %4062, %v4021
          %v4064 = vpop.permute.xlu0 %4063
          %4067 = vset.pattern.permute.xlu0 0
          %4068 = vperm.xlu0 %4067, %v4022
          %v4069 = vpop.permute.xlu0 %4068
          %4072 = vset.pattern.permute.xlu0 0
          %4073 = vperm.xlu0 %4072, %v4023
          %v4074 = vpop.permute.xlu0 %4073
          %4077 = vset.pattern.permute.xlu0 0
          %4078 = vperm.xlu0 %4077, %v4024
          %v4079 = vpop.permute.xlu0 %4078
          %4082 = vset.pattern.permute.xlu0 0
          %4083 = vperm.xlu0 %4082, %v4025
          %v4084 = vpop.permute.xlu0 %4083
          %4087 = vset.pattern.permute.xlu0 0
          %4088 = vperm.xlu0 %4087, %v4026
          %v4089 = vpop.permute.xlu0 %4088
          %4092 = vset.pattern.permute.xlu0 0
          %4093 = vperm.xlu0 %4092, %v4027
          %v4094 = vpop.permute.xlu0 %4093
          %4097 = vset.pattern.permute.xlu0 0
          %4098 = vperm.xlu0 %4097, %v4028
          %v4099 = vpop.permute.xlu0 %4098
          %4102 = vset.pattern.permute.xlu0 0
          %4103 = vperm.xlu0 %4102, %v4029
          %v4104 = vpop.permute.xlu0 %4103
          %4107 = vset.pattern.permute.xlu0 0
          %4108 = vperm.xlu0 %4107, %v4030
          %v4109 = vpop.permute.xlu0 %4108
          %4112 = vset.pattern.permute.xlu0 0
          %4113 = vperm.xlu0 %4112, %v4031
          %v4114 = vpop.permute.xlu0 %4113
          %4117 = vset.pattern.permute.xlu0 0
          %4118 = vperm.xlu0 %4117, %v4032
          %v4119 = vpop.permute.xlu0 %4118
          %4122 = vset.pattern.permute.xlu0 0
          %4123 = vperm.xlu0 %4122, %v4033
          %v4124 = vpop.permute.xlu0 %4123
          %4127 = vset.pattern.permute.xlu0 0
          %4128 = vperm.xlu0 %4127, %v4034
          %v4129 = vpop.permute.xlu0 %4128
          %v4131 = vmul.f32 %v4035, %v4054
          %v4132 = vmul.f32 %v4036, %v4059
          %v4133 = vmul.f32 %v4037, %v4064
          %v4134 = vmul.f32 %v4038, %v4069
          %v4135 = vmul.f32 %v4039, %v4074
          %v4136 = vmul.f32 %v4040, %v4079
          %v4137 = vmul.f32 %v4041, %v4084
          %v4138 = vmul.f32 %v4042, %v4089
          %v4139 = vmul.f32 %v4043, %v4094
          %v4140 = vmul.f32 %v4044, %v4099
          %v4141 = vmul.f32 %v4045, %v4104
          %v4142 = vmul.f32 %v4046, %v4109
          %v4143 = vmul.f32 %v4047, %v4114
          %v4144 = vmul.f32 %v4048, %v4119
          %v4145 = vmul.f32 %v4049, %v4124
          %v4146 = vmul.f32 %v4050, %v4129
          %4147 = vset.pattern.permute.xlu0 1
          %4148 = vperm.xlu0 %4147, %v4019
          %v4149 = vpop.permute.xlu0 %4148
          %4151 = vset.pattern.permute.xlu0 1
          %4152 = vperm.xlu0 %4151, %v4020
          %v4153 = vpop.permute.xlu0 %4152
          %4155 = vset.pattern.permute.xlu0 1
          %4156 = vperm.xlu0 %4155, %v4021
          %v4157 = vpop.permute.xlu0 %4156
          %4159 = vset.pattern.permute.xlu0 1
          %4160 = vperm.xlu0 %4159, %v4022
          %v4161 = vpop.permute.xlu0 %4160
          %4163 = vset.pattern.permute.xlu0 1
          %4164 = vperm.xlu0 %4163, %v4023
          %v4165 = vpop.permute.xlu0 %4164
          %4167 = vset.pattern.permute.xlu0 1
          %4168 = vperm.xlu0 %4167, %v4024
          %v4169 = vpop.permute.xlu0 %4168
          %4171 = vset.pattern.permute.xlu0 1
          %4172 = vperm.xlu0 %4171, %v4025
          %v4173 = vpop.permute.xlu0 %4172
          %4175 = vset.pattern.permute.xlu0 1
          %4176 = vperm.xlu0 %4175, %v4026
          %v4177 = vpop.permute.xlu0 %4176
          %4179 = vset.pattern.permute.xlu0 1
          %4180 = vperm.xlu0 %4179, %v4027
          %v4181 = vpop.permute.xlu0 %4180
          %4183 = vset.pattern.permute.xlu0 1
          %4184 = vperm.xlu0 %4183, %v4028
          %v4185 = vpop.permute.xlu0 %4184
          %4187 = vset.pattern.permute.xlu0 1
          %4188 = vperm.xlu0 %4187, %v4029
          %v4189 = vpop.permute.xlu0 %4188
          %4191 = vset.pattern.permute.xlu0 1
          %4192 = vperm.xlu0 %4191, %v4030
          %v4193 = vpop.permute.xlu0 %4192
          %4195 = vset.pattern.permute.xlu0 1
          %4196 = vperm.xlu0 %4195, %v4031
          %v4197 = vpop.permute.xlu0 %4196
          %4199 = vset.pattern.permute.xlu0 1
          %4200 = vperm.xlu0 %4199, %v4032
          %v4201 = vpop.permute.xlu0 %4200
          %4203 = vset.pattern.permute.xlu0 1
          %4204 = vperm.xlu0 %4203, %v4033
          %v4205 = vpop.permute.xlu0 %4204
          %4207 = vset.pattern.permute.xlu0 1
          %4208 = vperm.xlu0 %4207, %v4034
          %v4209 = vpop.permute.xlu0 %4208
          %v4211 = vmul.f32 %v4035, %v4149
          %v4212 = vmul.f32 %v4036, %v4153
          %v4213 = vmul.f32 %v4037, %v4157
          %v4214 = vmul.f32 %v4038, %v4161
          %v4215 = vmul.f32 %v4039, %v4165
          %v4216 = vmul.f32 %v4040, %v4169
          %v4217 = vmul.f32 %v4041, %v4173
          %v4218 = vmul.f32 %v4042, %v4177
          %v4219 = vmul.f32 %v4043, %v4181
          %v4220 = vmul.f32 %v4044, %v4185
          %v4221 = vmul.f32 %v4045, %v4189
          %v4222 = vmul.f32 %v4046, %v4193
          %v4223 = vmul.f32 %v4047, %v4197
          %v4224 = vmul.f32 %v4048, %v4201
          %v4225 = vmul.f32 %v4049, %v4205
          %v4226 = vmul.f32 %v4050, %v4209
          %4227 = vset.pattern.permute.xlu0 2
          %4228 = vperm.xlu0 %4227, %v4019
          %v4229 = vpop.permute.xlu0 %4228
          %4231 = vset.pattern.permute.xlu0 2
          %4232 = vperm.xlu0 %4231, %v4020
          %v4233 = vpop.permute.xlu0 %4232
          %4235 = vset.pattern.permute.xlu0 2
          %4236 = vperm.xlu0 %4235, %v4021
          %v4237 = vpop.permute.xlu0 %4236
          %4239 = vset.pattern.permute.xlu0 2
          %4240 = vperm.xlu0 %4239, %v4022
          %v4241 = vpop.permute.xlu0 %4240
          %4243 = vset.pattern.permute.xlu0 2
          %4244 = vperm.xlu0 %4243, %v4023
          %v4245 = vpop.permute.xlu0 %4244
          %4247 = vset.pattern.permute.xlu0 2
          %4248 = vperm.xlu0 %4247, %v4024
          %v4249 = vpop.permute.xlu0 %4248
          %4251 = vset.pattern.permute.xlu0 2
          %4252 = vperm.xlu0 %4251, %v4025
          %v4253 = vpop.permute.xlu0 %4252
          %4255 = vset.pattern.permute.xlu0 2
          %4256 = vperm.xlu0 %4255, %v4026
          %v4257 = vpop.permute.xlu0 %4256
          %4259 = vset.pattern.permute.xlu0 2
          %4260 = vperm.xlu0 %4259, %v4027
          %v4261 = vpop.permute.xlu0 %4260
          %4263 = vset.pattern.permute.xlu0 2
          %4264 = vperm.xlu0 %4263, %v4028
          %v4265 = vpop.permute.xlu0 %4264
          %4267 = vset.pattern.permute.xlu0 2
          %4268 = vperm.xlu0 %4267, %v4029
          %v4269 = vpop.permute.xlu0 %4268
          %4271 = vset.pattern.permute.xlu0 2
          %4272 = vperm.xlu0 %4271, %v4030
          %v4273 = vpop.permute.xlu0 %4272
          %4275 = vset.pattern.permute.xlu0 2
          %4276 = vperm.xlu0 %4275, %v4031
          %v4277 = vpop.permute.xlu0 %4276
          %4279 = vset.pattern.permute.xlu0 2
          %4280 = vperm.xlu0 %4279, %v4032
          %v4281 = vpop.permute.xlu0 %4280
          %4283 = vset.pattern.permute.xlu0 2
          %4284 = vperm.xlu0 %4283, %v4033
          %v4285 = vpop.permute.xlu0 %4284
          %4287 = vset.pattern.permute.xlu0 2
          %4288 = vperm.xlu0 %4287, %v4034
          %v4289 = vpop.permute.xlu0 %4288
          %v4291 = vmul.f32 %v4035, %v4229
          %v4292 = vmul.f32 %v4036, %v4233
          %v4293 = vmul.f32 %v4037, %v4237
          %v4294 = vmul.f32 %v4038, %v4241
          %v4295 = vmul.f32 %v4039, %v4245
          %v4296 = vmul.f32 %v4040, %v4249
          %v4297 = vmul.f32 %v4041, %v4253
          %v4298 = vmul.f32 %v4042, %v4257
          %v4299 = vmul.f32 %v4043, %v4261
          %v4300 = vmul.f32 %v4044, %v4265
          %v4301 = vmul.f32 %v4045, %v4269
          %v4302 = vmul.f32 %v4046, %v4273
          %v4303 = vmul.f32 %v4047, %v4277
          %v4304 = vmul.f32 %v4048, %v4281
          %v4305 = vmul.f32 %v4049, %v4285
          %v4306 = vmul.f32 %v4050, %v4289
          %4307 = vset.pattern.permute.xlu0 3
          %4308 = vperm.xlu0 %4307, %v4019
          %v4309 = vpop.permute.xlu0 %4308
          %4311 = vset.pattern.permute.xlu0 3
          %4312 = vperm.xlu0 %4311, %v4020
          %v4313 = vpop.permute.xlu0 %4312
          %4315 = vset.pattern.permute.xlu0 3
          %4316 = vperm.xlu0 %4315, %v4021
          %v4317 = vpop.permute.xlu0 %4316
          %4319 = vset.pattern.permute.xlu0 3
          %4320 = vperm.xlu0 %4319, %v4022
          %v4321 = vpop.permute.xlu0 %4320
          %4323 = vset.pattern.permute.xlu0 3
          %4324 = vperm.xlu0 %4323, %v4023
          %v4325 = vpop.permute.xlu0 %4324
          %4327 = vset.pattern.permute.xlu0 3
          %4328 = vperm.xlu0 %4327, %v4024
          %v4329 = vpop.permute.xlu0 %4328
          %4331 = vset.pattern.permute.xlu0 3
          %4332 = vperm.xlu0 %4331, %v4025
          %v4333 = vpop.permute.xlu0 %4332
          %4335 = vset.pattern.permute.xlu0 3
          %4336 = vperm.xlu0 %4335, %v4026
          %v4337 = vpop.permute.xlu0 %4336
          %4339 = vset.pattern.permute.xlu0 3
          %4340 = vperm.xlu0 %4339, %v4027
          %v4341 = vpop.permute.xlu0 %4340
          %4343 = vset.pattern.permute.xlu0 3
          %4344 = vperm.xlu0 %4343, %v4028
          %v4345 = vpop.permute.xlu0 %4344
          %4347 = vset.pattern.permute.xlu0 3
          %4348 = vperm.xlu0 %4347, %v4029
          %v4349 = vpop.permute.xlu0 %4348
          %4351 = vset.pattern.permute.xlu0 3
          %4352 = vperm.xlu0 %4351, %v4030
          %v4353 = vpop.permute.xlu0 %4352
          %4355 = vset.pattern.permute.xlu0 3
          %4356 = vperm.xlu0 %4355, %v4031
          %v4357 = vpop.permute.xlu0 %4356
          %4359 = vset.pattern.permute.xlu0 3
          %4360 = vperm.xlu0 %4359, %v4032
          %v4361 = vpop.permute.xlu0 %4360
          %4363 = vset.pattern.permute.xlu0 3
          %4364 = vperm.xlu0 %4363, %v4033
          %v4365 = vpop.permute.xlu0 %4364
          %4367 = vset.pattern.permute.xlu0 3
          %4368 = vperm.xlu0 %4367, %v4034
          %v4369 = vpop.permute.xlu0 %4368
          %v4371 = vmul.f32 %v4035, %v4309
          %v4372 = vmul.f32 %v4036, %v4313
          %v4373 = vmul.f32 %v4037, %v4317
          %v4374 = vmul.f32 %v4038, %v4321
          %v4375 = vmul.f32 %v4039, %v4325
          %v4376 = vmul.f32 %v4040, %v4329
          %v4377 = vmul.f32 %v4041, %v4333
          %v4378 = vmul.f32 %v4042, %v4337
          %v4379 = vmul.f32 %v4043, %v4341
          %v4380 = vmul.f32 %v4044, %v4345
          %v4381 = vmul.f32 %v4045, %v4349
          %v4382 = vmul.f32 %v4046, %v4353
          %v4383 = vmul.f32 %v4047, %v4357
          %v4384 = vmul.f32 %v4048, %v4361
          %v4385 = vmul.f32 %v4049, %v4365
          %v4386 = vmul.f32 %v4050, %v4369
          %v4387 = vsel %vm1225, %v4131, %v4211
          %v4388 = vsel %vm1225, %v4132, %v4212
          %v4389 = vsel %vm1225, %v4133, %v4213
          %v4390 = vsel %vm1225, %v4134, %v4214
          %v4391 = vsel %vm1225, %v4135, %v4215
          %v4392 = vsel %vm1225, %v4136, %v4216
          %v4393 = vsel %vm1225, %v4137, %v4217
          %v4394 = vsel %vm1225, %v4138, %v4218
          %v4395 = vsel %vm1225, %v4139, %v4219
          %v4396 = vsel %vm1225, %v4140, %v4220
          %v4397 = vsel %vm1225, %v4141, %v4221
          %v4398 = vsel %vm1225, %v4142, %v4222
          %v4399 = vsel %vm1225, %v4143, %v4223
          %v4400 = vsel %vm1225, %v4144, %v4224
          %v4401 = vsel %vm1225, %v4145, %v4225
          %v4402 = vsel %vm1225, %v4146, %v4226
          %v4403 = vsel %vm3802, %v4387, %v4291
          %v4404 = vsel %vm3802, %v4388, %v4292
          %v4405 = vsel %vm3802, %v4389, %v4293
          %v4406 = vsel %vm3802, %v4390, %v4294
          %v4407 = vsel %vm3802, %v4391, %v4295
          %v4408 = vsel %vm3802, %v4392, %v4296
          %v4409 = vsel %vm3802, %v4393, %v4297
          %v4410 = vsel %vm3802, %v4394, %v4298
          %v4411 = vsel %vm3802, %v4395, %v4299
          %v4412 = vsel %vm3802, %v4396, %v4300
          %v4413 = vsel %vm3802, %v4397, %v4301
          %v4414 = vsel %vm3802, %v4398, %v4302
          %v4415 = vsel %vm3802, %v4399, %v4303
          %v4416 = vsel %vm3802, %v4400, %v4304
          %v4417 = vsel %vm3802, %v4401, %v4305
          %v4418 = vsel %vm3802, %v4402, %v4306
          %v4419 = vsel %vm3819, %v4403, %v4371
          %v4420 = vsel %vm3819, %v4404, %v4372
          %v4421 = vsel %vm3819, %v4405, %v4373
          %v4422 = vsel %vm3819, %v4406, %v4374
          %v4423 = vsel %vm3819, %v4407, %v4375
          %v4424 = vsel %vm3819, %v4408, %v4376
          %v4425 = vsel %vm3819, %v4409, %v4377
          %v4426 = vsel %vm3819, %v4410, %v4378
          %v4427 = vsel %vm3819, %v4411, %v4379
          %v4428 = vsel %vm3819, %v4412, %v4380
          %v4429 = vsel %vm3819, %v4413, %v4381
          %v4430 = vsel %vm3819, %v4414, %v4382
          %v4431 = vsel %vm3819, %v4415, %v4383
          %v4432 = vsel %vm3819, %v4416, %v4384
          %v4433 = vsel %vm3819, %v4417, %v4385
          %v4434 = vsel %vm3819, %v4418, %v4386
          %v4435 = vpack.c.bf16 %v4420, %v4419
          %v4436 = vpack.c.bf16 %v4422, %v4421
          %v4437 = vpack.c.bf16 %v4424, %v4423
          %v4438 = vpack.c.bf16 %v4426, %v4425
          %v4439 = vpack.c.bf16 %v4428, %v4427
          %v4440 = vpack.c.bf16 %v4430, %v4429
          %v4441 = vpack.c.bf16 %v4432, %v4431
          %v4442 = vpack.c.bf16 %v4434, %v4433
          %v4443 = vld [vmem:[%s5] sm:$0xf]
          %v4444 = vld [vmem:[%s5 + $0x4] sm:$0xf]
          %v4445 = vld [vmem:[%s5 + $0x8] sm:$0xf]
          %v4446 = vld [vmem:[%s5 + $0xc] sm:$0xf]
          %v4447 = vld [vmem:[%s5 + $0x10] sm:$0xf]
          %v4448 = vld [vmem:[%s5 + $0x14] sm:$0xf]
          %v4449 = vld [vmem:[%s5 + $0x18] sm:$0xf]
          %v4450 = vld [vmem:[%s5 + $0x1c] sm:$0xf]
          %v4451 = vld [vmem:[%s5 + $0x20] sm:$0xf]
          %v4452 = vld [vmem:[%s5 + $0x24] sm:$0xf]
          %v4453 = vld [vmem:[%s5 + $0x28] sm:$0xf]
          %v4454 = vld [vmem:[%s5 + $0x2c] sm:$0xf]
          %v4455 = vld [vmem:[%s5 + $0x30] sm:$0xf]
          %v4456 = vld [vmem:[%s5 + $0x34] sm:$0xf]
          %v4457 = vld [vmem:[%s5 + $0x38] sm:$0xf]
          %v4458 = vld [vmem:[%s5 + $0x3c] sm:$0xf]
          %v4475 = vunpack.c.l.b16 %v4443
          %v4476 = vunpack.c.l.b16 %v4444
          %v4477 = vunpack.c.l.b16 %v4445
          %v4478 = vunpack.c.l.b16 %v4446
          %v4479 = vunpack.c.l.b16 %v4447
          %v4480 = vunpack.c.l.b16 %v4448
          %v4481 = vunpack.c.l.b16 %v4449
          %v4482 = vunpack.c.l.b16 %v4450
          %v4483 = vunpack.c.l.b16 %v4451
          %v4484 = vunpack.c.l.b16 %v4452
          %v4485 = vunpack.c.l.b16 %v4453
          %v4486 = vunpack.c.l.b16 %v4454
          %v4487 = vunpack.c.l.b16 %v4455
          %v4488 = vunpack.c.l.b16 %v4456
          %v4489 = vunpack.c.l.b16 %v4457
          %v4490 = vunpack.c.l.b16 %v4458
          %v4491 = vpack.c.b16 %v4476, %v4475
          %v4492 = vpack.c.b16 %v4478, %v4477
          %v4493 = vpack.c.b16 %v4480, %v4479
          %v4494 = vpack.c.b16 %v4482, %v4481
          %v4495 = vpack.c.b16 %v4484, %v4483
          %v4496 = vpack.c.b16 %v4486, %v4485
          %v4497 = vpack.c.b16 %v4488, %v4487
          %v4498 = vpack.c.b16 %v4490, %v4489
          %4507 = vmatprep.subr.bf16.mxu0 0
          %4508 = vmatpush1.bf16.msra.mxu0 %v4498
          %4509 = vmatprep.subr.bf16.mxu0 0
          %4510 = vmatpush1.bf16.msra.mxu0 %v4497
          %4511 = vmatprep.subr.bf16.mxu0 0
          %4512 = vmatpush1.bf16.msra.mxu0 %v4496
          %4513 = vmatprep.subr.bf16.mxu0 0
          %4514 = vmatpush1.bf16.msra.mxu0 %v4495
          %4515 = vmatprep.subr.bf16.mxu0 0
          %4516 = vmatpush1.bf16.msra.mxu0 %v4494
          %4517 = vmatprep.subr.bf16.mxu0 0
          %4518 = vmatpush1.bf16.msra.mxu0 %v4493
          %4519 = vmatprep.subr.bf16.mxu0 0
          %4520 = vmatpush1.bf16.msra.mxu0 %v4492
          %4521 = vmatprep.subr.bf16.mxu0 0
          %4522 = vmatpush1.bf16.msra.mxu0 %v4491
          %4523 = vmatprep.subr.bf16.mxu0 0
          %4524 = vmatpush2.bf16.msra.mxu0 0
          %4525 = vmatprep.subr.bf16.mxu0 0
          %4526 = vmatpush2.bf16.msra.mxu0 0
          %4527 = vmatprep.subr.bf16.mxu0 0
          %4528 = vmatpush2.bf16.msra.mxu0 0
          %4529 = vmatprep.subr.bf16.mxu0 0
          %4530 = vmatpush2.bf16.msra.mxu0 0
          %4531 = vmatprep.subr.bf16.mxu0 0
          %4532 = vmatpush2.bf16.msra.mxu0 0
          %4533 = vmatprep.subr.bf16.mxu0 0
          %4534 = vmatpush2.bf16.msra.mxu0 0
          %4535 = vmatprep.subr.bf16.mxu0 0
          %4536 = vmatpush2.bf16.msra.mxu0 0
          %4537 = vmatprep.subr.bf16.mxu0 0
          %4538 = vmatpush2.bf16.msra.mxu0 0
          %4539 = vmatprep.mubr.bf16.mxu0 0
          %4540 = vmatmul.mubr.bf16.gmra.mxu0 %v4435
          %v4541 = vpop.f32.mrf.mxu0
          %v4542 = vadd.f32 0.0, %v4541
          %v4543 = vpop.f32.mrf.mxu0
          %v4544 = vpop.f32.mrf.mxu0
          %v4545 = vadd.f32 0.0, %v4544
          %v4546 = vpop.f32.mrf.mxu0
          %4547 = vmatprep.mubr.bf16.mxu0 0
          %4548 = vmatmul.mubr.bf16.gmra.mxu0 %v4436
          %v4549 = vpop.f32.mrf.mxu0
          %v4550 = vadd.f32 0.0, %v4549
          %v4551 = vpop.f32.mrf.mxu0
          %v4552 = vpop.f32.mrf.mxu0
          %v4553 = vadd.f32 0.0, %v4552
          %v4554 = vpop.f32.mrf.mxu0
          %4555 = vmatprep.mubr.bf16.mxu0 0
          %4556 = vmatmul.mubr.bf16.gmra.mxu0 %v4437
          %v4557 = vpop.f32.mrf.mxu0
          %v4558 = vadd.f32 0.0, %v4557
          %v4559 = vpop.f32.mrf.mxu0
          %v4560 = vpop.f32.mrf.mxu0
          %v4561 = vadd.f32 0.0, %v4560
          %v4562 = vpop.f32.mrf.mxu0
          %4563 = vmatprep.mubr.bf16.mxu0 0
          %4564 = vmatmul.mubr.bf16.gmra.mxu0 %v4438
          %v4565 = vpop.f32.mrf.mxu0
          %v4566 = vadd.f32 0.0, %v4565
          %v4567 = vpop.f32.mrf.mxu0
          %v4568 = vpop.f32.mrf.mxu0
          %v4569 = vadd.f32 0.0, %v4568
          %v4570 = vpop.f32.mrf.mxu0
          %4571 = vmatprep.mubr.bf16.mxu0 0
          %4572 = vmatmul.mubr.bf16.gmra.mxu0 %v4439
          %v4573 = vpop.f32.mrf.mxu0
          %v4574 = vadd.f32 0.0, %v4573
          %v4575 = vpop.f32.mrf.mxu0
          %v4576 = vpop.f32.mrf.mxu0
          %v4577 = vadd.f32 0.0, %v4576
          %v4578 = vpop.f32.mrf.mxu0
          %4579 = vmatprep.mubr.bf16.mxu0 0
          %4580 = vmatmul.mubr.bf16.gmra.mxu0 %v4440
          %v4581 = vpop.f32.mrf.mxu0
          %v4582 = vadd.f32 0.0, %v4581
          %v4583 = vpop.f32.mrf.mxu0
          %v4584 = vpop.f32.mrf.mxu0
          %v4585 = vadd.f32 0.0, %v4584
          %v4586 = vpop.f32.mrf.mxu0
          %4587 = vmatprep.mubr.bf16.mxu0 0
          %4588 = vmatmul.mubr.bf16.gmra.mxu0 %v4441
          %v4589 = vpop.f32.mrf.mxu0
          %v4590 = vadd.f32 0.0, %v4589
          %v4591 = vpop.f32.mrf.mxu0
          %v4592 = vpop.f32.mrf.mxu0
          %v4593 = vadd.f32 0.0, %v4592
          %v4594 = vpop.f32.mrf.mxu0
          %4595 = vmatprep.mubr.bf16.mxu0 0
          %4596 = vmatmul.mubr.bf16.gmra.mxu0 %v4442
          %v4597 = vpop.f32.mrf.mxu0
          %v4598 = vadd.f32 0.0, %v4597
          %v4599 = vpop.f32.mrf.mxu0
          %v4600 = vpop.f32.mrf.mxu0
          %v4601 = vadd.f32 0.0, %v4600
          %v4602 = vpop.f32.mrf.mxu0
          %4603 = vdwg.mxu0
          %v4604 = vld [vmem:[%s7] sm:$0x1]
          %v4606 = vlaneseq
          %v4607 = vshrl.u32 %v4606, 7
          %v4608 = vsub.s32 0, %v4607
          %v4609 = vrot.slane %v4604, %v4608
          %v4611 = vmul.f32 %v4542, %v4609
          %v4612 = vmul.f32 %v4545, %v4609
          %v4613 = vmul.f32 %v4550, %v4609
          %v4614 = vmul.f32 %v4553, %v4609
          %v4615 = vmul.f32 %v4558, %v4609
          %v4616 = vmul.f32 %v4561, %v4609
          %v4617 = vmul.f32 %v4566, %v4609
          %v4618 = vmul.f32 %v4569, %v4609
          %v4619 = vmul.f32 %v4574, %v4609
          %v4620 = vmul.f32 %v4577, %v4609
          %v4621 = vmul.f32 %v4582, %v4609
          %v4622 = vmul.f32 %v4585, %v4609
          %v4623 = vmul.f32 %v4590, %v4609
          %v4624 = vmul.f32 %v4593, %v4609
          %v4625 = vmul.f32 %v4598, %v4609
          %v4626 = vmul.f32 %v4601, %v4609
          %v4627 = vld [vmem:[%s8] sm:$0x1]
          %v4629 = vlaneseq
          %v4630 = vshrl.u32 %v4629, 7
          %v4631 = vsub.s32 0, %v4630
          %v4632 = vrot.slane %v4627, %v4631
          %v4634 = vmul.f32 %v3971, %v4632
          %v4635 = vmul.f32 %v3972, %v4632
          %v4636 = vmul.f32 %v3973, %v4632
          %v4637 = vmul.f32 %v3974, %v4632
          %v4638 = vmul.f32 %v3975, %v4632
          %v4639 = vmul.f32 %v3976, %v4632
          %v4640 = vmul.f32 %v3977, %v4632
          %v4641 = vmul.f32 %v3978, %v4632
          %v4642 = vmul.f32 %v3979, %v4632
          %v4643 = vmul.f32 %v3980, %v4632
          %v4644 = vmul.f32 %v3981, %v4632
          %v4645 = vmul.f32 %v3982, %v4632
          %v4646 = vmul.f32 %v3983, %v4632
          %v4647 = vmul.f32 %v3984, %v4632
          %v4648 = vmul.f32 %v3985, %v4632
          %v4649 = vmul.f32 %v3986, %v4632
          %v4650 = vadd.f32 %v4611, %v4634
          %v4651 = vadd.f32 %v4612, %v4635
          %v4652 = vadd.f32 %v4613, %v4636
          %v4653 = vadd.f32 %v4614, %v4637
          %v4654 = vadd.f32 %v4615, %v4638
          %v4655 = vadd.f32 %v4616, %v4639
          %v4656 = vadd.f32 %v4617, %v4640
          %v4657 = vadd.f32 %v4618, %v4641
          %v4658 = vadd.f32 %v4619, %v4642
          %v4659 = vadd.f32 %v4620, %v4643
          %v4660 = vadd.f32 %v4621, %v4644
          %v4661 = vadd.f32 %v4622, %v4645
          %v4662 = vadd.f32 %v4623, %v4646
          %v4663 = vadd.f32 %v4624, %v4647
          %v4664 = vadd.f32 %v4625, %v4648
          %v4665 = vadd.f32 %v4626, %v4649
          %4666 = vadd.xlane.f32.xlu0 %v4650
          %v4667 = vpop.xlane.xlu0 %4666
          %4668 = vadd.xlane.f32.xlu0 %v4651
          %v4669 = vpop.xlane.xlu0 %4668
          %4670 = vadd.xlane.f32.xlu0 %v4652
          %v4671 = vpop.xlane.xlu0 %4670
          %4672 = vadd.xlane.f32.xlu0 %v4653
          %v4673 = vpop.xlane.xlu0 %4672
          %4674 = vadd.xlane.f32.xlu0 %v4654
          %v4675 = vpop.xlane.xlu0 %4674
          %4676 = vadd.xlane.f32.xlu0 %v4655
          %v4677 = vpop.xlane.xlu0 %4676
          %4678 = vadd.xlane.f32.xlu0 %v4656
          %v4679 = vpop.xlane.xlu0 %4678
          %4680 = vadd.xlane.f32.xlu0 %v4657
          %v4681 = vpop.xlane.xlu0 %4680
          %4682 = vadd.xlane.f32.xlu0 %v4658
          %v4683 = vpop.xlane.xlu0 %4682
          %4684 = vadd.xlane.f32.xlu0 %v4659
          %v4685 = vpop.xlane.xlu0 %4684
          %4686 = vadd.xlane.f32.xlu0 %v4660
          %v4687 = vpop.xlane.xlu0 %4686
          %4688 = vadd.xlane.f32.xlu0 %v4661
          %v4689 = vpop.xlane.xlu0 %4688
          %4690 = vadd.xlane.f32.xlu0 %v4662
          %v4691 = vpop.xlane.xlu0 %4690
          %4692 = vadd.xlane.f32.xlu0 %v4663
          %v4693 = vpop.xlane.xlu0 %4692
          %4694 = vadd.xlane.f32.xlu0 %v4664
          %v4695 = vpop.xlane.xlu0 %4694
          %4696 = vadd.xlane.f32.xlu0 %v4665
          %v4697 = vpop.xlane.xlu0 %4696
          %v4698 = vxor.u32 %v4667, 2147483648
          %v4699 = vxor.u32 %v4669, 2147483648
          %v4700 = vxor.u32 %v4671, 2147483648
          %v4701 = vxor.u32 %v4673, 2147483648
          %v4702 = vxor.u32 %v4675, 2147483648
          %v4703 = vxor.u32 %v4677, 2147483648
          %v4704 = vxor.u32 %v4679, 2147483648
          %v4705 = vxor.u32 %v4681, 2147483648
          %v4706 = vxor.u32 %v4683, 2147483648
          %v4707 = vxor.u32 %v4685, 2147483648
          %v4708 = vxor.u32 %v4687, 2147483648
          %v4709 = vxor.u32 %v4689, 2147483648
          %v4710 = vxor.u32 %v4691, 2147483648
          %v4711 = vxor.u32 %v4693, 2147483648
          %v4712 = vxor.u32 %v4695, 2147483648
          %v4713 = vxor.u32 %v4697, 2147483648
          %v4714 = vmul.f32 %v4698, 1.442695
          %v4715 = vpow.pop %v4714
          %v4716 = vmul.f32 %v4699, 1.442695
          %v4717 = vpow.pop %v4716
          %v4718 = vmul.f32 %v4700, 1.442695
          %v4719 = vpow.pop %v4718
          %v4720 = vmul.f32 %v4701, 1.442695
          %v4721 = vpow.pop %v4720
          %v4722 = vmul.f32 %v4702, 1.442695
          %v4723 = vpow.pop %v4722
          %v4724 = vmul.f32 %v4703, 1.442695
          %v4725 = vpow.pop %v4724
          %v4726 = vmul.f32 %v4704, 1.442695
          %v4727 = vpow.pop %v4726
          %v4728 = vmul.f32 %v4705, 1.442695
          %v4729 = vpow.pop %v4728
          %v4730 = vmul.f32 %v4706, 1.442695
          %v4731 = vpow.pop %v4730
          %v4732 = vmul.f32 %v4707, 1.442695
          %v4733 = vpow.pop %v4732
          %v4734 = vmul.f32 %v4708, 1.442695
          %v4735 = vpow.pop %v4734
          %v4736 = vmul.f32 %v4709, 1.442695
          %v4737 = vpow.pop %v4736
          %v4738 = vmul.f32 %v4710, 1.442695
          %v4739 = vpow.pop %v4738
          %v4740 = vmul.f32 %v4711, 1.442695
          %v4741 = vpow.pop %v4740
          %v4742 = vmul.f32 %v4712, 1.442695
          %v4743 = vpow.pop %v4742
          %v4744 = vmul.f32 %v4713, 1.442695
          %v4745 = vpow.pop %v4744
          %v4746 = vadd.f32 %v4715, 1.0
          %v4747 = vadd.f32 %v4717, 1.0
          %v4748 = vadd.f32 %v4719, 1.0
          %v4749 = vadd.f32 %v4721, 1.0
          %v4750 = vadd.f32 %v4723, 1.0
          %v4751 = vadd.f32 %v4725, 1.0
          %v4752 = vadd.f32 %v4727, 1.0
          %v4753 = vadd.f32 %v4729, 1.0
          %v4754 = vadd.f32 %v4731, 1.0
          %v4755 = vadd.f32 %v4733, 1.0
          %v4756 = vadd.f32 %v4735, 1.0
          %v4757 = vadd.f32 %v4737, 1.0
          %v4758 = vadd.f32 %v4739, 1.0
          %v4759 = vadd.f32 %v4741, 1.0
          %v4760 = vadd.f32 %v4743, 1.0
          %v4761 = vadd.f32 %v4745, 1.0
          %v4762 = vrcp.pop %v4746
          %v4763 = vmul.f32 1.0, %v4762
          %v4764 = vrcp.pop %v4747
          %v4765 = vmul.f32 1.0, %v4764
          %v4766 = vrcp.pop %v4748
          %v4767 = vmul.f32 1.0, %v4766
          %v4768 = vrcp.pop %v4749
          %v4769 = vmul.f32 1.0, %v4768
          %v4770 = vrcp.pop %v4750
          %v4771 = vmul.f32 1.0, %v4770
          %v4772 = vrcp.pop %v4751
          %v4773 = vmul.f32 1.0, %v4772
          %v4774 = vrcp.pop %v4752
          %v4775 = vmul.f32 1.0, %v4774
          %v4776 = vrcp.pop %v4753
          %v4777 = vmul.f32 1.0, %v4776
          %v4778 = vrcp.pop %v4754
          %v4779 = vmul.f32 1.0, %v4778
          %v4780 = vrcp.pop %v4755
          %v4781 = vmul.f32 1.0, %v4780
          %v4782 = vrcp.pop %v4756
          %v4783 = vmul.f32 1.0, %v4782
          %v4784 = vrcp.pop %v4757
          %v4785 = vmul.f32 1.0, %v4784
          %v4786 = vrcp.pop %v4758
          %v4787 = vmul.f32 1.0, %v4786
          %v4788 = vrcp.pop %v4759
          %v4789 = vmul.f32 1.0, %v4788
          %v4790 = vrcp.pop %v4760
          %v4791 = vmul.f32 1.0, %v4790
          %v4792 = vrcp.pop %v4761
          %v4793 = vmul.f32 1.0, %v4792
          %v4794 = vmul.f32 %v4542, %v4763
          %v4795 = vmul.f32 %v4545, %v4765
          %v4796 = vmul.f32 %v4550, %v4767
          %v4797 = vmul.f32 %v4553, %v4769
          %v4798 = vmul.f32 %v4558, %v4771
          %v4799 = vmul.f32 %v4561, %v4773
          %v4800 = vmul.f32 %v4566, %v4775
          %v4801 = vmul.f32 %v4569, %v4777
          %v4802 = vmul.f32 %v4574, %v4779
          %v4803 = vmul.f32 %v4577, %v4781
          %v4804 = vmul.f32 %v4582, %v4783
          %v4805 = vmul.f32 %v4585, %v4785
          %v4806 = vmul.f32 %v4590, %v4787
          %v4807 = vmul.f32 %v4593, %v4789
          %v4808 = vmul.f32 %v4598, %v4791
          %v4809 = vmul.f32 %v4601, %v4793
          %v4810 = vsub.f32 1.0, %v4763
          %v4811 = vsub.f32 1.0, %v4765
          %v4812 = vsub.f32 1.0, %v4767
          %v4813 = vsub.f32 1.0, %v4769
          %v4814 = vsub.f32 1.0, %v4771
          %v4815 = vsub.f32 1.0, %v4773
          %v4816 = vsub.f32 1.0, %v4775
          %v4817 = vsub.f32 1.0, %v4777
          %v4818 = vsub.f32 1.0, %v4779
          %v4819 = vsub.f32 1.0, %v4781
          %v4820 = vsub.f32 1.0, %v4783
          %v4821 = vsub.f32 1.0, %v4785
          %v4822 = vsub.f32 1.0, %v4787
          %v4823 = vsub.f32 1.0, %v4789
          %v4824 = vsub.f32 1.0, %v4791
          %v4825 = vsub.f32 1.0, %v4793
          %v4826 = vmul.f32 %v3971, %v4810
          %v4827 = vmul.f32 %v3972, %v4811
          %v4828 = vmul.f32 %v3973, %v4812
          %v4829 = vmul.f32 %v3974, %v4813
          %v4830 = vmul.f32 %v3975, %v4814
          %v4831 = vmul.f32 %v3976, %v4815
          %v4832 = vmul.f32 %v3977, %v4816
          %v4833 = vmul.f32 %v3978, %v4817
          %v4834 = vmul.f32 %v3979, %v4818
          %v4835 = vmul.f32 %v3980, %v4819
          %v4836 = vmul.f32 %v3981, %v4820
          %v4837 = vmul.f32 %v3982, %v4821
          %v4838 = vmul.f32 %v3983, %v4822
          %v4839 = vmul.f32 %v3984, %v4823
          %v4840 = vmul.f32 %v3985, %v4824
          %v4841 = vmul.f32 %v3986, %v4825
          %v4842 = vadd.f32 %v4794, %v4826
          %v4843 = vadd.f32 %v4795, %v4827
          %v4844 = vadd.f32 %v4796, %v4828
          %v4845 = vadd.f32 %v4797, %v4829
          %v4846 = vadd.f32 %v4798, %v4830
          %v4847 = vadd.f32 %v4799, %v4831
          %v4848 = vadd.f32 %v4800, %v4832
          %v4849 = vadd.f32 %v4801, %v4833
          %v4850 = vadd.f32 %v4802, %v4834
          %v4851 = vadd.f32 %v4803, %v4835
          %v4852 = vadd.f32 %v4804, %v4836
          %v4853 = vadd.f32 %v4805, %v4837
          %v4854 = vadd.f32 %v4806, %v4838
          %v4855 = vadd.f32 %v4807, %v4839
          %v4856 = vadd.f32 %v4808, %v4840
          %v4857 = vadd.f32 %v4809, %v4841
          %v4858 = vld [vmem:[%s9] sm:$0x1]
          %v4859 = vld [vmem:[%s10] sm:$0x1]
          %4860 = vadd.xlane.f32.xlu0 %v4842
          %v4861 = vpop.xlane.xlu0 %4860
          %4862 = vadd.xlane.f32.xlu0 %v4843
          %v4863 = vpop.xlane.xlu0 %4862
          %4864 = vadd.xlane.f32.xlu0 %v4844
          %v4865 = vpop.xlane.xlu0 %4864
          %4866 = vadd.xlane.f32.xlu0 %v4845
          %v4867 = vpop.xlane.xlu0 %4866
          %4868 = vadd.xlane.f32.xlu0 %v4846
          %v4869 = vpop.xlane.xlu0 %4868
          %4870 = vadd.xlane.f32.xlu0 %v4847
          %v4871 = vpop.xlane.xlu0 %4870
          %4872 = vadd.xlane.f32.xlu0 %v4848
          %v4873 = vpop.xlane.xlu0 %4872
          %4874 = vadd.xlane.f32.xlu0 %v4849
          %v4875 = vpop.xlane.xlu0 %4874
          %4876 = vadd.xlane.f32.xlu0 %v4850
          %v4877 = vpop.xlane.xlu0 %4876
          %4878 = vadd.xlane.f32.xlu0 %v4851
          %v4879 = vpop.xlane.xlu0 %4878
          %4880 = vadd.xlane.f32.xlu0 %v4852
          %v4881 = vpop.xlane.xlu0 %4880
          %4882 = vadd.xlane.f32.xlu0 %v4853
          %v4883 = vpop.xlane.xlu0 %4882
          %4884 = vadd.xlane.f32.xlu0 %v4854
          %v4885 = vpop.xlane.xlu0 %4884
          %4886 = vadd.xlane.f32.xlu0 %v4855
          %v4887 = vpop.xlane.xlu0 %4886
          %4888 = vadd.xlane.f32.xlu0 %v4856
          %v4889 = vpop.xlane.xlu0 %4888
          %4890 = vadd.xlane.f32.xlu0 %v4857
          %v4891 = vpop.xlane.xlu0 %4890
          %v4892 = vrcp.pop 128.0
          %v4893 = vmul.f32 %v4861, %v4892
          %v4894 = vmul.f32 %v4863, %v4892
          %v4895 = vmul.f32 %v4865, %v4892
          %v4896 = vmul.f32 %v4867, %v4892
          %v4897 = vmul.f32 %v4869, %v4892
          %v4898 = vmul.f32 %v4871, %v4892
          %v4899 = vmul.f32 %v4873, %v4892
          %v4900 = vmul.f32 %v4875, %v4892
          %v4901 = vmul.f32 %v4877, %v4892
          %v4902 = vmul.f32 %v4879, %v4892
          %v4903 = vmul.f32 %v4881, %v4892
          %v4904 = vmul.f32 %v4883, %v4892
          %v4905 = vmul.f32 %v4885, %v4892
          %v4906 = vmul.f32 %v4887, %v4892
          %v4907 = vmul.f32 %v4889, %v4892
          %v4908 = vmul.f32 %v4891, %v4892
          %v4909 = vsub.f32 %v4842, %v4893
          %v4910 = vsub.f32 %v4843, %v4894
          %v4911 = vsub.f32 %v4844, %v4895
          %v4912 = vsub.f32 %v4845, %v4896
          %v4913 = vsub.f32 %v4846, %v4897
          %v4914 = vsub.f32 %v4847, %v4898
          %v4915 = vsub.f32 %v4848, %v4899
          %v4916 = vsub.f32 %v4849, %v4900
          %v4917 = vsub.f32 %v4850, %v4901
          %v4918 = vsub.f32 %v4851, %v4902
          %v4919 = vsub.f32 %v4852, %v4903
          %v4920 = vsub.f32 %v4853, %v4904
          %v4921 = vsub.f32 %v4854, %v4905
          %v4922 = vsub.f32 %v4855, %v4906
          %v4923 = vsub.f32 %v4856, %v4907
          %v4924 = vsub.f32 %v4857, %v4908
          %v4925 = vmul.f32 %v4909, %v4909
          %v4926 = vmul.f32 %v4910, %v4910
          %v4927 = vmul.f32 %v4911, %v4911
          %v4928 = vmul.f32 %v4912, %v4912
          %v4929 = vmul.f32 %v4913, %v4913
          %v4930 = vmul.f32 %v4914, %v4914
          %v4931 = vmul.f32 %v4915, %v4915
          %v4932 = vmul.f32 %v4916, %v4916
          %v4933 = vmul.f32 %v4917, %v4917
          %v4934 = vmul.f32 %v4918, %v4918
          %v4935 = vmul.f32 %v4919, %v4919
          %v4936 = vmul.f32 %v4920, %v4920
          %v4937 = vmul.f32 %v4921, %v4921
          %v4938 = vmul.f32 %v4922, %v4922
          %v4939 = vmul.f32 %v4923, %v4923
          %v4940 = vmul.f32 %v4924, %v4924
          %4941 = vadd.xlane.f32.xlu0 %v4925
          %v4942 = vpop.xlane.xlu0 %4941
          %4943 = vadd.xlane.f32.xlu0 %v4926
          %v4944 = vpop.xlane.xlu0 %4943
          %4945 = vadd.xlane.f32.xlu0 %v4927
          %v4946 = vpop.xlane.xlu0 %4945
          %4947 = vadd.xlane.f32.xlu0 %v4928
          %v4948 = vpop.xlane.xlu0 %4947
          %4949 = vadd.xlane.f32.xlu0 %v4929
          %v4950 = vpop.xlane.xlu0 %4949
          %4951 = vadd.xlane.f32.xlu0 %v4930
          %v4952 = vpop.xlane.xlu0 %4951
          %4953 = vadd.xlane.f32.xlu0 %v4931
          %v4954 = vpop.xlane.xlu0 %4953
          %4955 = vadd.xlane.f32.xlu0 %v4932
          %v4956 = vpop.xlane.xlu0 %4955
          %4957 = vadd.xlane.f32.xlu0 %v4933
          %v4958 = vpop.xlane.xlu0 %4957
          %4959 = vadd.xlane.f32.xlu0 %v4934
          %v4960 = vpop.xlane.xlu0 %4959
          %4961 = vadd.xlane.f32.xlu0 %v4935
          %v4962 = vpop.xlane.xlu0 %4961
          %4963 = vadd.xlane.f32.xlu0 %v4936
          %v4964 = vpop.xlane.xlu0 %4963
          %4965 = vadd.xlane.f32.xlu0 %v4937
          %v4966 = vpop.xlane.xlu0 %4965
          %4967 = vadd.xlane.f32.xlu0 %v4938
          %v4968 = vpop.xlane.xlu0 %4967
          %4969 = vadd.xlane.f32.xlu0 %v4939
          %v4970 = vpop.xlane.xlu0 %4969
          %4971 = vadd.xlane.f32.xlu0 %v4940
          %v4972 = vpop.xlane.xlu0 %4971
          %v4973 = vmul.f32 %v4942, %v4892
          %v4974 = vmul.f32 %v4944, %v4892
          %v4975 = vmul.f32 %v4946, %v4892
          %v4976 = vmul.f32 %v4948, %v4892
          %v4977 = vmul.f32 %v4950, %v4892
          %v4978 = vmul.f32 %v4952, %v4892
          %v4979 = vmul.f32 %v4954, %v4892
          %v4980 = vmul.f32 %v4956, %v4892
          %v4981 = vmul.f32 %v4958, %v4892
          %v4982 = vmul.f32 %v4960, %v4892
          %v4983 = vmul.f32 %v4962, %v4892
          %v4984 = vmul.f32 %v4964, %v4892
          %v4985 = vmul.f32 %v4966, %v4892
          %v4986 = vmul.f32 %v4968, %v4892
          %v4987 = vmul.f32 %v4970, %v4892
          %v4988 = vmul.f32 %v4972, %v4892
          %v4989 = vadd.f32 %v4973, 1e-05
          %v4990 = vadd.f32 %v4974, 1e-05
          %v4991 = vadd.f32 %v4975, 1e-05
          %v4992 = vadd.f32 %v4976, 1e-05
          %v4993 = vadd.f32 %v4977, 1e-05
          %v4994 = vadd.f32 %v4978, 1e-05
          %v4995 = vadd.f32 %v4979, 1e-05
          %v4996 = vadd.f32 %v4980, 1e-05
          %v4997 = vadd.f32 %v4981, 1e-05
          %v4998 = vadd.f32 %v4982, 1e-05
          %v4999 = vadd.f32 %v4983, 1e-05
          %v5000 = vadd.f32 %v4984, 1e-05
          %v5001 = vadd.f32 %v4985, 1e-05
          %v5002 = vadd.f32 %v4986, 1e-05
          %v5003 = vadd.f32 %v4987, 1e-05
          %v5004 = vadd.f32 %v4988, 1e-05
          %v5005 = vrsqrt.pop %v4989
          %v5006 = vrsqrt.pop %v4990
          %v5007 = vrsqrt.pop %v4991
          %v5008 = vrsqrt.pop %v4992
          %v5009 = vrsqrt.pop %v4993
          %v5010 = vrsqrt.pop %v4994
          %v5011 = vrsqrt.pop %v4995
          %v5012 = vrsqrt.pop %v4996
          %v5013 = vrsqrt.pop %v4997
          %v5014 = vrsqrt.pop %v4998
          %v5015 = vrsqrt.pop %v4999
          %v5016 = vrsqrt.pop %v5000
          %v5017 = vrsqrt.pop %v5001
          %v5018 = vrsqrt.pop %v5002
          %v5019 = vrsqrt.pop %v5003
          %v5020 = vrsqrt.pop %v5004
          %v5021 = vmul.f32 %v4909, %v5005
          %v5022 = vmul.f32 %v4910, %v5006
          %v5023 = vmul.f32 %v4911, %v5007
          %v5024 = vmul.f32 %v4912, %v5008
          %v5025 = vmul.f32 %v4913, %v5009
          %v5026 = vmul.f32 %v4914, %v5010
          %v5027 = vmul.f32 %v4915, %v5011
          %v5028 = vmul.f32 %v4916, %v5012
          %v5029 = vmul.f32 %v4917, %v5013
          %v5030 = vmul.f32 %v4918, %v5014
          %v5031 = vmul.f32 %v4919, %v5015
          %v5032 = vmul.f32 %v4920, %v5016
          %v5033 = vmul.f32 %v4921, %v5017
          %v5034 = vmul.f32 %v4922, %v5018
          %v5035 = vmul.f32 %v4923, %v5019
          %v5036 = vmul.f32 %v4924, %v5020
          %v5038 = vlaneseq
          %v5039 = vshrl.u32 %v5038, 7
          %v5040 = vsub.s32 0, %v5039
          %v5041 = vrot.slane %v4858, %v5040
          %v5043 = vmul.f32 %v5021, %v5041
          %v5044 = vmul.f32 %v5022, %v5041
          %v5045 = vmul.f32 %v5023, %v5041
          %v5046 = vmul.f32 %v5024, %v5041
          %v5047 = vmul.f32 %v5025, %v5041
          %v5048 = vmul.f32 %v5026, %v5041
          %v5049 = vmul.f32 %v5027, %v5041
          %v5050 = vmul.f32 %v5028, %v5041
          %v5051 = vmul.f32 %v5029, %v5041
          %v5052 = vmul.f32 %v5030, %v5041
          %v5053 = vmul.f32 %v5031, %v5041
          %v5054 = vmul.f32 %v5032, %v5041
          %v5055 = vmul.f32 %v5033, %v5041
          %v5056 = vmul.f32 %v5034, %v5041
          %v5057 = vmul.f32 %v5035, %v5041
          %v5058 = vmul.f32 %v5036, %v5041
          %v5060 = vlaneseq
          %v5061 = vshrl.u32 %v5060, 7
          %v5062 = vsub.s32 0, %v5061
          %v5063 = vrot.slane %v4859, %v5062
          %v5065 = vadd.f32 %v5043, %v5063
          %v5066 = vadd.f32 %v5044, %v5063
          %v5067 = vadd.f32 %v5045, %v5063
          %v5068 = vadd.f32 %v5046, %v5063
          %v5069 = vadd.f32 %v5047, %v5063
          %v5070 = vadd.f32 %v5048, %v5063
          %v5071 = vadd.f32 %v5049, %v5063
          %v5072 = vadd.f32 %v5050, %v5063
          %v5073 = vadd.f32 %v5051, %v5063
          %v5074 = vadd.f32 %v5052, %v5063
          %v5075 = vadd.f32 %v5053, %v5063
          %v5076 = vadd.f32 %v5054, %v5063
          %v5077 = vadd.f32 %v5055, %v5063
          %v5078 = vadd.f32 %v5056, %v5063
          %v5079 = vadd.f32 %v5057, %v5063
          %v5080 = vadd.f32 %v5058, %v5063
          %v5081 = vld [vmem:[%s11] sm:$0x1]
          %v5082 = vld [vmem:[%s12] sm:$0x1]
          %5083 = vadd.xlane.f32.xlu0 %v5065
          %v5084 = vpop.xlane.xlu0 %5083
          %5085 = vadd.xlane.f32.xlu0 %v5066
          %v5086 = vpop.xlane.xlu0 %5085
          %5087 = vadd.xlane.f32.xlu0 %v5067
          %v5088 = vpop.xlane.xlu0 %5087
          %5089 = vadd.xlane.f32.xlu0 %v5068
          %v5090 = vpop.xlane.xlu0 %5089
          %5091 = vadd.xlane.f32.xlu0 %v5069
          %v5092 = vpop.xlane.xlu0 %5091
          %5093 = vadd.xlane.f32.xlu0 %v5070
          %v5094 = vpop.xlane.xlu0 %5093
          %5095 = vadd.xlane.f32.xlu0 %v5071
          %v5096 = vpop.xlane.xlu0 %5095
          %5097 = vadd.xlane.f32.xlu0 %v5072
          %v5098 = vpop.xlane.xlu0 %5097
          %5099 = vadd.xlane.f32.xlu0 %v5073
          %v5100 = vpop.xlane.xlu0 %5099
          %5101 = vadd.xlane.f32.xlu0 %v5074
          %v5102 = vpop.xlane.xlu0 %5101
          %5103 = vadd.xlane.f32.xlu0 %v5075
          %v5104 = vpop.xlane.xlu0 %5103
          %5105 = vadd.xlane.f32.xlu0 %v5076
          %v5106 = vpop.xlane.xlu0 %5105
          %5107 = vadd.xlane.f32.xlu0 %v5077
          %v5108 = vpop.xlane.xlu0 %5107
          %5109 = vadd.xlane.f32.xlu0 %v5078
          %v5110 = vpop.xlane.xlu0 %5109
          %5111 = vadd.xlane.f32.xlu0 %v5079
          %v5112 = vpop.xlane.xlu0 %5111
          %5113 = vadd.xlane.f32.xlu0 %v5080
          %v5114 = vpop.xlane.xlu0 %5113
          %v5115 = vmul.f32 %v5084, %v4892
          %v5116 = vmul.f32 %v5086, %v4892
          %v5117 = vmul.f32 %v5088, %v4892
          %v5118 = vmul.f32 %v5090, %v4892
          %v5119 = vmul.f32 %v5092, %v4892
          %v5120 = vmul.f32 %v5094, %v4892
          %v5121 = vmul.f32 %v5096, %v4892
          %v5122 = vmul.f32 %v5098, %v4892
          %v5123 = vmul.f32 %v5100, %v4892
          %v5124 = vmul.f32 %v5102, %v4892
          %v5125 = vmul.f32 %v5104, %v4892
          %v5126 = vmul.f32 %v5106, %v4892
          %v5127 = vmul.f32 %v5108, %v4892
          %v5128 = vmul.f32 %v5110, %v4892
          %v5129 = vmul.f32 %v5112, %v4892
          %v5130 = vmul.f32 %v5114, %v4892
          %v5131 = vsub.f32 %v5065, %v5115
          %v5132 = vsub.f32 %v5066, %v5116
          %v5133 = vsub.f32 %v5067, %v5117
          %v5134 = vsub.f32 %v5068, %v5118
          %v5135 = vsub.f32 %v5069, %v5119
          %v5136 = vsub.f32 %v5070, %v5120
          %v5137 = vsub.f32 %v5071, %v5121
          %v5138 = vsub.f32 %v5072, %v5122
          %v5139 = vsub.f32 %v5073, %v5123
          %v5140 = vsub.f32 %v5074, %v5124
          %v5141 = vsub.f32 %v5075, %v5125
          %v5142 = vsub.f32 %v5076, %v5126
          %v5143 = vsub.f32 %v5077, %v5127
          %v5144 = vsub.f32 %v5078, %v5128
          %v5145 = vsub.f32 %v5079, %v5129
          %v5146 = vsub.f32 %v5080, %v5130
          %v5147 = vmul.f32 %v5131, %v5131
          %v5148 = vmul.f32 %v5132, %v5132
          %v5149 = vmul.f32 %v5133, %v5133
          %v5150 = vmul.f32 %v5134, %v5134
          %v5151 = vmul.f32 %v5135, %v5135
          %v5152 = vmul.f32 %v5136, %v5136
          %v5153 = vmul.f32 %v5137, %v5137
          %v5154 = vmul.f32 %v5138, %v5138
          %v5155 = vmul.f32 %v5139, %v5139
          %v5156 = vmul.f32 %v5140, %v5140
          %v5157 = vmul.f32 %v5141, %v5141
          %v5158 = vmul.f32 %v5142, %v5142
          %v5159 = vmul.f32 %v5143, %v5143
          %v5160 = vmul.f32 %v5144, %v5144
          %v5161 = vmul.f32 %v5145, %v5145
          %v5162 = vmul.f32 %v5146, %v5146
          %5163 = vadd.xlane.f32.xlu0 %v5147
          %v5164 = vpop.xlane.xlu0 %5163
          %5165 = vadd.xlane.f32.xlu0 %v5148
          %v5166 = vpop.xlane.xlu0 %5165
          %5167 = vadd.xlane.f32.xlu0 %v5149
          %v5168 = vpop.xlane.xlu0 %5167
          %5169 = vadd.xlane.f32.xlu0 %v5150
          %v5170 = vpop.xlane.xlu0 %5169
          %5171 = vadd.xlane.f32.xlu0 %v5151
          %v5172 = vpop.xlane.xlu0 %5171
          %5173 = vadd.xlane.f32.xlu0 %v5152
          %v5174 = vpop.xlane.xlu0 %5173
          %5175 = vadd.xlane.f32.xlu0 %v5153
          %v5176 = vpop.xlane.xlu0 %5175
          %5177 = vadd.xlane.f32.xlu0 %v5154
          %v5178 = vpop.xlane.xlu0 %5177
          %5179 = vadd.xlane.f32.xlu0 %v5155
          %v5180 = vpop.xlane.xlu0 %5179
          %5181 = vadd.xlane.f32.xlu0 %v5156
          %v5182 = vpop.xlane.xlu0 %5181
          %5183 = vadd.xlane.f32.xlu0 %v5157
          %v5184 = vpop.xlane.xlu0 %5183
          %5185 = vadd.xlane.f32.xlu0 %v5158
          %v5186 = vpop.xlane.xlu0 %5185
          %5187 = vadd.xlane.f32.xlu0 %v5159
          %v5188 = vpop.xlane.xlu0 %5187
          %5189 = vadd.xlane.f32.xlu0 %v5160
          %v5190 = vpop.xlane.xlu0 %5189
          %5191 = vadd.xlane.f32.xlu0 %v5161
          %v5192 = vpop.xlane.xlu0 %5191
          %5193 = vadd.xlane.f32.xlu0 %v5162
          %v5194 = vpop.xlane.xlu0 %5193
          %v5195 = vmul.f32 %v5164, %v4892
          %v5196 = vmul.f32 %v5166, %v4892
          %v5197 = vmul.f32 %v5168, %v4892
          %v5198 = vmul.f32 %v5170, %v4892
          %v5199 = vmul.f32 %v5172, %v4892
          %v5200 = vmul.f32 %v5174, %v4892
          %v5201 = vmul.f32 %v5176, %v4892
          %v5202 = vmul.f32 %v5178, %v4892
          %v5203 = vmul.f32 %v5180, %v4892
          %v5204 = vmul.f32 %v5182, %v4892
          %v5205 = vmul.f32 %v5184, %v4892
          %v5206 = vmul.f32 %v5186, %v4892
          %v5207 = vmul.f32 %v5188, %v4892
          %v5208 = vmul.f32 %v5190, %v4892
          %v5209 = vmul.f32 %v5192, %v4892
          %v5210 = vmul.f32 %v5194, %v4892
          %v5211 = vadd.f32 %v5195, 1e-05
          %v5212 = vadd.f32 %v5196, 1e-05
          %v5213 = vadd.f32 %v5197, 1e-05
          %v5214 = vadd.f32 %v5198, 1e-05
          %v5215 = vadd.f32 %v5199, 1e-05
          %v5216 = vadd.f32 %v5200, 1e-05
          %v5217 = vadd.f32 %v5201, 1e-05
          %v5218 = vadd.f32 %v5202, 1e-05
          %v5219 = vadd.f32 %v5203, 1e-05
          %v5220 = vadd.f32 %v5204, 1e-05
          %v5221 = vadd.f32 %v5205, 1e-05
          %v5222 = vadd.f32 %v5206, 1e-05
          %v5223 = vadd.f32 %v5207, 1e-05
          %v5224 = vadd.f32 %v5208, 1e-05
          %v5225 = vadd.f32 %v5209, 1e-05
          %v5226 = vadd.f32 %v5210, 1e-05
          %v5227 = vrsqrt.pop %v5211
          %v5228 = vrsqrt.pop %v5212
          %v5229 = vrsqrt.pop %v5213
          %v5230 = vrsqrt.pop %v5214
          %v5231 = vrsqrt.pop %v5215
          %v5232 = vrsqrt.pop %v5216
          %v5233 = vrsqrt.pop %v5217
          %v5234 = vrsqrt.pop %v5218
          %v5235 = vrsqrt.pop %v5219
          %v5236 = vrsqrt.pop %v5220
          %v5237 = vrsqrt.pop %v5221
          %v5238 = vrsqrt.pop %v5222
          %v5239 = vrsqrt.pop %v5223
          %v5240 = vrsqrt.pop %v5224
          %v5241 = vrsqrt.pop %v5225
          %v5242 = vrsqrt.pop %v5226
          %v5243 = vmul.f32 %v5131, %v5227
          %v5244 = vmul.f32 %v5132, %v5228
          %v5245 = vmul.f32 %v5133, %v5229
          %v5246 = vmul.f32 %v5134, %v5230
          %v5247 = vmul.f32 %v5135, %v5231
          %v5248 = vmul.f32 %v5136, %v5232
          %v5249 = vmul.f32 %v5137, %v5233
          %v5250 = vmul.f32 %v5138, %v5234
          %v5251 = vmul.f32 %v5139, %v5235
          %v5252 = vmul.f32 %v5140, %v5236
          %v5253 = vmul.f32 %v5141, %v5237
          %v5254 = vmul.f32 %v5142, %v5238
          %v5255 = vmul.f32 %v5143, %v5239
          %v5256 = vmul.f32 %v5144, %v5240
          %v5257 = vmul.f32 %v5145, %v5241
          %v5258 = vmul.f32 %v5146, %v5242
          %v5260 = vlaneseq
          %v5261 = vshrl.u32 %v5260, 7
          %v5262 = vsub.s32 0, %v5261
          %v5263 = vrot.slane %v5081, %v5262
          %v5265 = vmul.f32 %v5243, %v5263
          %v5266 = vmul.f32 %v5244, %v5263
          %v5267 = vmul.f32 %v5245, %v5263
          %v5268 = vmul.f32 %v5246, %v5263
          %v5269 = vmul.f32 %v5247, %v5263
          %v5270 = vmul.f32 %v5248, %v5263
          %v5271 = vmul.f32 %v5249, %v5263
          %v5272 = vmul.f32 %v5250, %v5263
          %v5273 = vmul.f32 %v5251, %v5263
          %v5274 = vmul.f32 %v5252, %v5263
          %v5275 = vmul.f32 %v5253, %v5263
          %v5276 = vmul.f32 %v5254, %v5263
          %v5277 = vmul.f32 %v5255, %v5263
          %v5278 = vmul.f32 %v5256, %v5263
          %v5279 = vmul.f32 %v5257, %v5263
          %v5280 = vmul.f32 %v5258, %v5263
          %v5282 = vlaneseq
          %v5283 = vshrl.u32 %v5282, 7
          %v5284 = vsub.s32 0, %v5283
          %v5285 = vrot.slane %v5082, %v5284
          %v5287 = vadd.f32 %v5265, %v5285
          %v5288 = vadd.f32 %v5266, %v5285
          %v5289 = vadd.f32 %v5267, %v5285
          %v5290 = vadd.f32 %v5268, %v5285
          %v5291 = vadd.f32 %v5269, %v5285
          %v5292 = vadd.f32 %v5270, %v5285
          %v5293 = vadd.f32 %v5271, %v5285
          %v5294 = vadd.f32 %v5272, %v5285
          %v5295 = vadd.f32 %v5273, %v5285
          %v5296 = vadd.f32 %v5274, %v5285
          %v5297 = vadd.f32 %v5275, %v5285
          %v5298 = vadd.f32 %v5276, %v5285
          %v5299 = vadd.f32 %v5277, %v5285
          %v5300 = vadd.f32 %v5278, %v5285
          %v5301 = vadd.f32 %v5279, %v5285
          %v5302 = vadd.f32 %v5280, %v5285
          %v5303 = vpack.c.bf16 %v5288, %v5287
          %v5304 = vpack.c.bf16 %v5290, %v5289
          %v5305 = vpack.c.bf16 %v5292, %v5291
          %v5306 = vpack.c.bf16 %v5294, %v5293
          %v5307 = vpack.c.bf16 %v5296, %v5295
          %v5308 = vpack.c.bf16 %v5298, %v5297
          %v5309 = vpack.c.bf16 %v5300, %v5299
          %v5310 = vpack.c.bf16 %v5302, %v5301
          %v5311 = vld [vmem:[%s13] sm:$0xf]
          %v5312 = vld [vmem:[%s13 + $0x4] sm:$0xf]
          %v5313 = vld [vmem:[%s13 + $0x8] sm:$0xf]
          %v5314 = vld [vmem:[%s13 + $0xc] sm:$0xf]
          %v5315 = vld [vmem:[%s13 + $0x10] sm:$0xf]
          %v5316 = vld [vmem:[%s13 + $0x14] sm:$0xf]
          %v5317 = vld [vmem:[%s13 + $0x18] sm:$0xf]
          %v5318 = vld [vmem:[%s13 + $0x1c] sm:$0xf]
          %v5319 = vld [vmem:[%s13 + $0x20] sm:$0xf]
          %v5320 = vld [vmem:[%s13 + $0x24] sm:$0xf]
          %v5321 = vld [vmem:[%s13 + $0x28] sm:$0xf]
          %v5322 = vld [vmem:[%s13 + $0x2c] sm:$0xf]
          %v5323 = vld [vmem:[%s13 + $0x30] sm:$0xf]
          %v5324 = vld [vmem:[%s13 + $0x34] sm:$0xf]
          %v5325 = vld [vmem:[%s13 + $0x38] sm:$0xf]
          %v5326 = vld [vmem:[%s13 + $0x3c] sm:$0xf]
          %v5343 = vunpack.c.l.b16 %v5311
          %v5344 = vunpack.c.l.b16 %v5312
          %v5345 = vunpack.c.l.b16 %v5313
          %v5346 = vunpack.c.l.b16 %v5314
          %v5347 = vunpack.c.l.b16 %v5315
          %v5348 = vunpack.c.l.b16 %v5316
          %v5349 = vunpack.c.l.b16 %v5317
          %v5350 = vunpack.c.l.b16 %v5318
          %v5351 = vunpack.c.l.b16 %v5319
          %v5352 = vunpack.c.l.b16 %v5320
          %v5353 = vunpack.c.l.b16 %v5321
          %v5354 = vunpack.c.l.b16 %v5322
          %v5355 = vunpack.c.l.b16 %v5323
          %v5356 = vunpack.c.l.b16 %v5324
          %v5357 = vunpack.c.l.b16 %v5325
          %v5358 = vunpack.c.l.b16 %v5326
          %v5359 = vpack.c.b16 %v5344, %v5343
          %v5360 = vpack.c.b16 %v5346, %v5345
          %v5361 = vpack.c.b16 %v5348, %v5347
          %v5362 = vpack.c.b16 %v5350, %v5349
          %v5363 = vpack.c.b16 %v5352, %v5351
          %v5364 = vpack.c.b16 %v5354, %v5353
          %v5365 = vpack.c.b16 %v5356, %v5355
          %v5366 = vpack.c.b16 %v5358, %v5357
          %5375 = vmatprep.subr.bf16.mxu0 0
          %5376 = vmatpush1.bf16.msra.mxu0 %v5366
          %5377 = vmatprep.subr.bf16.mxu0 0
          %5378 = vmatpush1.bf16.msra.mxu0 %v5365
          %5379 = vmatprep.subr.bf16.mxu0 0
          %5380 = vmatpush1.bf16.msra.mxu0 %v5364
          %5381 = vmatprep.subr.bf16.mxu0 0
          %5382 = vmatpush1.bf16.msra.mxu0 %v5363
          %5383 = vmatprep.subr.bf16.mxu0 0
          %5384 = vmatpush1.bf16.msra.mxu0 %v5362
          %5385 = vmatprep.subr.bf16.mxu0 0
          %5386 = vmatpush1.bf16.msra.mxu0 %v5361
          %5387 = vmatprep.subr.bf16.mxu0 0
          %5388 = vmatpush1.bf16.msra.mxu0 %v5360
          %5389 = vmatprep.subr.bf16.mxu0 0
          %5390 = vmatpush1.bf16.msra.mxu0 %v5359
          %5391 = vmatprep.subr.bf16.mxu0 0
          %5392 = vmatpush2.bf16.msra.mxu0 0
          %5393 = vmatprep.subr.bf16.mxu0 0
          %5394 = vmatpush2.bf16.msra.mxu0 0
          %5395 = vmatprep.subr.bf16.mxu0 0
          %5396 = vmatpush2.bf16.msra.mxu0 0
          %5397 = vmatprep.subr.bf16.mxu0 0
          %5398 = vmatpush2.bf16.msra.mxu0 0
          %5399 = vmatprep.subr.bf16.mxu0 0
          %5400 = vmatpush2.bf16.msra.mxu0 0
          %5401 = vmatprep.subr.bf16.mxu0 0
          %5402 = vmatpush2.bf16.msra.mxu0 0
          %5403 = vmatprep.subr.bf16.mxu0 0
          %5404 = vmatpush2.bf16.msra.mxu0 0
          %5405 = vmatprep.subr.bf16.mxu0 0
          %5406 = vmatpush2.bf16.msra.mxu0 0
          %5407 = vmatprep.mubr.bf16.mxu0 0
          %5408 = vmatmul.mubr.bf16.gmra.mxu0 %v5303
          %v5409 = vpop.f32.mrf.mxu0
          %v5410 = vadd.f32 0.0, %v5409
          %v5411 = vpop.f32.mrf.mxu0
          %v5412 = vpop.f32.mrf.mxu0
          %v5413 = vadd.f32 0.0, %v5412
          %v5414 = vpop.f32.mrf.mxu0
          %5415 = vmatprep.mubr.bf16.mxu0 0
          %5416 = vmatmul.mubr.bf16.gmra.mxu0 %v5304
          %v5417 = vpop.f32.mrf.mxu0
          %v5418 = vadd.f32 0.0, %v5417
          %v5419 = vpop.f32.mrf.mxu0
          %v5420 = vpop.f32.mrf.mxu0
          %v5421 = vadd.f32 0.0, %v5420
          %v5422 = vpop.f32.mrf.mxu0
          %5423 = vmatprep.mubr.bf16.mxu0 0
          %5424 = vmatmul.mubr.bf16.gmra.mxu0 %v5305
          %v5425 = vpop.f32.mrf.mxu0
          %v5426 = vadd.f32 0.0, %v5425
          %v5427 = vpop.f32.mrf.mxu0
          %v5428 = vpop.f32.mrf.mxu0
          %v5429 = vadd.f32 0.0, %v5428
          %v5430 = vpop.f32.mrf.mxu0
          %5431 = vmatprep.mubr.bf16.mxu0 0
          %5432 = vmatmul.mubr.bf16.gmra.mxu0 %v5306
          %v5433 = vpop.f32.mrf.mxu0
          %v5434 = vadd.f32 0.0, %v5433
          %v5435 = vpop.f32.mrf.mxu0
          %v5436 = vpop.f32.mrf.mxu0
          %v5437 = vadd.f32 0.0, %v5436
          %v5438 = vpop.f32.mrf.mxu0
          %5439 = vmatprep.mubr.bf16.mxu0 0
          %5440 = vmatmul.mubr.bf16.gmra.mxu0 %v5307
          %v5441 = vpop.f32.mrf.mxu0
          %v5442 = vadd.f32 0.0, %v5441
          %v5443 = vpop.f32.mrf.mxu0
          %v5444 = vpop.f32.mrf.mxu0
          %v5445 = vadd.f32 0.0, %v5444
          %v5446 = vpop.f32.mrf.mxu0
          %5447 = vmatprep.mubr.bf16.mxu0 0
          %5448 = vmatmul.mubr.bf16.gmra.mxu0 %v5308
          %v5449 = vpop.f32.mrf.mxu0
          %v5450 = vadd.f32 0.0, %v5449
          %v5451 = vpop.f32.mrf.mxu0
          %v5452 = vpop.f32.mrf.mxu0
          %v5453 = vadd.f32 0.0, %v5452
          %v5454 = vpop.f32.mrf.mxu0
          %5455 = vmatprep.mubr.bf16.mxu0 0
          %5456 = vmatmul.mubr.bf16.gmra.mxu0 %v5309
          %v5457 = vpop.f32.mrf.mxu0
          %v5458 = vadd.f32 0.0, %v5457
          %v5459 = vpop.f32.mrf.mxu0
          %v5460 = vpop.f32.mrf.mxu0
          %v5461 = vadd.f32 0.0, %v5460
          %v5462 = vpop.f32.mrf.mxu0
          %5463 = vmatprep.mubr.bf16.mxu0 0
          %5464 = vmatmul.mubr.bf16.gmra.mxu0 %v5310
          %v5465 = vpop.f32.mrf.mxu0
          %v5466 = vadd.f32 0.0, %v5465
          %v5467 = vpop.f32.mrf.mxu0
          %v5468 = vpop.f32.mrf.mxu0
          %v5469 = vadd.f32 0.0, %v5468
          %v5470 = vpop.f32.mrf.mxu0
          %5471 = vdwg.mxu0
          %v5472 = vmax.f32 %v5410, 0.0
          %v5473 = vmax.f32 %v5413, 0.0
          %v5474 = vmax.f32 %v5418, 0.0
          %v5475 = vmax.f32 %v5421, 0.0
          %v5476 = vmax.f32 %v5426, 0.0
          %v5477 = vmax.f32 %v5429, 0.0
          %v5478 = vmax.f32 %v5434, 0.0
          %v5479 = vmax.f32 %v5437, 0.0
          %v5480 = vmax.f32 %v5442, 0.0
          %v5481 = vmax.f32 %v5445, 0.0
          %v5482 = vmax.f32 %v5450, 0.0
          %v5483 = vmax.f32 %v5453, 0.0
          %v5484 = vmax.f32 %v5458, 0.0
          %v5485 = vmax.f32 %v5461, 0.0
          %v5486 = vmax.f32 %v5466, 0.0
          %v5487 = vmax.f32 %v5469, 0.0
          %v5488 = vpack.c.bf16 %v5473, %v5472
          %v5489 = vpack.c.bf16 %v5475, %v5474
          %v5490 = vpack.c.bf16 %v5477, %v5476
          %v5491 = vpack.c.bf16 %v5479, %v5478
          %v5492 = vpack.c.bf16 %v5481, %v5480
          %v5493 = vpack.c.bf16 %v5483, %v5482
          %v5494 = vpack.c.bf16 %v5485, %v5484
          %v5495 = vpack.c.bf16 %v5487, %v5486
          %v5496 = vld [vmem:[%s14] sm:$0xf]
          %v5497 = vld [vmem:[%s14 + $0x4] sm:$0xf]
          %v5498 = vld [vmem:[%s14 + $0x8] sm:$0xf]
          %v5499 = vld [vmem:[%s14 + $0xc] sm:$0xf]
          %v5500 = vld [vmem:[%s14 + $0x10] sm:$0xf]
          %v5501 = vld [vmem:[%s14 + $0x14] sm:$0xf]
          %v5502 = vld [vmem:[%s14 + $0x18] sm:$0xf]
          %v5503 = vld [vmem:[%s14 + $0x1c] sm:$0xf]
          %v5504 = vld [vmem:[%s14 + $0x20] sm:$0xf]
          %v5505 = vld [vmem:[%s14 + $0x24] sm:$0xf]
          %v5506 = vld [vmem:[%s14 + $0x28] sm:$0xf]
          %v5507 = vld [vmem:[%s14 + $0x2c] sm:$0xf]
          %v5508 = vld [vmem:[%s14 + $0x30] sm:$0xf]
          %v5509 = vld [vmem:[%s14 + $0x34] sm:$0xf]
          %v5510 = vld [vmem:[%s14 + $0x38] sm:$0xf]
          %v5511 = vld [vmem:[%s14 + $0x3c] sm:$0xf]
          %v5528 = vunpack.c.l.b16 %v5496
          %v5529 = vunpack.c.l.b16 %v5497
          %v5530 = vunpack.c.l.b16 %v5498
          %v5531 = vunpack.c.l.b16 %v5499
          %v5532 = vunpack.c.l.b16 %v5500
          %v5533 = vunpack.c.l.b16 %v5501
          %v5534 = vunpack.c.l.b16 %v5502
          %v5535 = vunpack.c.l.b16 %v5503
          %v5536 = vunpack.c.l.b16 %v5504
          %v5537 = vunpack.c.l.b16 %v5505
          %v5538 = vunpack.c.l.b16 %v5506
          %v5539 = vunpack.c.l.b16 %v5507
          %v5540 = vunpack.c.l.b16 %v5508
          %v5541 = vunpack.c.l.b16 %v5509
          %v5542 = vunpack.c.l.b16 %v5510
          %v5543 = vunpack.c.l.b16 %v5511
          %v5544 = vpack.c.b16 %v5529, %v5528
          %v5545 = vpack.c.b16 %v5531, %v5530
          %v5546 = vpack.c.b16 %v5533, %v5532
          %v5547 = vpack.c.b16 %v5535, %v5534
          %v5548 = vpack.c.b16 %v5537, %v5536
          %v5549 = vpack.c.b16 %v5539, %v5538
          %v5550 = vpack.c.b16 %v5541, %v5540
          %v5551 = vpack.c.b16 %v5543, %v5542
          %5560 = vmatprep.subr.bf16.mxu0 0
          %5561 = vmatpush1.bf16.msra.mxu0 %v5551
          %5562 = vmatprep.subr.bf16.mxu0 0
          %5563 = vmatpush1.bf16.msra.mxu0 %v5550
          %5564 = vmatprep.subr.bf16.mxu0 0
          %5565 = vmatpush1.bf16.msra.mxu0 %v5549
          %5566 = vmatprep.subr.bf16.mxu0 0
          %5567 = vmatpush1.bf16.msra.mxu0 %v5548
          %5568 = vmatprep.subr.bf16.mxu0 0
          %5569 = vmatpush1.bf16.msra.mxu0 %v5547
          %5570 = vmatprep.subr.bf16.mxu0 0
          %5571 = vmatpush1.bf16.msra.mxu0 %v5546
          %5572 = vmatprep.subr.bf16.mxu0 0
          %5573 = vmatpush1.bf16.msra.mxu0 %v5545
          %5574 = vmatprep.subr.bf16.mxu0 0
          %5575 = vmatpush1.bf16.msra.mxu0 %v5544
          %5576 = vmatprep.subr.bf16.mxu0 0
          %5577 = vmatpush2.bf16.msra.mxu0 0
          %5578 = vmatprep.subr.bf16.mxu0 0
          %5579 = vmatpush2.bf16.msra.mxu0 0
          %5580 = vmatprep.subr.bf16.mxu0 0
          %5581 = vmatpush2.bf16.msra.mxu0 0
          %5582 = vmatprep.subr.bf16.mxu0 0
          %5583 = vmatpush2.bf16.msra.mxu0 0
          %5584 = vmatprep.subr.bf16.mxu0 0
          %5585 = vmatpush2.bf16.msra.mxu0 0
          %5586 = vmatprep.subr.bf16.mxu0 0
          %5587 = vmatpush2.bf16.msra.mxu0 0
          %5588 = vmatprep.subr.bf16.mxu0 0
          %5589 = vmatpush2.bf16.msra.mxu0 0
          %5590 = vmatprep.subr.bf16.mxu0 0
          %5591 = vmatpush2.bf16.msra.mxu0 0
          %5592 = vmatprep.mubr.bf16.mxu0 0
          %5593 = vmatmul.mubr.bf16.gmra.mxu0 %v5488
          %v5594 = vpop.f32.mrf.mxu0
          %v5595 = vadd.f32 0.0, %v5594
          %v5596 = vpop.f32.mrf.mxu0
          %v5597 = vpop.f32.mrf.mxu0
          %v5598 = vadd.f32 0.0, %v5597
          %v5599 = vpop.f32.mrf.mxu0
          %5600 = vmatprep.mubr.bf16.mxu0 0
          %5601 = vmatmul.mubr.bf16.gmra.mxu0 %v5489
          %v5602 = vpop.f32.mrf.mxu0
          %v5603 = vadd.f32 0.0, %v5602
          %v5604 = vpop.f32.mrf.mxu0
          %v5605 = vpop.f32.mrf.mxu0
          %v5606 = vadd.f32 0.0, %v5605
          %v5607 = vpop.f32.mrf.mxu0
          %5608 = vmatprep.mubr.bf16.mxu0 0
          %5609 = vmatmul.mubr.bf16.gmra.mxu0 %v5490
          %v5610 = vpop.f32.mrf.mxu0
          %v5611 = vadd.f32 0.0, %v5610
          %v5612 = vpop.f32.mrf.mxu0
          %v5613 = vpop.f32.mrf.mxu0
          %v5614 = vadd.f32 0.0, %v5613
          %v5615 = vpop.f32.mrf.mxu0
          %5616 = vmatprep.mubr.bf16.mxu0 0
          %5617 = vmatmul.mubr.bf16.gmra.mxu0 %v5491
          %v5618 = vpop.f32.mrf.mxu0
          %v5619 = vadd.f32 0.0, %v5618
          %v5620 = vpop.f32.mrf.mxu0
          %v5621 = vpop.f32.mrf.mxu0
          %v5622 = vadd.f32 0.0, %v5621
          %v5623 = vpop.f32.mrf.mxu0
          %5624 = vmatprep.mubr.bf16.mxu0 0
          %5625 = vmatmul.mubr.bf16.gmra.mxu0 %v5492
          %v5626 = vpop.f32.mrf.mxu0
          %v5627 = vadd.f32 0.0, %v5626
          %v5628 = vpop.f32.mrf.mxu0
          %v5629 = vpop.f32.mrf.mxu0
          %v5630 = vadd.f32 0.0, %v5629
          %v5631 = vpop.f32.mrf.mxu0
          %5632 = vmatprep.mubr.bf16.mxu0 0
          %5633 = vmatmul.mubr.bf16.gmra.mxu0 %v5493
          %v5634 = vpop.f32.mrf.mxu0
          %v5635 = vadd.f32 0.0, %v5634
          %v5636 = vpop.f32.mrf.mxu0
          %v5637 = vpop.f32.mrf.mxu0
          %v5638 = vadd.f32 0.0, %v5637
          %v5639 = vpop.f32.mrf.mxu0
          %5640 = vmatprep.mubr.bf16.mxu0 0
          %5641 = vmatmul.mubr.bf16.gmra.mxu0 %v5494
          %v5642 = vpop.f32.mrf.mxu0
          %v5643 = vadd.f32 0.0, %v5642
          %v5644 = vpop.f32.mrf.mxu0
          %v5645 = vpop.f32.mrf.mxu0
          %v5646 = vadd.f32 0.0, %v5645
          %v5647 = vpop.f32.mrf.mxu0
          %5648 = vmatprep.mubr.bf16.mxu0 0
          %5649 = vmatmul.mubr.bf16.gmra.mxu0 %v5495
          %v5650 = vpop.f32.mrf.mxu0
          %v5651 = vadd.f32 0.0, %v5650
          %v5652 = vpop.f32.mrf.mxu0
          %v5653 = vpop.f32.mrf.mxu0
          %v5654 = vadd.f32 0.0, %v5653
          %v5655 = vpop.f32.mrf.mxu0
          %5656 = vdwg.mxu0
          %v5657 = vadd.f32 %v5065, %v5595
          %v5658 = vadd.f32 %v5066, %v5598
          %v5659 = vadd.f32 %v5067, %v5603
          %v5660 = vadd.f32 %v5068, %v5606
          %v5661 = vadd.f32 %v5069, %v5611
          %v5662 = vadd.f32 %v5070, %v5614
          %v5663 = vadd.f32 %v5071, %v5619
          %v5664 = vadd.f32 %v5072, %v5622
          %v5665 = vadd.f32 %v5073, %v5627
          %v5666 = vadd.f32 %v5074, %v5630
          %v5667 = vadd.f32 %v5075, %v5635
          %v5668 = vadd.f32 %v5076, %v5638
          %v5669 = vadd.f32 %v5077, %v5643
          %v5670 = vadd.f32 %v5078, %v5646
          %v5671 = vadd.f32 %v5079, %v5651
          %v5672 = vadd.f32 %v5080, %v5654
          %5673 = vst [vmem:[%s561] sm:$0xff] %v5657
          %5674 = vst [vmem:[%s561 + $0x8] sm:$0xff] %v5658
          %5675 = vst [vmem:[%s561 + $0x10] sm:$0xff] %v5659
          %5676 = vst [vmem:[%s561 + $0x18] sm:$0xff] %v5660
          %5677 = vst [vmem:[%s561 + $0x20] sm:$0xff] %v5661
          %5678 = vst [vmem:[%s561 + $0x28] sm:$0xff] %v5662
          %5679 = vst [vmem:[%s561 + $0x30] sm:$0xff] %v5663
          %5680 = vst [vmem:[%s561 + $0x38] sm:$0xff] %v5664
          %5681 = vst [vmem:[%s561 + $0x40] sm:$0xff] %v5665
          %5682 = vst [vmem:[%s561 + $0x48] sm:$0xff] %v5666
          %5683 = vst [vmem:[%s561 + $0x50] sm:$0xff] %v5667
          %5684 = vst [vmem:[%s561 + $0x58] sm:$0xff] %v5668
          %5685 = vst [vmem:[%s561 + $0x60] sm:$0xff] %v5669
          %5686 = vst [vmem:[%s561 + $0x68] sm:$0xff] %v5670
          %5687 = vst [vmem:[%s561 + $0x70] sm:$0xff] %v5671
          %5688 = vst [vmem:[%s561 + $0x78] sm:$0xff] %v5672
        $region88: #{graph_transformer_layer.1} parent=79 // pred_fallthru
          _
        %s5689 = sand.u32 %s386, 1
        %s5690 = scalar_lea.sflag [#allocation7], %s5689
        %s5691 = sand.u32 %s386, 1
        %s5692 = smul.addr %s5691, 128
        %s5693 = scalar_lea.vmem [#allocation6], %s5692
        // Predicated region
        $region89: #{graph_transformer_layer.1} parent=79 // pred_check
          %p5694 = pneg %p396
        $region90: #{graph_transformer_layer.1} parent=79 // pred_check_branch
          %5696 = sbr.rel (%p5694) target = $region92
        $region91: #{graph_transformer_layer.1} parent=79 // pred_region
          %s5697 = smul.u32 16, %s33
          %s5699 = ssub.s32 2048, 2048
          %5700 = vsyncadd %s5690, %s5699
          %s5701 = smul.addr %s5697, 128
          %s5702 = scalar_lea.hbm %s15, %s5701
          %s5703 = sshll.u32 %s5693, 4
          %s5704 = int_to_ptr.vmem [resolvable:$true] %s5703
          %5709 = dma.vmem_to_hbm [thread:$0]  %s5704, 2048, %s5702, %s5690, 128, 128, 8
        $region92: #{graph_transformer_layer.1} parent=79 // pred_fallthru
          _
      $region80: #{graph_transformer_layer.1} parent=5 // pred_fallthru
        _
      %p5710 = scmp.le.s32.totalorder 2, %s24
      // Predicated region
      $region93: #{graph_transformer_layer.1} parent=5 // pred_check
        %p5711 = pneg %p5710
      $region94: #{graph_transformer_layer.1} parent=5 // pred_check_branch
        %5713 = sbr.rel (%p5711) target = $region96
      $region95: #{graph_transformer_layer.1} parent=5 // pred_region
        %s5714 = ssub.s32 %s24, 2
        // Predicated region
        $region97: #{graph_transformer_layer.1} parent=95 // pred_check
          %p5715 = pneg %p402
        $region98: #{graph_transformer_layer.1} parent=95 // pred_check_branch
          %5717 = sbr.rel (%p5715) target = $region100
        $region99: #{graph_transformer_layer.1} parent=95 // pred_region
          %s5718 = sand.u32 %s387, 1
          %s5719 = scalar_lea.sflag [#allocation7], %s5718
          %s5720 = sand.u32 %s387, 1
          %s5721 = smul.addr %s5720, 128
          %s5722 = scalar_lea.vmem [#allocation6], %s5721
          %5723 = dma.done %s5719, 2048
        $region100: #{graph_transformer_layer.1} parent=95 // pred_fallthru
          _
      $region96: #{graph_transformer_layer.1} parent=5 // pred_fallthru
        _
    $region6: #{graph_transformer_layer.1} parent=1 // loop_footer
      %s28 = sadd.s32 1, %s24
    $region7: #{graph_transformer_layer.1} parent=1 // loop_footer_branch
      %23 = sbr.rel target = $region3
    $region8: #{graph_transformer_layer.1} parent=1 // loop_exit
      _
    %5724 = vsyncpa [#allocation7], 1
    %s5725 = scalar_lea.sflag [#allocation7], 1
    %5726 = vsyncpa %s5725, 1

</llo_original>
